<compile_context>
chip_gen: v7x
topology: tpu7x:2x2x1
jax: 0.10.0
libtpu: 0.0.40
codegen_flags: <defaults>
</compile_context>

<pallas_src>
import math
import functools

import jax
import jax.numpy as jnp
from jax.experimental import pallas as pl
from jax.experimental.pallas import tpu as pltpu


def modulated_siren_kernel(coord_ref, w0_ref, bias_ref, wh_ref, wo_ref, bo_ref,
                           out_ref, *, num_layers, freq):
    """Full modulated-SIREN MLP for one lane-dense tile of coordinates.

    coord_ref : (3, tm)        tile of voxel coordinates (feature-major)
    w0_ref    : (H, 3)         first SineAffine weight (PyTorch (out, in) layout)
    bias_ref  : (H, L)         per-layer combined bias (affine bias + modulation shift)
    wh_ref    : (L-1, H, H)    hidden SineAffine weights (PyTorch (out, in) layout)
    wo_ref    : (H, 1)         hidden2rgb weight (as a column)
    bo_ref    : (1, 1)         hidden2rgb bias
    out_ref   : (1, tm)
    """
    x = coord_ref[...]                                    # (3, tm)

    # Layer 0: K=3 contraction -> three rank-1 broadcast FMAs on the VPU
    # (keeps the MXU slot free; a K=3 matmul fills 3/128 of the MXU).
    h = (w0_ref[:, 0:1] * x[0:1, :]
         + w0_ref[:, 1:2] * x[1:2, :]
         + w0_ref[:, 2:3] * x[2:3, :]
         + bias_ref[:, 0:1])                              # (H, tm)
    h = jnp.sin(freq * h)

    # Hidden layers (static unroll; num_layers is a compile-time constant).
    for l in range(1, num_layers):
        h = (jnp.dot(wh_ref[l - 1], h, preferred_element_type=jnp.float32)
             + bias_ref[:, l:l + 1])                      # (H, tm)
        h = jnp.sin(freq * h)

    # hidden2rgb: output columns = 1 -> VPU multiply + cross-sublane reduce
    # instead of a degenerate (.., H) @ (H, 1) MXU push; store stays lane-dense.
    out_ref[...] = (jnp.sum(h * wo_ref[...], axis=0, keepdims=True)
                    + bo_ref[...])                        # (1, tm)


def modulated_siren3d_forward(coord, phi, params, *, num_layers, freq,
                              tile_m=512):
    """coord: (N, 3) float32 voxel coords; phi: (MF,) modulation latent."""
    N = coord.shape[0]
    hidden = params["w0"].shape[0]
    L = num_layers

    # ---- hoist all grid-invariant work out of the kernel (tiny XLA ops) ----
    # shift_l = modul(phi)[l*H:(l+1)*H]; fold into each layer's affine bias.
    shift = (params["modul_w"] @ phi + params["modul_b"]).reshape(L, hidden)
    if L > 1:
        b_all = jnp.concatenate([params["b0"][None, :], params["bh"]], axis=0)
        wh = params["wh"]                                  # (L-1, H, H)
    else:
        b_all = params["b0"][None, :]
        wh = jnp.zeros((1, hidden, hidden), jnp.float32)   # unused placeholder
    bias_T = (b_all + shift).T.astype(jnp.float32)         # (H, L)
    wo_col = params["wo"].reshape(hidden, 1).astype(jnp.float32)
    bo = params["bo"].reshape(1, 1).astype(jnp.float32)

    # ---- feature-major, padded, lane-dense coordinate slab ----
    n_tiles = pl.cdiv(N, tile_m)
    n_pad = n_tiles * tile_m
    coord_t = jnp.zeros((3, n_pad), jnp.float32).at[:, :N].set(coord.T)

    kernel = functools.partial(modulated_siren_kernel,
                               num_layers=L, freq=float(freq))

    out = pl.pallas_call(
        kernel,
        out_shape=jax.ShapeDtypeStruct((1, n_pad), jnp.float32),
        grid_spec=pltpu.PrefetchScalarGridSpec(
            num_scalar_prefetch=0,
            grid=(n_tiles,),
            in_specs=[
                pl.BlockSpec((3, tile_m), lambda i: (0, i)),            # coords
                pl.BlockSpec((hidden, 3), lambda i: (0, 0)),            # W0
                pl.BlockSpec((hidden, L), lambda i: (0, 0)),            # bias+shift
                pl.BlockSpec((wh.shape[0], hidden, hidden),
                             lambda i: (0, 0, 0)),                      # Wh
                pl.BlockSpec((hidden, 1), lambda i: (0, 0)),            # Wout
                pl.BlockSpec((1, 1), lambda i: (0, 0)),                 # bout
            ],
            out_specs=pl.BlockSpec((1, tile_m), lambda i: (0, i)),
        ),
        compiler_params=pltpu.CompilerParams(
            dimension_semantics=("parallel",)),
    )(coord_t, params["w0"].astype(jnp.float32), bias_T, wh, wo_col, bo)

    return out[0, :N].reshape(N, 1)


def init_params(key, hidden, num_layers, modul_features, freq):
    """Deterministic init mirroring the PyTorch module (weights kept in
    PyTorch (out_features, in_features) layout)."""
    ks = jax.random.split(key, 5)
    # SineAffine layer 0 (start=True): uniform(-1/in, 1/in), in_features=3
    b0_bound = 1.0 / 3.0
    w0 = jax.random.uniform(ks[0], (hidden, 3), jnp.float32, -b0_bound, b0_bound)
    b0 = jnp.zeros((hidden,), jnp.float32)
    # Hidden SineAffine layers + hidden2rgb: uniform(+-sqrt(6/hidden)/freq)
    h_bound = math.sqrt(6.0 / hidden) / freq
    wh = jax.random.uniform(ks[1], (max(num_layers - 1, 1), hidden, hidden),
                            jnp.float32, -h_bound, h_bound)
    bh = jnp.zeros((max(num_layers - 1, 1), hidden), jnp.float32)
    wo = jax.random.uniform(ks[2], (1, hidden), jnp.float32, -h_bound, h_bound)
    bo = jnp.zeros((1,), jnp.float32)
    # modul = nn.Linear(MF, H*L): PyTorch default uniform(+-1/sqrt(fan_in))
    m_bound = 1.0 / math.sqrt(modul_features)
    modul_w = jax.random.uniform(ks[3], (hidden * num_layers, modul_features),
                                 jnp.float32, -m_bound, m_bound)
    modul_b = jax.random.uniform(ks[4], (hidden * num_layers,),
                                 jnp.float32, -m_bound, m_bound)
    return dict(w0=w0, b0=b0, wh=wh, bh=bh, wo=wo, bo=bo,
                modul_w=modul_w, modul_b=modul_b)


def make_meshgrid(height, width, depth):
    """Matches torch.meshgrid(arange(h), arange(w), arange(d)) ('ij') +
    view(-1) + cat + .T  -> (H*W*D, 3) float32, row-major over (h, w, d)."""
    ii, jj, kk = jnp.meshgrid(jnp.arange(height), jnp.arange(width),
                              jnp.arange(depth), indexing="ij")
    return jnp.stack([ii.ravel(), jj.ravel(), kk.ravel()],
                     axis=1).astype(jnp.float32)


def reference_forward(coord, phi, params, *, num_layers, freq):
    """Pure-JAX reference of the PyTorch forward (row-major, independent path)."""
    hidden = params["w0"].shape[0]
    shift = (params["modul_w"] @ phi + params["modul_b"]).reshape(num_layers, hidden)
    h = coord
    for l in range(num_layers):
        if l == 0:
            h = h @ params["w0"].T + params["b0"] + shift[0]
        else:
            h = h @ params["wh"][l - 1].T + params["bh"][l - 1] + shift[l]
        h = jnp.sin(freq * h)
    return h @ params["wo"].T + params["bo"]


if __name__ == "__main__":
    # Small config consistent with the module's forward (voxel SIREN).
    HEIGHT, WIDTH, DEPTH = 16, 16, 8        # N = 2048 voxels -> 4 grid steps
    HIDDEN = 32
    NUM_LAYERS = 3
    MODUL_FEATURES = 16
    FREQ = 30.0
    TILE_M = 512

    key = jax.random.PRNGKey(0)
    k_params, k_phi = jax.random.split(key)

    params = init_params(k_params, HIDDEN, NUM_LAYERS, MODUL_FEATURES, FREQ)
    phi = jax.random.normal(k_phi, (MODUL_FEATURES,), jnp.float32)
    coord = make_meshgrid(HEIGHT, WIDTH, DEPTH)

    out = modulated_siren3d_forward(coord, phi, params,
                                    num_layers=NUM_LAYERS, freq=FREQ,
                                    tile_m=TILE_M)
    out = jax.block_until_ready(out)

    ref = jax.block_until_ready(
        reference_forward(coord, phi, params, num_layers=NUM_LAYERS, freq=FREQ))

    assert out.shape == (HEIGHT * WIDTH * DEPTH, 1)
    # freq=30 on unnormalized integer coords amplifies f32 roundoff through
    # sin(), so keep a modest tolerance between the MXU/VPU kernel path and
    # the pure-XLA reference.
    assert jnp.allclose(out, ref, atol=1e-2, rtol=1e-2)
    print("KERNEL_OK")
</pallas_src>

<mosaic_0001>
module attributes {stable_mosaic.version = 11 : i64} {
  func.func @modulated_siren_kernel(%arg0: i32, %arg1: memref<3x512xf32, #tpu.memory_space<vmem>>, %arg2: memref<32x3xf32, #tpu.memory_space<vmem>>, %arg3: memref<32x3xf32, #tpu.memory_space<vmem>>, %arg4: memref<2x32x32xf32, #tpu.memory_space<vmem>>, %arg5: memref<32x1xf32, #tpu.memory_space<vmem>>, %arg6: memref<1x1xf32, #tpu.memory_space<vmem>>, %arg7: memref<1x512xf32, #tpu.memory_space<vmem>>) attributes {dimension_semantics = [#tpu.dimension_semantics<parallel>], iteration_bounds = array<i64: 4>, scalar_prefetch = 0 : i64, scratch_operands = 0 : i64, tpu.core_type = #tpu.core_type<tc>, window_params = [{transform_indices = @transform_0, window_bounds = array<i64: 3, 512>}, {pipeline_mode = #tpu.pipeline_mode<synchronous>, transform_indices = @transform_1, window_bounds = array<i64: 32, 3>}, {pipeline_mode = #tpu.pipeline_mode<synchronous>, transform_indices = @transform_2, window_bounds = array<i64: 32, 3>}, {pipeline_mode = #tpu.pipeline_mode<synchronous>, transform_indices = @transform_3, window_bounds = array<i64: 2, 32, 32>}, {pipeline_mode = #tpu.pipeline_mode<synchronous>, transform_indices = @transform_4, window_bounds = array<i64: 32, 1>}, {pipeline_mode = #tpu.pipeline_mode<synchronous>, transform_indices = @transform_5, window_bounds = array<i64: 1, 1>}, {transform_indices = @transform_6, window_bounds = array<i64: 1, 512>}]} {
    %c0 = arith.constant 0 : index
    %c0_0 = arith.constant 0 : index
    %0 = vector.load %arg1[%c0, %c0_0] : memref<3x512xf32, #tpu.memory_space<vmem>>, vector<3x512xf32>
    %c0_1 = arith.constant 0 : index
    %c0_2 = arith.constant 0 : index
    %1 = vector.load %arg2[%c0_1, %c0_2] : memref<32x3xf32, #tpu.memory_space<vmem>>, vector<32x1xf32>
    %2 = vector.extract_strided_slice %0 {offsets = [0, 0], sizes = [1, 512], strides = [1, 1]} : vector<3x512xf32> to vector<1x512xf32>
    %3 = vector.broadcast %1 : vector<32x1xf32> to vector<32x512xf32>
    %4 = vector.broadcast %2 : vector<1x512xf32> to vector<32x512xf32>
    %5 = arith.mulf %3, %4 : vector<32x512xf32>
    %c0_3 = arith.constant 0 : index
    %c1 = arith.constant 1 : index
    %6 = vector.load %arg2[%c0_3, %c1] : memref<32x3xf32, #tpu.memory_space<vmem>>, vector<32x1xf32>
    %7 = vector.extract_strided_slice %0 {offsets = [1, 0], sizes = [1, 512], strides = [1, 1]} : vector<3x512xf32> to vector<1x512xf32>
    %8 = vector.broadcast %6 : vector<32x1xf32> to vector<32x512xf32>
    %9 = vector.broadcast %7 : vector<1x512xf32> to vector<32x512xf32>
    %10 = arith.mulf %8, %9 : vector<32x512xf32>
    %11 = arith.addf %5, %10 : vector<32x512xf32>
    %c0_4 = arith.constant 0 : index
    %c2 = arith.constant 2 : index
    %12 = vector.load %arg2[%c0_4, %c2] : memref<32x3xf32, #tpu.memory_space<vmem>>, vector<32x1xf32>
    %13 = vector.extract_strided_slice %0 {offsets = [2, 0], sizes = [1, 512], strides = [1, 1]} : vector<3x512xf32> to vector<1x512xf32>
    %14 = vector.broadcast %12 : vector<32x1xf32> to vector<32x512xf32>
    %15 = vector.broadcast %13 : vector<1x512xf32> to vector<32x512xf32>
    %16 = arith.mulf %14, %15 : vector<32x512xf32>
    %17 = arith.addf %11, %16 : vector<32x512xf32>
    %c0_5 = arith.constant 0 : index
    %c0_6 = arith.constant 0 : index
    %18 = vector.load %arg3[%c0_5, %c0_6] : memref<32x3xf32, #tpu.memory_space<vmem>>, vector<32x1xf32>
    %19 = vector.broadcast %18 : vector<32x1xf32> to vector<32x512xf32>
    %20 = arith.addf %17, %19 : vector<32x512xf32>
    %cst = arith.constant 3.000000e+01 : f32
    %21 = vector.broadcast %cst : f32 to vector<32x512xf32>
    %22 = arith.mulf %21, %20 : vector<32x512xf32>
    %23 = math.sin %22 : vector<32x512xf32>
    %c0_7 = arith.constant 0 : index
    %c0_8 = arith.constant 0 : index
    %c0_9 = arith.constant 0 : index
    %24 = vector.load %arg4[%c0_7, %c0_8, %c0_9] : memref<2x32x32xf32, #tpu.memory_space<vmem>>, vector<1x32x32xf32>
    %25 = vector.shape_cast %24 : vector<1x32x32xf32> to vector<32x32xf32>
    %cst_10 = arith.constant dense<0.000000e+00> : vector<32x512xf32>
    %26 = tpu.matmul %25, %23, %cst_10 {dimension_numbers = #tpu.dot_dimension_numbers<[1], [0], [0], [1], [0, 0, 1, 1], [], []>} : vector<32x32xf32>, vector<32x512xf32>, vector<32x512xf32> -> vector<32x512xf32>
    %c0_11 = arith.constant 0 : index
    %c1_12 = arith.constant 1 : index
    %27 = vector.load %arg3[%c0_11, %c1_12] : memref<32x3xf32, #tpu.memory_space<vmem>>, vector<32x1xf32>
    %28 = vector.broadcast %27 : vector<32x1xf32> to vector<32x512xf32>
    %29 = arith.addf %26, %28 : vector<32x512xf32>
    %cst_13 = arith.constant 3.000000e+01 : f32
    %30 = vector.broadcast %cst_13 : f32 to vector<32x512xf32>
    %31 = arith.mulf %30, %29 : vector<32x512xf32>
    %32 = math.sin %31 : vector<32x512xf32>
    %c1_14 = arith.constant 1 : index
    %c0_15 = arith.constant 0 : index
    %c0_16 = arith.constant 0 : index
    %33 = vector.load %arg4[%c1_14, %c0_15, %c0_16] : memref<2x32x32xf32, #tpu.memory_space<vmem>>, vector<1x32x32xf32>
    %34 = vector.shape_cast %33 : vector<1x32x32xf32> to vector<32x32xf32>
    %cst_17 = arith.constant dense<0.000000e+00> : vector<32x512xf32>
    %35 = tpu.matmul %34, %32, %cst_17 {dimension_numbers = #tpu.dot_dimension_numbers<[1], [0], [0], [1], [0, 0, 1, 1], [], []>} : vector<32x32xf32>, vector<32x512xf32>, vector<32x512xf32> -> vector<32x512xf32>
    %c0_18 = arith.constant 0 : index
    %c2_19 = arith.constant 2 : index
    %36 = vector.load %arg3[%c0_18, %c2_19] : memref<32x3xf32, #tpu.memory_space<vmem>>, vector<32x1xf32>
    %37 = vector.broadcast %36 : vector<32x1xf32> to vector<32x512xf32>
    %38 = arith.addf %35, %37 : vector<32x512xf32>
    %cst_20 = arith.constant 3.000000e+01 : f32
    %39 = vector.broadcast %cst_20 : f32 to vector<32x512xf32>
    %40 = arith.mulf %39, %38 : vector<32x512xf32>
    %41 = math.sin %40 : vector<32x512xf32>
    %c0_21 = arith.constant 0 : index
    %c0_22 = arith.constant 0 : index
    %42 = vector.load %arg5[%c0_21, %c0_22] : memref<32x1xf32, #tpu.memory_space<vmem>>, vector<32x1xf32>
    %43 = vector.broadcast %42 : vector<32x1xf32> to vector<32x512xf32>
    %44 = arith.mulf %41, %43 : vector<32x512xf32>
    %cst_23 = arith.constant dense<0.000000e+00> : vector<512xf32>
    %45 = vector.multi_reduction <add>, %44, %cst_23 [0] : vector<32x512xf32> to vector<512xf32>
    %46 = vector.shape_cast %45 : vector<512xf32> to vector<1x512xf32>
    %c0_24 = arith.constant 0 : index
    %c0_25 = arith.constant 0 : index
    %47 = vector.load %arg6[%c0_24, %c0_25] : memref<1x1xf32, #tpu.memory_space<vmem>>, vector<1x1xf32>
    %48 = vector.broadcast %47 : vector<1x1xf32> to vector<1x512xf32>
    %49 = arith.addf %46, %48 : vector<1x512xf32>
    %c0_26 = arith.constant 0 : index
    %c0_27 = arith.constant 0 : index
    %50 = vector.load %arg7[%c0_26, %c0_27] : memref<1x512xf32, #tpu.memory_space<vmem>>, vector<1x512xf32>
    tpu.vector_store %arg7[%c0_26, %c0_27], %49 {strides = array<i32>} : memref<1x512xf32, #tpu.memory_space<vmem>>, vector<1x512xf32>,
    return
  }
  func.func @transform_0(%arg0: i32) -> (i32, i32) {
    %c0_i32 = arith.constant 0 : i32
    %c0_i32_0 = arith.constant 0 : i32
    return %c0_i32, %arg0 : i32, i32
  }
  func.func @transform_1(%arg0: i32) -> (i32, i32) {
    %c0_i32 = arith.constant 0 : i32
    %c0_i32_0 = arith.constant 0 : i32
    %c0_i32_1 = arith.constant 0 : i32
    return %c0_i32, %c0_i32_0 : i32, i32
  }
  func.func @transform_2(%arg0: i32) -> (i32, i32) {
    %c0_i32 = arith.constant 0 : i32
    %c0_i32_0 = arith.constant 0 : i32
    %c0_i32_1 = arith.constant 0 : i32
    return %c0_i32, %c0_i32_0 : i32, i32
  }
  func.func @transform_3(%arg0: i32) -> (i32, i32, i32) {
    %c0_i32 = arith.constant 0 : i32
    %c0_i32_0 = arith.constant 0 : i32
    %c0_i32_1 = arith.constant 0 : i32
    %c0_i32_2 = arith.constant 0 : i32
    return %c0_i32, %c0_i32_0, %c0_i32_1 : i32, i32, i32
  }
  func.func @transform_4(%arg0: i32) -> (i32, i32) {
    %c0_i32 = arith.constant 0 : i32
    %c0_i32_0 = arith.constant 0 : i32
    %c0_i32_1 = arith.constant 0 : i32
    return %c0_i32, %c0_i32_0 : i32, i32
  }
  func.func @transform_5(%arg0: i32) -> (i32, i32) {
    %c0_i32 = arith.constant 0 : i32
    %c0_i32_0 = arith.constant 0 : i32
    %c0_i32_1 = arith.constant 0 : i32
    return %c0_i32, %c0_i32_0 : i32, i32
  }
  func.func @transform_6(%arg0: i32) -> (i32, i32) {
    %c0_i32 = arith.constant 0 : i32
    %c0_i32_0 = arith.constant 0 : i32
    return %c0_i32, %arg0 : i32, i32
  }
}

</mosaic_0001>

<llo_original>
// kernel: tpu_custom_call.1
$region0: #{tpu_custom_call.1}
  #allocation0 [shape = 'u32[]', space=smem, size = 0x4, offset = 0x4, fixed_abs, tag = 'smem constant byte address 0x4 - core index']
  #allocation1 [shape = 'u32[144,128]{1,0:T(1,128)}', space=vmem, size = 0x12000, scoped, tag = 'internal scratch']
  #allocation2 [shape = 'f32[1,1]{1,0:T(1,128)S(1)}', space=vmem, size = 0x200, scoped, tag = 'scoped memory for tpu_custom_call.1']
  %s0 = inlined_call_operand.vmem [shape: f32[3,2048], index: 0, kind: input, shape index: {}]
  %s1 = inlined_call_operand.vmem [shape: f32[32,3], index: 1, kind: input, shape index: {}]
  %s2 = inlined_call_operand.vmem [shape: f32[32,3], index: 2, kind: input, shape index: {}]
  %s3 = inlined_call_operand.hbm [shape: f32[2,32,32], index: 3, kind: input, shape index: {}]
  %s4 = inlined_call_operand.vmem [shape: f32[32,1], index: 4, kind: input, shape index: {}]
  %s5 = inlined_call_operand.<no memory space> [shape: f32[1,1], index: 5, kind: input, shape index: {}]
  %s6 = inlined_call_operand.hbm [shape: f32[1,2048], index: 6, kind: output, shape index: {}]
  %s7 = sld [smem:[#allocation0]]
  $region61: #{tpu_custom_call.1} parent=0
    _
  %s9 = ssub.s32 1, %s7
  %s10 = scalar_select 0, %s9, %s7
  %v11 = vstv %s5
  %12 = vst [vmem:[#allocation2] sm:$0x1] %v11
  $region1: #{tpu_custom_call.1} parent=0
    #allocation3 [shape = 'u8[32768]{0}', space=vmem, size = 0x8000, scoped, tag = 'input window, operand 3, single buffered']
    #allocation4 [shape = 's32[2]{0}', space=sflag, size = 0x8, scoped, tag = 'scoped memory for tpu_custom_call.1']
    #allocation5 [shape = 's32[2]{0}', space=sflag, size = 0x8, scoped, tag = 'scoped memory for tpu_custom_call.1']
    #allocation6 [shape = 'u8[4096]{0}', space=vmem, size = 0x1000, scoped, tag = 'output window, operand 0']
    %13 = vsyncpa [#allocation4], 0
    %14 = vsyncpa [#allocation5], 0
    %s15 = scalar_lea.sflag [#allocation5], 1
    %16 = vsyncpa %s15, 0
    loop: start=0, step=1, limit=6
    $region2: #{tpu_custom_call.1} parent=1 // loop_pre_header
      _
    $region3: #{tpu_custom_call.1} parent=1 // loop_header
      %s18 = sphi 0, %s22
      %p19 = scmp.ge.s32.totalorder %s18, 6
      %s28 = sphi 0, %s30
      %s31 = sphi 0, %s28
      %s32 = sphi 0, %s31
      %s48 = sphi 0, %s32
      %s52 = sphi 0, %s52
      %s54 = sphi 0, %s52
      %s55 = sphi 0, %s54
      %s69 = sphi 0, %s55
      %s73 = sphi 0, %s73
      %s75 = sphi 0, %s73
      %s76 = sphi 0, %s75
      %s90 = sphi 0, %s76
      %s94 = sphi 0, %s94
      %s96 = sphi 0, %s94
      %s97 = sphi 0, %s96
      %s111 = sphi 0, %s97
      %s115 = sphi 0, %s115
      %s117 = sphi 0, %s115
      %s118 = sphi 0, %s117
      %s132 = sphi 0, %s118
      %s136 = sphi 0, %s136
      %s138 = sphi 0, %s136
      %s139 = sphi 0, %s138
      %s153 = sphi 0, %s139
      %s159 = sphi 0, %s161
      %s162 = sphi 0, %s159
      %s163 = sphi 0, %s162
      %s179 = sphi 0, %s163
    $region4: #{tpu_custom_call.1} parent=1 // loop_header_branch
      %21 = sbr.rel (%p19) target = $region8
    $region5: #{tpu_custom_call.1} parent=1 // loop_body
      %s23 = ssub.s32 %s18, 1
      %s24 = ssub.s32 %s18, 2
      %s25 = sadd.s32 %s18, 1
      %s26 = ssub.s32 %s18, %s25
      %p27 = scmp.eq.s32.totalorder %s26, 0
      %s29 = sadd.s32 %s28, 1
      %s30 = scalar_select %p27, %s28, %s29
      %p33 = pneg %p27
      %p34 = scmp.eq.s32.totalorder %s18, 3
      %p35 = por %p33, %p34
      %p36 = scmp.ne.s32.totalorder %s28, %s31
      %p37 = scmp.eq.s32.totalorder %s18, 0
      %p38 = por %p36, %p37
      %p39 = scmp.ne.s32.totalorder %s28, %s31
      %p40 = scmp.eq.s32.totalorder %s23, 3
      %p41 = por %p39, %p40
      %p42 = scmp.ne.s32.totalorder %s31, %s32
      %p43 = scmp.eq.s32.totalorder %s23, 0
      %p44 = por %p42, %p43
      %p45 = scmp.ne.s32.totalorder %s31, %s32
      %p46 = scmp.eq.s32.totalorder %s24, 3
      %p47 = por %p45, %p46
      %p49 = scmp.ne.s32.totalorder %s32, %s48
      %p50 = scmp.eq.s32.totalorder %s24, 0
      %p51 = por %p49, %p50
      %s53 = sadd.s32 %s52, 1
      %p56 = scmp.eq.s32.totalorder %s18, 3
      %p57 = scmp.ne.s32.totalorder %s52, %s54
      %p58 = scmp.eq.s32.totalorder %s18, 0
      %p59 = por %p57, %p58
      %p60 = scmp.ne.s32.totalorder %s52, %s54
      %p61 = scmp.eq.s32.totalorder %s23, 3
      %p62 = por %p60, %p61
      %p63 = scmp.ne.s32.totalorder %s54, %s55
      %p64 = scmp.eq.s32.totalorder %s23, 0
      %p65 = por %p63, %p64
      %p66 = scmp.ne.s32.totalorder %s54, %s55
      %p67 = scmp.eq.s32.totalorder %s24, 3
      %p68 = por %p66, %p67
      %p70 = scmp.ne.s32.totalorder %s55, %s69
      %p71 = scmp.eq.s32.totalorder %s24, 0
      %p72 = por %p70, %p71
      %s74 = sadd.s32 %s73, 1
      %p77 = scmp.eq.s32.totalorder %s18, 3
      %p78 = scmp.ne.s32.totalorder %s73, %s75
      %p79 = scmp.eq.s32.totalorder %s18, 0
      %p80 = por %p78, %p79
      %p81 = scmp.ne.s32.totalorder %s73, %s75
      %p82 = scmp.eq.s32.totalorder %s23, 3
      %p83 = por %p81, %p82
      %p84 = scmp.ne.s32.totalorder %s75, %s76
      %p85 = scmp.eq.s32.totalorder %s23, 0
      %p86 = por %p84, %p85
      %p87 = scmp.ne.s32.totalorder %s75, %s76
      %p88 = scmp.eq.s32.totalorder %s24, 3
      %p89 = por %p87, %p88
      %p91 = scmp.ne.s32.totalorder %s76, %s90
      %p92 = scmp.eq.s32.totalorder %s24, 0
      %p93 = por %p91, %p92
      %s95 = sadd.s32 %s94, 1
      %p98 = scmp.eq.s32.totalorder %s18, 3
      %p99 = scmp.ne.s32.totalorder %s94, %s96
      %p100 = scmp.eq.s32.totalorder %s18, 0
      %p101 = por %p99, %p100
      %p102 = scmp.ne.s32.totalorder %s94, %s96
      %p103 = scmp.eq.s32.totalorder %s23, 3
      %p104 = por %p102, %p103
      %p105 = scmp.ne.s32.totalorder %s96, %s97
      %p106 = scmp.eq.s32.totalorder %s23, 0
      %p107 = por %p105, %p106
      %p108 = scmp.ne.s32.totalorder %s96, %s97
      %p109 = scmp.eq.s32.totalorder %s24, 3
      %p110 = por %p108, %p109
      %p112 = scmp.ne.s32.totalorder %s97, %s111
      %p113 = scmp.eq.s32.totalorder %s24, 0
      %p114 = por %p112, %p113
      %s116 = sadd.s32 %s115, 1
      %p119 = scmp.eq.s32.totalorder %s18, 3
      %p120 = scmp.ne.s32.totalorder %s115, %s117
      %p121 = scmp.eq.s32.totalorder %s18, 0
      %p122 = por %p120, %p121
      %p123 = scmp.ne.s32.totalorder %s115, %s117
      %p124 = scmp.eq.s32.totalorder %s23, 3
      %p125 = por %p123, %p124
      %p126 = scmp.ne.s32.totalorder %s117, %s118
      %p127 = scmp.eq.s32.totalorder %s23, 0
      %p128 = por %p126, %p127
      %p129 = scmp.ne.s32.totalorder %s117, %s118
      %p130 = scmp.eq.s32.totalorder %s24, 3
      %p131 = por %p129, %p130
      %p133 = scmp.ne.s32.totalorder %s118, %s132
      %p134 = scmp.eq.s32.totalorder %s24, 0
      %p135 = por %p133, %p134
      %s137 = sadd.s32 %s136, 1
      %p140 = scmp.eq.s32.totalorder %s18, 3
      %p141 = scmp.ne.s32.totalorder %s136, %s138
      %p142 = scmp.eq.s32.totalorder %s18, 0
      %p143 = por %p141, %p142
      %p144 = scmp.ne.s32.totalorder %s136, %s138
      %p145 = scmp.eq.s32.totalorder %s23, 3
      %p146 = por %p144, %p145
      %p147 = scmp.ne.s32.totalorder %s138, %s139
      %p148 = scmp.eq.s32.totalorder %s23, 0
      %p149 = por %p147, %p148
      %p150 = scmp.ne.s32.totalorder %s138, %s139
      %p151 = scmp.eq.s32.totalorder %s24, 3
      %p152 = por %p150, %p151
      %p154 = scmp.ne.s32.totalorder %s139, %s153
      %p155 = scmp.eq.s32.totalorder %s24, 0
      %p156 = por %p154, %p155
      %s157 = ssub.s32 %s18, %s25
      %p158 = scmp.eq.s32.totalorder %s157, 0
      %s160 = sadd.s32 %s159, 1
      %s161 = scalar_select %p158, %s159, %s160
      %p164 = pneg %p158
      %p165 = scmp.eq.s32.totalorder %s18, 3
      %p166 = por %p164, %p165
      %p167 = scmp.ne.s32.totalorder %s159, %s162
      %p168 = scmp.eq.s32.totalorder %s18, 0
      %p169 = por %p167, %p168
      %p170 = scmp.ne.s32.totalorder %s159, %s162
      %p171 = scmp.eq.s32.totalorder %s23, 3
      %p172 = por %p170, %p171
      %p173 = scmp.ne.s32.totalorder %s162, %s163
      %p174 = scmp.eq.s32.totalorder %s23, 0
      %p175 = por %p173, %p174
      %p176 = scmp.ne.s32.totalorder %s162, %s163
      %p177 = scmp.eq.s32.totalorder %s24, 3
      %p178 = por %p176, %p177
      %p180 = scmp.ne.s32.totalorder %s163, %s179
      %p181 = scmp.eq.s32.totalorder %s24, 0
      %p182 = por %p180, %p181
      %p183 = scmp.le.s32.totalorder 1, %s18
      %p184 = scmp.lt.s32.totalorder %s18, 5
      %p185 = pnand %p183, %p184
      %p186 = pneg %p185
      // Predicated region
      $region9: #{tpu_custom_call.1} parent=5 // pred_check
        _
      $region10: #{tpu_custom_call.1} parent=5 // pred_check_branch
        %188 = sbr.rel (%p185) target = $region12
      $region11: #{tpu_custom_call.1} parent=5 // pred_region
        %s189 = ssub.s32 %s18, 1
        // Predicated region
        $region13: #{tpu_custom_call.1} parent=11 // pred_check
          %p190 = pneg %p65
        $region14: #{tpu_custom_call.1} parent=11 // pred_check_branch
          %192 = sbr.rel (%p190) target = $region16
        $region15: #{tpu_custom_call.1} parent=11 // pred_region
          _
        $region16: #{tpu_custom_call.1} parent=11 // pred_fallthru
          _
        // Predicated region
        $region17: #{tpu_custom_call.1} parent=11 // pred_check
          %p193 = pneg %p86
        $region18: #{tpu_custom_call.1} parent=11 // pred_check_branch
          %195 = sbr.rel (%p193) target = $region20
        $region19: #{tpu_custom_call.1} parent=11 // pred_region
          _
        $region20: #{tpu_custom_call.1} parent=11 // pred_fallthru
          _
        // Predicated region
        $region21: #{tpu_custom_call.1} parent=11 // pred_check
          %p196 = pneg %p107
        $region22: #{tpu_custom_call.1} parent=11 // pred_check_branch
          %198 = sbr.rel (%p196) target = $region24
        $region23: #{tpu_custom_call.1} parent=11 // pred_region
          %s200 = ssub.s32 1024, 1024
          %201 = vsyncadd [#allocation4], %s200
          %s202 = sshll.u32 [#allocation3], 4
          %s203 = int_to_ptr.vmem [resolvable:$true] %s202
          %208 = dma.hbm_to_vmem [thread:$0]  %s3, 1024, %s203, [#allocation4], 128, 128, 8
        $region24: #{tpu_custom_call.1} parent=11 // pred_fallthru
          _
        // Predicated region
        $region25: #{tpu_custom_call.1} parent=11 // pred_check
          %p209 = pneg %p128
        $region26: #{tpu_custom_call.1} parent=11 // pred_check_branch
          %211 = sbr.rel (%p209) target = $region28
        $region27: #{tpu_custom_call.1} parent=11 // pred_region
          _
        $region28: #{tpu_custom_call.1} parent=11 // pred_fallthru
          _
        // Predicated region
        $region29: #{tpu_custom_call.1} parent=11 // pred_check
          %p212 = pneg %p149
        $region30: #{tpu_custom_call.1} parent=11 // pred_check_branch
          %214 = sbr.rel (%p212) target = $region32
        $region31: #{tpu_custom_call.1} parent=11 // pred_region
          _
        $region32: #{tpu_custom_call.1} parent=11 // pred_fallthru
          _
      $region12: #{tpu_custom_call.1} parent=5 // pred_fallthru
        _
      %p215 = scmp.lt.s32.totalorder %s18, 4
      // Predicated region
      $region33: #{tpu_custom_call.1} parent=5 // pred_check
        %p216 = pneg %p215
      $region34: #{tpu_custom_call.1} parent=5 // pred_check_branch
        %218 = sbr.rel (%p216) target = $region36
      $region35: #{tpu_custom_call.1} parent=5 // pred_region
        // Predicated region
        $region37: #{tpu_custom_call.1} parent=35 // pred_check
          %p219 = pneg %p38
        $region38: #{tpu_custom_call.1} parent=35 // pred_check_branch
          %221 = sbr.rel (%p219) target = $region40
        $region39: #{tpu_custom_call.1} parent=35 // pred_region
          %s222 = smul.u32 4, %s18
          %p223 = scmp.lt.s32.totalorder %s222, 15
          %s224 = scalar_select %p223, %s222, 15
          %s225 = smul.addr %s224, 4
          %s226 = scalar_lea.vmem %s0, %s225
          %s227 = smul.u32 4, %s18
        $region40: #{tpu_custom_call.1} parent=35 // pred_fallthru
          _
      $region36: #{tpu_custom_call.1} parent=5 // pred_fallthru
        _
      %p228 = scmp.le.s32.totalorder 1, %s18
      %p229 = scmp.lt.s32.totalorder %s18, 5
      %p230 = pnand %p228, %p229
      %p231 = pneg %p230
      // Predicated region
      $region41: #{tpu_custom_call.1} parent=5 // pred_check
        _
      $region42: #{tpu_custom_call.1} parent=5 // pred_check_branch
        %233 = sbr.rel (%p230) target = $region44
      $region43: #{tpu_custom_call.1} parent=5 // pred_region
        %s234 = ssub.s32 %s18, 1
        // Predicated region
        $region45: #{tpu_custom_call.1} parent=43 // pred_check
          %p235 = pneg %p107
        $region46: #{tpu_custom_call.1} parent=43 // pred_check_branch
          %237 = sbr.rel (%p235) target = $region48
        $region47: #{tpu_custom_call.1} parent=43 // pred_region
          %238 = dma.done [#allocation4], 1024
        $region48: #{tpu_custom_call.1} parent=43 // pred_fallthru
          _
        %s239 = smul.u32 4, %s23
        %p240 = scmp.lt.s32.totalorder %s239, 15
        %s241 = scalar_select %p240, %s239, 15
        %s242 = smul.addr %s241, 4
        %s243 = scalar_lea.vmem %s0, %s242
        %p244 = pneg %p44
        %p245 = pneg %p41
        %p246 = pneg %p65
        %p247 = pneg %p62
        %p248 = pneg %p86
        %p249 = pneg %p83
        %p250 = pneg %p107
        %p251 = pneg %p104
        %p252 = pneg %p128
        %p253 = pneg %p125
        %p254 = pneg %p149
        %p255 = pneg %p146
        %p256 = pneg %p175
        %p257 = pneg %p172
        %s258 = sand.u32 %s162, 1
        %s259 = scalar_lea.sflag [#allocation5], %s258
        %s260 = sand.u32 %s162, 1
        %s261 = smul.addr %s260, 4
        %s262 = scalar_lea.vmem [#allocation6], %s261
        %s263 = smul.u32 4, %s23
        %p264 = scmp.lt.s32.totalorder %s263, 15
        %s265 = scalar_select %p264, %s263, 15
        %s266 = smul.addr %s265, 4
        %s267 = scalar_lea.vmem %s0, %s266
        %s268 = smul.u32 4, %s23
        %s269 = smul.u32 4, %s23
        %v270 = vld [vmem:[%s267] sm:$0x77]
        %v271 = vld [vmem:[%s267 + $0x8] sm:$0x77]
        %v272 = vld [vmem:[%s1] sm:$0xff]
        %v273 = vld [vmem:[%s1 + $0x8] sm:$0xff]
        %v274 = vld [vmem:[%s1 + $0x10] sm:$0xff]
        %v275 = vld [vmem:[%s1 + $0x18] sm:$0xff]
        %277 = vset.pattern.permute.xlu0 0
        %278 = vperm.xlu0 %277, %v272
        %v279 = vpop.permute.xlu0 %278
        %282 = vset.pattern.permute.xlu0 0
        %283 = vperm.xlu0 %282, %v273
        %v284 = vpop.permute.xlu0 %283
        %287 = vset.pattern.permute.xlu0 0
        %288 = vperm.xlu0 %287, %v274
        %v289 = vpop.permute.xlu0 %288
        %292 = vset.pattern.permute.xlu0 0
        %293 = vperm.xlu0 %292, %v275
        %v294 = vpop.permute.xlu0 %293
        %v298 = vlaneseq
        %v299 = vshrl.u32 %v298, 7
        %v300 = vsub.s32 0, %v299
        %v301 = vrot.slane %v270, %v300
        %v302 = vlaneseq
        %v303 = vshrl.u32 %v302, 7
        %v304 = vsub.s32 4, %v303
        %v305 = vrot.slane %v270, %v304
        %v306 = vlaneseq
        %v307 = vshrl.u32 %v306, 7
        %v308 = vsub.s32 0, %v307
        %v309 = vrot.slane %v271, %v308
        %v310 = vlaneseq
        %v311 = vshrl.u32 %v310, 7
        %v312 = vsub.s32 4, %v311
        %v313 = vrot.slane %v271, %v312
        %v318 = vlaneseq
        %v319 = vshrl.u32 %v318, 7
        %v320 = vsub.s32 0, %v319
        %v321 = vrot.slane %v301, %v320
        %v322 = vlaneseq
        %v323 = vshrl.u32 %v322, 7
        %v324 = vsub.s32 0, %v323
        %v325 = vrot.slane %v305, %v324
        %v326 = vlaneseq
        %v327 = vshrl.u32 %v326, 7
        %v328 = vsub.s32 0, %v327
        %v329 = vrot.slane %v309, %v328
        %v330 = vlaneseq
        %v331 = vshrl.u32 %v330, 7
        %v332 = vsub.s32 0, %v331
        %v333 = vrot.slane %v313, %v332
        %v334 = vmul.f32 %v279, %v321
        %v335 = vmul.f32 %v279, %v325
        %v336 = vmul.f32 %v279, %v329
        %v337 = vmul.f32 %v279, %v333
        %v338 = vmul.f32 %v284, %v321
        %v339 = vmul.f32 %v284, %v325
        %v340 = vmul.f32 %v284, %v329
        %v341 = vmul.f32 %v284, %v333
        %v342 = vmul.f32 %v289, %v321
        %v343 = vmul.f32 %v289, %v325
        %v344 = vmul.f32 %v289, %v329
        %v345 = vmul.f32 %v289, %v333
        %v346 = vmul.f32 %v294, %v321
        %v347 = vmul.f32 %v294, %v325
        %v348 = vmul.f32 %v294, %v329
        %v349 = vmul.f32 %v294, %v333
        %350 = vset.pattern.permute.xlu0 1
        %351 = vperm.xlu0 %350, %v272
        %v352 = vpop.permute.xlu0 %351
        %354 = vset.pattern.permute.xlu0 1
        %355 = vperm.xlu0 %354, %v273
        %v356 = vpop.permute.xlu0 %355
        %358 = vset.pattern.permute.xlu0 1
        %359 = vperm.xlu0 %358, %v274
        %v360 = vpop.permute.xlu0 %359
        %362 = vset.pattern.permute.xlu0 1
        %363 = vperm.xlu0 %362, %v275
        %v364 = vpop.permute.xlu0 %363
        %v366 = vlaneseq
        %v367 = vshrl.u32 %v366, 7
        %v368 = vsub.s32 1, %v367
        %v369 = vrot.slane %v270, %v368
        %v370 = vlaneseq
        %v371 = vshrl.u32 %v370, 7
        %v372 = vsub.s32 5, %v371
        %v373 = vrot.slane %v270, %v372
        %v374 = vlaneseq
        %v375 = vshrl.u32 %v374, 7
        %v376 = vsub.s32 1, %v375
        %v377 = vrot.slane %v271, %v376
        %v378 = vlaneseq
        %v379 = vshrl.u32 %v378, 7
        %v380 = vsub.s32 5, %v379
        %v381 = vrot.slane %v271, %v380
        %v386 = vlaneseq
        %v387 = vshrl.u32 %v386, 7
        %v388 = vsub.s32 1, %v387
        %v389 = vrot.slane %v369, %v388
        %v390 = vlaneseq
        %v391 = vshrl.u32 %v390, 7
        %v392 = vsub.s32 1, %v391
        %v393 = vrot.slane %v373, %v392
        %v394 = vlaneseq
        %v395 = vshrl.u32 %v394, 7
        %v396 = vsub.s32 1, %v395
        %v397 = vrot.slane %v377, %v396
        %v398 = vlaneseq
        %v399 = vshrl.u32 %v398, 7
        %v400 = vsub.s32 1, %v399
        %v401 = vrot.slane %v381, %v400
        %v402 = vmul.f32 %v352, %v389
        %v403 = vmul.f32 %v352, %v393
        %v404 = vmul.f32 %v352, %v397
        %v405 = vmul.f32 %v352, %v401
        %v406 = vmul.f32 %v356, %v389
        %v407 = vmul.f32 %v356, %v393
        %v408 = vmul.f32 %v356, %v397
        %v409 = vmul.f32 %v356, %v401
        %v410 = vmul.f32 %v360, %v389
        %v411 = vmul.f32 %v360, %v393
        %v412 = vmul.f32 %v360, %v397
        %v413 = vmul.f32 %v360, %v401
        %v414 = vmul.f32 %v364, %v389
        %v415 = vmul.f32 %v364, %v393
        %v416 = vmul.f32 %v364, %v397
        %v417 = vmul.f32 %v364, %v401
        %v418 = vadd.f32 %v334, %v402
        %v419 = vadd.f32 %v335, %v403
        %v420 = vadd.f32 %v336, %v404
        %v421 = vadd.f32 %v337, %v405
        %v422 = vadd.f32 %v338, %v406
        %v423 = vadd.f32 %v339, %v407
        %v424 = vadd.f32 %v340, %v408
        %v425 = vadd.f32 %v341, %v409
        %v426 = vadd.f32 %v342, %v410
        %v427 = vadd.f32 %v343, %v411
        %v428 = vadd.f32 %v344, %v412
        %v429 = vadd.f32 %v345, %v413
        %v430 = vadd.f32 %v346, %v414
        %v431 = vadd.f32 %v347, %v415
        %v432 = vadd.f32 %v348, %v416
        %v433 = vadd.f32 %v349, %v417
        %434 = vset.pattern.permute.xlu0 2
        %435 = vperm.xlu0 %434, %v272
        %v436 = vpop.permute.xlu0 %435
        %438 = vset.pattern.permute.xlu0 2
        %439 = vperm.xlu0 %438, %v273
        %v440 = vpop.permute.xlu0 %439
        %442 = vset.pattern.permute.xlu0 2
        %443 = vperm.xlu0 %442, %v274
        %v444 = vpop.permute.xlu0 %443
        %446 = vset.pattern.permute.xlu0 2
        %447 = vperm.xlu0 %446, %v275
        %v448 = vpop.permute.xlu0 %447
        %v450 = vlaneseq
        %v451 = vshrl.u32 %v450, 7
        %v452 = vsub.s32 2, %v451
        %v453 = vrot.slane %v270, %v452
        %v454 = vlaneseq
        %v455 = vshrl.u32 %v454, 7
        %v456 = vsub.s32 6, %v455
        %v457 = vrot.slane %v270, %v456
        %v458 = vlaneseq
        %v459 = vshrl.u32 %v458, 7
        %v460 = vsub.s32 2, %v459
        %v461 = vrot.slane %v271, %v460
        %v462 = vlaneseq
        %v463 = vshrl.u32 %v462, 7
        %v464 = vsub.s32 6, %v463
        %v465 = vrot.slane %v271, %v464
        %v470 = vlaneseq
        %v471 = vshrl.u32 %v470, 7
        %v472 = vsub.s32 2, %v471
        %v473 = vrot.slane %v453, %v472
        %v474 = vlaneseq
        %v475 = vshrl.u32 %v474, 7
        %v476 = vsub.s32 2, %v475
        %v477 = vrot.slane %v457, %v476
        %v478 = vlaneseq
        %v479 = vshrl.u32 %v478, 7
        %v480 = vsub.s32 2, %v479
        %v481 = vrot.slane %v461, %v480
        %v482 = vlaneseq
        %v483 = vshrl.u32 %v482, 7
        %v484 = vsub.s32 2, %v483
        %v485 = vrot.slane %v465, %v484
        %v486 = vmul.f32 %v436, %v473
        %v487 = vmul.f32 %v436, %v477
        %v488 = vmul.f32 %v436, %v481
        %v489 = vmul.f32 %v436, %v485
        %v490 = vmul.f32 %v440, %v473
        %v491 = vmul.f32 %v440, %v477
        %v492 = vmul.f32 %v440, %v481
        %v493 = vmul.f32 %v440, %v485
        %v494 = vmul.f32 %v444, %v473
        %v495 = vmul.f32 %v444, %v477
        %v496 = vmul.f32 %v444, %v481
        %v497 = vmul.f32 %v444, %v485
        %v498 = vmul.f32 %v448, %v473
        %v499 = vmul.f32 %v448, %v477
        %v500 = vmul.f32 %v448, %v481
        %v501 = vmul.f32 %v448, %v485
        %v502 = vadd.f32 %v418, %v486
        %v503 = vadd.f32 %v419, %v487
        %v504 = vadd.f32 %v420, %v488
        %v505 = vadd.f32 %v421, %v489
        %v506 = vadd.f32 %v422, %v490
        %v507 = vadd.f32 %v423, %v491
        %v508 = vadd.f32 %v424, %v492
        %v509 = vadd.f32 %v425, %v493
        %v510 = vadd.f32 %v426, %v494
        %v511 = vadd.f32 %v427, %v495
        %v512 = vadd.f32 %v428, %v496
        %v513 = vadd.f32 %v429, %v497
        %v514 = vadd.f32 %v430, %v498
        %v515 = vadd.f32 %v431, %v499
        %v516 = vadd.f32 %v432, %v500
        %v517 = vadd.f32 %v433, %v501
        %v518 = vld [vmem:[%s2] sm:$0xff]
        %v519 = vld [vmem:[%s2 + $0x8] sm:$0xff]
        %v520 = vld [vmem:[%s2 + $0x10] sm:$0xff]
        %v521 = vld [vmem:[%s2 + $0x18] sm:$0xff]
        %523 = vset.pattern.permute.xlu0 0
        %524 = vperm.xlu0 %523, %v518
        %v525 = vpop.permute.xlu0 %524
        %528 = vset.pattern.permute.xlu0 0
        %529 = vperm.xlu0 %528, %v519
        %v530 = vpop.permute.xlu0 %529
        %533 = vset.pattern.permute.xlu0 0
        %534 = vperm.xlu0 %533, %v520
        %v535 = vpop.permute.xlu0 %534
        %538 = vset.pattern.permute.xlu0 0
        %539 = vperm.xlu0 %538, %v521
        %v540 = vpop.permute.xlu0 %539
        %v542 = vadd.f32 %v502, %v525
        %v543 = vadd.f32 %v503, %v525
        %v544 = vadd.f32 %v504, %v525
        %v545 = vadd.f32 %v505, %v525
        %v546 = vadd.f32 %v506, %v530
        %v547 = vadd.f32 %v507, %v530
        %v548 = vadd.f32 %v508, %v530
        %v549 = vadd.f32 %v509, %v530
        %v550 = vadd.f32 %v510, %v535
        %v551 = vadd.f32 %v511, %v535
        %v552 = vadd.f32 %v512, %v535
        %v553 = vadd.f32 %v513, %v535
        %v554 = vadd.f32 %v514, %v540
        %v555 = vadd.f32 %v515, %v540
        %v556 = vadd.f32 %v516, %v540
        %v557 = vadd.f32 %v517, %v540
        %v558 = vmul.f32 %v542, 30.0
        %v559 = vmul.f32 %v543, 30.0
        %v560 = vmul.f32 %v544, 30.0
        %v561 = vmul.f32 %v545, 30.0
        %v562 = vmul.f32 %v546, 30.0
        %v563 = vmul.f32 %v547, 30.0
        %v564 = vmul.f32 %v548, 30.0
        %v565 = vmul.f32 %v549, 30.0
        %v566 = vmul.f32 %v550, 30.0
        %v567 = vmul.f32 %v551, 30.0
        %v568 = vmul.f32 %v552, 30.0
        %v569 = vmul.f32 %v553, 30.0
        %v570 = vmul.f32 %v554, 30.0
        %v571 = vmul.f32 %v555, 30.0
        %v572 = vmul.f32 %v556, 30.0
        %v573 = vmul.f32 %v557, 30.0
        %v574 = vand.u32 2147483647, %v558
        %vm575 = vcmp.le.f32.partialorder %v574, 0.7853982
        %vm576 = vcmp.lt.s32.totalorder %v558, 0
        %v577 = vand.u32 %v558, 2139095040
        %v578 = vshrl.u32 %v577, 23
        %v579 = vsub.s32 %v578, 127
        %v580 = vand.u32 2147483647, %v558
        %v581 = vand.u32 %v580, 8388607
        %v582 = vor.u32 %v581, 8388608
        %v583 = vsub.s32 0, %v582
        %v584 = vadd.s32 %v579, 1
        %vm585 = vcmp.gt.s32.totalorder %v584, 0
        %v586 = vsel %vm585, %v584, 0
        %v587 = vshrl.u32 %v586, 5
        %v588 = vand.u32 %v586, 31
        %v589 = vsub.s32 32, %v588
        %v590 = vshrl.u32 683565275, %v589
        %v591 = vshll.u32 683565275, %v588
        %v592 = vshrl.u32 2475754826, %v589
        %v593 = vor.u32 %v591, %v592
        %v594 = vshll.u32 2475754826, %v588
        %v595 = vshrl.u32 2131351028, %v589
        %v596 = vor.u32 %v594, %v595
        %v597 = vshll.u32 2131351028, %v588
        %v598 = vshrl.u32 2102212464, %v589
        %v599 = vor.u32 %v597, %v598
        %v600 = vshll.u32 2102212464, %v588
        %v601 = vshrl.u32 920167782, %v589
        %v602 = vor.u32 %v600, %v601
        %v603 = vshll.u32 920167782, %v588
        %v604 = vshrl.u32 1326507024, %v589
        %v605 = vor.u32 %v603, %v604
        %vm606 = vcmp.lt.s32.totalorder %v587, 1
        %vm607 = vcmp.lt.s32.totalorder %v587, 2
        %vm608 = vcmp.lt.s32.totalorder %v587, 3
        %vm609 = vcmp.lt.s32.totalorder %v587, 4
        %v610 = vsel %vm606, %v590, %v593
        %v611 = vsel %vm609, %v599, 2102212464
        %v612 = vsel %vm608, %v596, %v611
        %v613 = vsel %vm607, %v610, %v612
        %v614 = vsel %vm606, %v593, %v596
        %v615 = vsel %vm609, %v602, 920167782
        %v616 = vsel %vm608, %v599, %v615
        %v617 = vsel %vm607, %v614, %v616
        %v618 = vsel %vm606, %v596, %v599
        %v619 = vsel %vm609, %v605, 1326507024
        %v620 = vsel %vm608, %v602, %v619
        %v621 = vsel %vm607, %v618, %v620
        %v622 = vshll.u32 %v582, 8
        %v623 = vmul.u32.u64.compose %v622, %v621
        %v624 = vextract.low.u32 %v623
        %v625 = vextract.high.u32 %v623
        %v626 = vmul.u32.u64.compose %v622, %v617
        %v627 = vextract.low.u32 %v626
        %v628 = vextract.high.u32 %v626
        %v629 = vmul.u32 %v622, %v613
        %v630 = vadd.s32 %v625, %v627
        %vm631 = vc.u32 %v625, %v627
        %v632 = vadd.s32 %v628, 1
        %v633 = vsel %vm631, %v632, %v628
        %v634 = vadd.s32 %v629, %v633
        %v635 = vadd.s32 %v634, 536870912
        %v636 = vshrl.u32 %v635, 30
        %v637 = vshll.u32 %v636, 30
        %v638 = vsub.s32 %v634, %v637
        %vm639 = vcmp.lt.s32.totalorder %v638, 0
        %v640 = vsub.s32 0, %v638
        %v641 = vsel %vm639, %v640, %v638
        %v642 = vclz %v641
        %v643 = vsub.s32 %v642, 2
        %vm644 = vcmp.gt.s32.totalorder 0, %v643
        %v645 = vsel %vm644, 0, %v643
        %v646 = vsub.s32 32, %v645
        %v647 = vshll.u32 %v638, %v645
        %v648 = vshrl.u32 %v630, %v646
        %v649 = vor.u32 %v647, %v648
        %v650 = vsub.s32 4294967266, %v645
        %v651 = vadd.s32 %v650, 127
        %v652 = vshll.u32 %v651, 23
        %v653 = vor.u32 4788187, %v652
        %v654 = vand.u32 2147483647, %v653
        %v656 = vcvt.s32.f32 %v649
        %v657 = vmul.f32 %v656, %v654
        %v658 = vxor.u32 %v657, 2147483648
        %v659 = vsel %vm576, %v658, %v657
        %v660 = vsub.s32 4, %v636
        %v661 = vsel %vm576, %v660, %v636
        %v662 = vsel %vm575, %v558, %v659
        %v663 = vsel %vm575, 0, %v661
        %v664 = vcosq.f32.pop %v662
        %v665 = vsinq.f32.pop %v662
        %vm666 = vweird.f32 %v558
        %v667 = vadd.s32 %v663, 3
        %v668 = vand.u32 %v667, 3
        %vm669 = vcmp.lt.s32.totalorder %v668, 2
        %vm670 = vcmp.eq.s32.totalorder %v668, 0
        %v671 = vxor.u32 %v665, 2147483648
        %v672 = vsel %vm670, %v664, %v671
        %vm673 = vcmp.eq.s32.totalorder %v668, 2
        %v674 = vxor.u32 %v664, 2147483648
        %v675 = vsel %vm673, %v674, %v665
        %v676 = vsel %vm669, %v672, %v675
        %v677 = vsel %vm666, nan, %v676
        %v678 = vand.u32 2147483647, %v559
        %vm679 = vcmp.le.f32.partialorder %v678, 0.7853982
        %vm680 = vcmp.lt.s32.totalorder %v559, 0
        %v681 = vand.u32 %v559, 2139095040
        %v682 = vshrl.u32 %v681, 23
        %v683 = vsub.s32 %v682, 127
        %v684 = vand.u32 2147483647, %v559
        %v685 = vand.u32 %v684, 8388607
        %v686 = vor.u32 %v685, 8388608
        %v687 = vsub.s32 0, %v686
        %v688 = vadd.s32 %v683, 1
        %vm689 = vcmp.gt.s32.totalorder %v688, 0
        %v690 = vsel %vm689, %v688, 0
        %v691 = vshrl.u32 %v690, 5
        %v692 = vand.u32 %v690, 31
        %v693 = vsub.s32 32, %v692
        %v694 = vshrl.u32 683565275, %v693
        %v695 = vshll.u32 683565275, %v692
        %v696 = vshrl.u32 2475754826, %v693
        %v697 = vor.u32 %v695, %v696
        %v698 = vshll.u32 2475754826, %v692
        %v699 = vshrl.u32 2131351028, %v693
        %v700 = vor.u32 %v698, %v699
        %v701 = vshll.u32 2131351028, %v692
        %v702 = vshrl.u32 2102212464, %v693
        %v703 = vor.u32 %v701, %v702
        %v704 = vshll.u32 2102212464, %v692
        %v705 = vshrl.u32 920167782, %v693
        %v706 = vor.u32 %v704, %v705
        %v707 = vshll.u32 920167782, %v692
        %v708 = vshrl.u32 1326507024, %v693
        %v709 = vor.u32 %v707, %v708
        %vm710 = vcmp.lt.s32.totalorder %v691, 1
        %vm711 = vcmp.lt.s32.totalorder %v691, 2
        %vm712 = vcmp.lt.s32.totalorder %v691, 3
        %vm713 = vcmp.lt.s32.totalorder %v691, 4
        %v714 = vsel %vm710, %v694, %v697
        %v715 = vsel %vm713, %v703, 2102212464
        %v716 = vsel %vm712, %v700, %v715
        %v717 = vsel %vm711, %v714, %v716
        %v718 = vsel %vm710, %v697, %v700
        %v719 = vsel %vm713, %v706, 920167782
        %v720 = vsel %vm712, %v703, %v719
        %v721 = vsel %vm711, %v718, %v720
        %v722 = vsel %vm710, %v700, %v703
        %v723 = vsel %vm713, %v709, 1326507024
        %v724 = vsel %vm712, %v706, %v723
        %v725 = vsel %vm711, %v722, %v724
        %v726 = vshll.u32 %v686, 8
        %v727 = vmul.u32.u64.compose %v726, %v725
        %v728 = vextract.low.u32 %v727
        %v729 = vextract.high.u32 %v727
        %v730 = vmul.u32.u64.compose %v726, %v721
        %v731 = vextract.low.u32 %v730
        %v732 = vextract.high.u32 %v730
        %v733 = vmul.u32 %v726, %v717
        %v734 = vadd.s32 %v729, %v731
        %vm735 = vc.u32 %v729, %v731
        %v736 = vadd.s32 %v732, 1
        %v737 = vsel %vm735, %v736, %v732
        %v738 = vadd.s32 %v733, %v737
        %v739 = vadd.s32 %v738, 536870912
        %v740 = vshrl.u32 %v739, 30
        %v741 = vshll.u32 %v740, 30
        %v742 = vsub.s32 %v738, %v741
        %vm743 = vcmp.lt.s32.totalorder %v742, 0
        %v744 = vsub.s32 0, %v742
        %v745 = vsel %vm743, %v744, %v742
        %v746 = vclz %v745
        %v747 = vsub.s32 %v746, 2
        %vm748 = vcmp.gt.s32.totalorder 0, %v747
        %v749 = vsel %vm748, 0, %v747
        %v750 = vsub.s32 32, %v749
        %v751 = vshll.u32 %v742, %v749
        %v752 = vshrl.u32 %v734, %v750
        %v753 = vor.u32 %v751, %v752
        %v754 = vsub.s32 4294967266, %v749
        %v755 = vadd.s32 %v754, 127
        %v756 = vshll.u32 %v755, 23
        %v757 = vor.u32 4788187, %v756
        %v758 = vand.u32 2147483647, %v757
        %v760 = vcvt.s32.f32 %v753
        %v761 = vmul.f32 %v760, %v758
        %v762 = vxor.u32 %v761, 2147483648
        %v763 = vsel %vm680, %v762, %v761
        %v764 = vsub.s32 4, %v740
        %v765 = vsel %vm680, %v764, %v740
        %v766 = vsel %vm679, %v559, %v763
        %v767 = vsel %vm679, 0, %v765
        %v768 = vcosq.f32.pop %v766
        %v769 = vsinq.f32.pop %v766
        %vm770 = vweird.f32 %v559
        %v771 = vadd.s32 %v767, 3
        %v772 = vand.u32 %v771, 3
        %vm773 = vcmp.lt.s32.totalorder %v772, 2
        %vm774 = vcmp.eq.s32.totalorder %v772, 0
        %v775 = vxor.u32 %v769, 2147483648
        %v776 = vsel %vm774, %v768, %v775
        %vm777 = vcmp.eq.s32.totalorder %v772, 2
        %v778 = vxor.u32 %v768, 2147483648
        %v779 = vsel %vm777, %v778, %v769
        %v780 = vsel %vm773, %v776, %v779
        %v781 = vsel %vm770, nan, %v780
        %v782 = vand.u32 2147483647, %v560
        %vm783 = vcmp.le.f32.partialorder %v782, 0.7853982
        %vm784 = vcmp.lt.s32.totalorder %v560, 0
        %v785 = vand.u32 %v560, 2139095040
        %v786 = vshrl.u32 %v785, 23
        %v787 = vsub.s32 %v786, 127
        %v788 = vand.u32 2147483647, %v560
        %v789 = vand.u32 %v788, 8388607
        %v790 = vor.u32 %v789, 8388608
        %v791 = vsub.s32 0, %v790
        %v792 = vadd.s32 %v787, 1
        %vm793 = vcmp.gt.s32.totalorder %v792, 0
        %v794 = vsel %vm793, %v792, 0
        %v795 = vshrl.u32 %v794, 5
        %v796 = vand.u32 %v794, 31
        %v797 = vsub.s32 32, %v796
        %v798 = vshrl.u32 683565275, %v797
        %v799 = vshll.u32 683565275, %v796
        %v800 = vshrl.u32 2475754826, %v797
        %v801 = vor.u32 %v799, %v800
        %v802 = vshll.u32 2475754826, %v796
        %v803 = vshrl.u32 2131351028, %v797
        %v804 = vor.u32 %v802, %v803
        %v805 = vshll.u32 2131351028, %v796
        %v806 = vshrl.u32 2102212464, %v797
        %v807 = vor.u32 %v805, %v806
        %v808 = vshll.u32 2102212464, %v796
        %v809 = vshrl.u32 920167782, %v797
        %v810 = vor.u32 %v808, %v809
        %v811 = vshll.u32 920167782, %v796
        %v812 = vshrl.u32 1326507024, %v797
        %v813 = vor.u32 %v811, %v812
        %vm814 = vcmp.lt.s32.totalorder %v795, 1
        %vm815 = vcmp.lt.s32.totalorder %v795, 2
        %vm816 = vcmp.lt.s32.totalorder %v795, 3
        %vm817 = vcmp.lt.s32.totalorder %v795, 4
        %v818 = vsel %vm814, %v798, %v801
        %v819 = vsel %vm817, %v807, 2102212464
        %v820 = vsel %vm816, %v804, %v819
        %v821 = vsel %vm815, %v818, %v820
        %v822 = vsel %vm814, %v801, %v804
        %v823 = vsel %vm817, %v810, 920167782
        %v824 = vsel %vm816, %v807, %v823
        %v825 = vsel %vm815, %v822, %v824
        %v826 = vsel %vm814, %v804, %v807
        %v827 = vsel %vm817, %v813, 1326507024
        %v828 = vsel %vm816, %v810, %v827
        %v829 = vsel %vm815, %v826, %v828
        %v830 = vshll.u32 %v790, 8
        %v831 = vmul.u32.u64.compose %v830, %v829
        %v832 = vextract.low.u32 %v831
        %v833 = vextract.high.u32 %v831
        %v834 = vmul.u32.u64.compose %v830, %v825
        %v835 = vextract.low.u32 %v834
        %v836 = vextract.high.u32 %v834
        %v837 = vmul.u32 %v830, %v821
        %v838 = vadd.s32 %v833, %v835
        %vm839 = vc.u32 %v833, %v835
        %v840 = vadd.s32 %v836, 1
        %v841 = vsel %vm839, %v840, %v836
        %v842 = vadd.s32 %v837, %v841
        %v843 = vadd.s32 %v842, 536870912
        %v844 = vshrl.u32 %v843, 30
        %v845 = vshll.u32 %v844, 30
        %v846 = vsub.s32 %v842, %v845
        %vm847 = vcmp.lt.s32.totalorder %v846, 0
        %v848 = vsub.s32 0, %v846
        %v849 = vsel %vm847, %v848, %v846
        %v850 = vclz %v849
        %v851 = vsub.s32 %v850, 2
        %vm852 = vcmp.gt.s32.totalorder 0, %v851
        %v853 = vsel %vm852, 0, %v851
        %v854 = vsub.s32 32, %v853
        %v855 = vshll.u32 %v846, %v853
        %v856 = vshrl.u32 %v838, %v854
        %v857 = vor.u32 %v855, %v856
        %v858 = vsub.s32 4294967266, %v853
        %v859 = vadd.s32 %v858, 127
        %v860 = vshll.u32 %v859, 23
        %v861 = vor.u32 4788187, %v860
        %v862 = vand.u32 2147483647, %v861
        %v864 = vcvt.s32.f32 %v857
        %v865 = vmul.f32 %v864, %v862
        %v866 = vxor.u32 %v865, 2147483648
        %v867 = vsel %vm784, %v866, %v865
        %v868 = vsub.s32 4, %v844
        %v869 = vsel %vm784, %v868, %v844
        %v870 = vsel %vm783, %v560, %v867
        %v871 = vsel %vm783, 0, %v869
        %v872 = vcosq.f32.pop %v870
        %v873 = vsinq.f32.pop %v870
        %vm874 = vweird.f32 %v560
        %v875 = vadd.s32 %v871, 3
        %v876 = vand.u32 %v875, 3
        %vm877 = vcmp.lt.s32.totalorder %v876, 2
        %vm878 = vcmp.eq.s32.totalorder %v876, 0
        %v879 = vxor.u32 %v873, 2147483648
        %v880 = vsel %vm878, %v872, %v879
        %vm881 = vcmp.eq.s32.totalorder %v876, 2
        %v882 = vxor.u32 %v872, 2147483648
        %v883 = vsel %vm881, %v882, %v873
        %v884 = vsel %vm877, %v880, %v883
        %v885 = vsel %vm874, nan, %v884
        %v886 = vand.u32 2147483647, %v561
        %vm887 = vcmp.le.f32.partialorder %v886, 0.7853982
        %vm888 = vcmp.lt.s32.totalorder %v561, 0
        %v889 = vand.u32 %v561, 2139095040
        %v890 = vshrl.u32 %v889, 23
        %v891 = vsub.s32 %v890, 127
        %v892 = vand.u32 2147483647, %v561
        %v893 = vand.u32 %v892, 8388607
        %v894 = vor.u32 %v893, 8388608
        %v895 = vsub.s32 0, %v894
        %v896 = vadd.s32 %v891, 1
        %vm897 = vcmp.gt.s32.totalorder %v896, 0
        %v898 = vsel %vm897, %v896, 0
        %v899 = vshrl.u32 %v898, 5
        %v900 = vand.u32 %v898, 31
        %v901 = vsub.s32 32, %v900
        %v902 = vshrl.u32 683565275, %v901
        %v903 = vshll.u32 683565275, %v900
        %v904 = vshrl.u32 2475754826, %v901
        %v905 = vor.u32 %v903, %v904
        %v906 = vshll.u32 2475754826, %v900
        %v907 = vshrl.u32 2131351028, %v901
        %v908 = vor.u32 %v906, %v907
        %v909 = vshll.u32 2131351028, %v900
        %v910 = vshrl.u32 2102212464, %v901
        %v911 = vor.u32 %v909, %v910
        %v912 = vshll.u32 2102212464, %v900
        %v913 = vshrl.u32 920167782, %v901
        %v914 = vor.u32 %v912, %v913
        %v915 = vshll.u32 920167782, %v900
        %v916 = vshrl.u32 1326507024, %v901
        %v917 = vor.u32 %v915, %v916
        %vm918 = vcmp.lt.s32.totalorder %v899, 1
        %vm919 = vcmp.lt.s32.totalorder %v899, 2
        %vm920 = vcmp.lt.s32.totalorder %v899, 3
        %vm921 = vcmp.lt.s32.totalorder %v899, 4
        %v922 = vsel %vm918, %v902, %v905
        %v923 = vsel %vm921, %v911, 2102212464
        %v924 = vsel %vm920, %v908, %v923
        %v925 = vsel %vm919, %v922, %v924
        %v926 = vsel %vm918, %v905, %v908
        %v927 = vsel %vm921, %v914, 920167782
        %v928 = vsel %vm920, %v911, %v927
        %v929 = vsel %vm919, %v926, %v928
        %v930 = vsel %vm918, %v908, %v911
        %v931 = vsel %vm921, %v917, 1326507024
        %v932 = vsel %vm920, %v914, %v931
        %v933 = vsel %vm919, %v930, %v932
        %v934 = vshll.u32 %v894, 8
        %v935 = vmul.u32.u64.compose %v934, %v933
        %v936 = vextract.low.u32 %v935
        %v937 = vextract.high.u32 %v935
        %v938 = vmul.u32.u64.compose %v934, %v929
        %v939 = vextract.low.u32 %v938
        %v940 = vextract.high.u32 %v938
        %v941 = vmul.u32 %v934, %v925
        %v942 = vadd.s32 %v937, %v939
        %vm943 = vc.u32 %v937, %v939
        %v944 = vadd.s32 %v940, 1
        %v945 = vsel %vm943, %v944, %v940
        %v946 = vadd.s32 %v941, %v945
        %v947 = vadd.s32 %v946, 536870912
        %v948 = vshrl.u32 %v947, 30
        %v949 = vshll.u32 %v948, 30
        %v950 = vsub.s32 %v946, %v949
        %vm951 = vcmp.lt.s32.totalorder %v950, 0
        %v952 = vsub.s32 0, %v950
        %v953 = vsel %vm951, %v952, %v950
        %v954 = vclz %v953
        %v955 = vsub.s32 %v954, 2
        %vm956 = vcmp.gt.s32.totalorder 0, %v955
        %v957 = vsel %vm956, 0, %v955
        %v958 = vsub.s32 32, %v957
        %v959 = vshll.u32 %v950, %v957
        %v960 = vshrl.u32 %v942, %v958
        %v961 = vor.u32 %v959, %v960
        %v962 = vsub.s32 4294967266, %v957
        %v963 = vadd.s32 %v962, 127
        %v964 = vshll.u32 %v963, 23
        %v965 = vor.u32 4788187, %v964
        %v966 = vand.u32 2147483647, %v965
        %v968 = vcvt.s32.f32 %v961
        %v969 = vmul.f32 %v968, %v966
        %v970 = vxor.u32 %v969, 2147483648
        %v971 = vsel %vm888, %v970, %v969
        %v972 = vsub.s32 4, %v948
        %v973 = vsel %vm888, %v972, %v948
        %v974 = vsel %vm887, %v561, %v971
        %v975 = vsel %vm887, 0, %v973
        %v976 = vcosq.f32.pop %v974
        %v977 = vsinq.f32.pop %v974
        %vm978 = vweird.f32 %v561
        %v979 = vadd.s32 %v975, 3
        %v980 = vand.u32 %v979, 3
        %vm981 = vcmp.lt.s32.totalorder %v980, 2
        %vm982 = vcmp.eq.s32.totalorder %v980, 0
        %v983 = vxor.u32 %v977, 2147483648
        %v984 = vsel %vm982, %v976, %v983
        %vm985 = vcmp.eq.s32.totalorder %v980, 2
        %v986 = vxor.u32 %v976, 2147483648
        %v987 = vsel %vm985, %v986, %v977
        %v988 = vsel %vm981, %v984, %v987
        %v989 = vsel %vm978, nan, %v988
        %v990 = vand.u32 2147483647, %v562
        %vm991 = vcmp.le.f32.partialorder %v990, 0.7853982
        %vm992 = vcmp.lt.s32.totalorder %v562, 0
        %v993 = vand.u32 %v562, 2139095040
        %v994 = vshrl.u32 %v993, 23
        %v995 = vsub.s32 %v994, 127
        %v996 = vand.u32 2147483647, %v562
        %v997 = vand.u32 %v996, 8388607
        %v998 = vor.u32 %v997, 8388608
        %v999 = vsub.s32 0, %v998
        %v1000 = vadd.s32 %v995, 1
        %vm1001 = vcmp.gt.s32.totalorder %v1000, 0
        %v1002 = vsel %vm1001, %v1000, 0
        %v1003 = vshrl.u32 %v1002, 5
        %v1004 = vand.u32 %v1002, 31
        %v1005 = vsub.s32 32, %v1004
        %v1006 = vshrl.u32 683565275, %v1005
        %v1007 = vshll.u32 683565275, %v1004
        %v1008 = vshrl.u32 2475754826, %v1005
        %v1009 = vor.u32 %v1007, %v1008
        %v1010 = vshll.u32 2475754826, %v1004
        %v1011 = vshrl.u32 2131351028, %v1005
        %v1012 = vor.u32 %v1010, %v1011
        %v1013 = vshll.u32 2131351028, %v1004
        %v1014 = vshrl.u32 2102212464, %v1005
        %v1015 = vor.u32 %v1013, %v1014
        %v1016 = vshll.u32 2102212464, %v1004
        %v1017 = vshrl.u32 920167782, %v1005
        %v1018 = vor.u32 %v1016, %v1017
        %v1019 = vshll.u32 920167782, %v1004
        %v1020 = vshrl.u32 1326507024, %v1005
        %v1021 = vor.u32 %v1019, %v1020
        %vm1022 = vcmp.lt.s32.totalorder %v1003, 1
        %vm1023 = vcmp.lt.s32.totalorder %v1003, 2
        %vm1024 = vcmp.lt.s32.totalorder %v1003, 3
        %vm1025 = vcmp.lt.s32.totalorder %v1003, 4
        %v1026 = vsel %vm1022, %v1006, %v1009
        %v1027 = vsel %vm1025, %v1015, 2102212464
        %v1028 = vsel %vm1024, %v1012, %v1027
        %v1029 = vsel %vm1023, %v1026, %v1028
        %v1030 = vsel %vm1022, %v1009, %v1012
        %v1031 = vsel %vm1025, %v1018, 920167782
        %v1032 = vsel %vm1024, %v1015, %v1031
        %v1033 = vsel %vm1023, %v1030, %v1032
        %v1034 = vsel %vm1022, %v1012, %v1015
        %v1035 = vsel %vm1025, %v1021, 1326507024
        %v1036 = vsel %vm1024, %v1018, %v1035
        %v1037 = vsel %vm1023, %v1034, %v1036
        %v1038 = vshll.u32 %v998, 8
        %v1039 = vmul.u32.u64.compose %v1038, %v1037
        %v1040 = vextract.low.u32 %v1039
        %v1041 = vextract.high.u32 %v1039
        %v1042 = vmul.u32.u64.compose %v1038, %v1033
        %v1043 = vextract.low.u32 %v1042
        %v1044 = vextract.high.u32 %v1042
        %v1045 = vmul.u32 %v1038, %v1029
        %v1046 = vadd.s32 %v1041, %v1043
        %vm1047 = vc.u32 %v1041, %v1043
        %v1048 = vadd.s32 %v1044, 1
        %v1049 = vsel %vm1047, %v1048, %v1044
        %v1050 = vadd.s32 %v1045, %v1049
        %v1051 = vadd.s32 %v1050, 536870912
        %v1052 = vshrl.u32 %v1051, 30
        %v1053 = vshll.u32 %v1052, 30
        %v1054 = vsub.s32 %v1050, %v1053
        %vm1055 = vcmp.lt.s32.totalorder %v1054, 0
        %v1056 = vsub.s32 0, %v1054
        %v1057 = vsel %vm1055, %v1056, %v1054
        %v1058 = vclz %v1057
        %v1059 = vsub.s32 %v1058, 2
        %vm1060 = vcmp.gt.s32.totalorder 0, %v1059
        %v1061 = vsel %vm1060, 0, %v1059
        %v1062 = vsub.s32 32, %v1061
        %v1063 = vshll.u32 %v1054, %v1061
        %v1064 = vshrl.u32 %v1046, %v1062
        %v1065 = vor.u32 %v1063, %v1064
        %v1066 = vsub.s32 4294967266, %v1061
        %v1067 = vadd.s32 %v1066, 127
        %v1068 = vshll.u32 %v1067, 23
        %v1069 = vor.u32 4788187, %v1068
        %v1070 = vand.u32 2147483647, %v1069
        %v1072 = vcvt.s32.f32 %v1065
        %v1073 = vmul.f32 %v1072, %v1070
        %v1074 = vxor.u32 %v1073, 2147483648
        %v1075 = vsel %vm992, %v1074, %v1073
        %v1076 = vsub.s32 4, %v1052
        %v1077 = vsel %vm992, %v1076, %v1052
        %v1078 = vsel %vm991, %v562, %v1075
        %v1079 = vsel %vm991, 0, %v1077
        %v1080 = vcosq.f32.pop %v1078
        %v1081 = vsinq.f32.pop %v1078
        %vm1082 = vweird.f32 %v562
        %v1083 = vadd.s32 %v1079, 3
        %v1084 = vand.u32 %v1083, 3
        %vm1085 = vcmp.lt.s32.totalorder %v1084, 2
        %vm1086 = vcmp.eq.s32.totalorder %v1084, 0
        %v1087 = vxor.u32 %v1081, 2147483648
        %v1088 = vsel %vm1086, %v1080, %v1087
        %vm1089 = vcmp.eq.s32.totalorder %v1084, 2
        %v1090 = vxor.u32 %v1080, 2147483648
        %v1091 = vsel %vm1089, %v1090, %v1081
        %v1092 = vsel %vm1085, %v1088, %v1091
        %v1093 = vsel %vm1082, nan, %v1092
        %v1094 = vand.u32 2147483647, %v563
        %vm1095 = vcmp.le.f32.partialorder %v1094, 0.7853982
        %vm1096 = vcmp.lt.s32.totalorder %v563, 0
        %v1097 = vand.u32 %v563, 2139095040
        %v1098 = vshrl.u32 %v1097, 23
        %v1099 = vsub.s32 %v1098, 127
        %v1100 = vand.u32 2147483647, %v563
        %v1101 = vand.u32 %v1100, 8388607
        %v1102 = vor.u32 %v1101, 8388608
        %v1103 = vsub.s32 0, %v1102
        %v1104 = vadd.s32 %v1099, 1
        %vm1105 = vcmp.gt.s32.totalorder %v1104, 0
        %v1106 = vsel %vm1105, %v1104, 0
        %v1107 = vshrl.u32 %v1106, 5
        %v1108 = vand.u32 %v1106, 31
        %v1109 = vsub.s32 32, %v1108
        %v1110 = vshrl.u32 683565275, %v1109
        %v1111 = vshll.u32 683565275, %v1108
        %v1112 = vshrl.u32 2475754826, %v1109
        %v1113 = vor.u32 %v1111, %v1112
        %v1114 = vshll.u32 2475754826, %v1108
        %v1115 = vshrl.u32 2131351028, %v1109
        %v1116 = vor.u32 %v1114, %v1115
        %v1117 = vshll.u32 2131351028, %v1108
        %v1118 = vshrl.u32 2102212464, %v1109
        %v1119 = vor.u32 %v1117, %v1118
        %v1120 = vshll.u32 2102212464, %v1108
        %v1121 = vshrl.u32 920167782, %v1109
        %v1122 = vor.u32 %v1120, %v1121
        %v1123 = vshll.u32 920167782, %v1108
        %v1124 = vshrl.u32 1326507024, %v1109
        %v1125 = vor.u32 %v1123, %v1124
        %vm1126 = vcmp.lt.s32.totalorder %v1107, 1
        %vm1127 = vcmp.lt.s32.totalorder %v1107, 2
        %vm1128 = vcmp.lt.s32.totalorder %v1107, 3
        %vm1129 = vcmp.lt.s32.totalorder %v1107, 4
        %v1130 = vsel %vm1126, %v1110, %v1113
        %v1131 = vsel %vm1129, %v1119, 2102212464
        %v1132 = vsel %vm1128, %v1116, %v1131
        %v1133 = vsel %vm1127, %v1130, %v1132
        %v1134 = vsel %vm1126, %v1113, %v1116
        %v1135 = vsel %vm1129, %v1122, 920167782
        %v1136 = vsel %vm1128, %v1119, %v1135
        %v1137 = vsel %vm1127, %v1134, %v1136
        %v1138 = vsel %vm1126, %v1116, %v1119
        %v1139 = vsel %vm1129, %v1125, 1326507024
        %v1140 = vsel %vm1128, %v1122, %v1139
        %v1141 = vsel %vm1127, %v1138, %v1140
        %v1142 = vshll.u32 %v1102, 8
        %v1143 = vmul.u32.u64.compose %v1142, %v1141
        %v1144 = vextract.low.u32 %v1143
        %v1145 = vextract.high.u32 %v1143
        %v1146 = vmul.u32.u64.compose %v1142, %v1137
        %v1147 = vextract.low.u32 %v1146
        %v1148 = vextract.high.u32 %v1146
        %v1149 = vmul.u32 %v1142, %v1133
        %v1150 = vadd.s32 %v1145, %v1147
        %vm1151 = vc.u32 %v1145, %v1147
        %v1152 = vadd.s32 %v1148, 1
        %v1153 = vsel %vm1151, %v1152, %v1148
        %v1154 = vadd.s32 %v1149, %v1153
        %v1155 = vadd.s32 %v1154, 536870912
        %v1156 = vshrl.u32 %v1155, 30
        %v1157 = vshll.u32 %v1156, 30
        %v1158 = vsub.s32 %v1154, %v1157
        %vm1159 = vcmp.lt.s32.totalorder %v1158, 0
        %v1160 = vsub.s32 0, %v1158
        %v1161 = vsel %vm1159, %v1160, %v1158
        %v1162 = vclz %v1161
        %v1163 = vsub.s32 %v1162, 2
        %vm1164 = vcmp.gt.s32.totalorder 0, %v1163
        %v1165 = vsel %vm1164, 0, %v1163
        %v1166 = vsub.s32 32, %v1165
        %v1167 = vshll.u32 %v1158, %v1165
        %v1168 = vshrl.u32 %v1150, %v1166
        %v1169 = vor.u32 %v1167, %v1168
        %v1170 = vsub.s32 4294967266, %v1165
        %v1171 = vadd.s32 %v1170, 127
        %v1172 = vshll.u32 %v1171, 23
        %v1173 = vor.u32 4788187, %v1172
        %v1174 = vand.u32 2147483647, %v1173
        %v1176 = vcvt.s32.f32 %v1169
        %v1177 = vmul.f32 %v1176, %v1174
        %v1178 = vxor.u32 %v1177, 2147483648
        %v1179 = vsel %vm1096, %v1178, %v1177
        %v1180 = vsub.s32 4, %v1156
        %v1181 = vsel %vm1096, %v1180, %v1156
        %v1182 = vsel %vm1095, %v563, %v1179
        %v1183 = vsel %vm1095, 0, %v1181
        %v1184 = vcosq.f32.pop %v1182
        %v1185 = vsinq.f32.pop %v1182
        %vm1186 = vweird.f32 %v563
        %v1187 = vadd.s32 %v1183, 3
        %v1188 = vand.u32 %v1187, 3
        %vm1189 = vcmp.lt.s32.totalorder %v1188, 2
        %vm1190 = vcmp.eq.s32.totalorder %v1188, 0
        %v1191 = vxor.u32 %v1185, 2147483648
        %v1192 = vsel %vm1190, %v1184, %v1191
        %vm1193 = vcmp.eq.s32.totalorder %v1188, 2
        %v1194 = vxor.u32 %v1184, 2147483648
        %v1195 = vsel %vm1193, %v1194, %v1185
        %v1196 = vsel %vm1189, %v1192, %v1195
        %v1197 = vsel %vm1186, nan, %v1196
        %v1198 = vand.u32 2147483647, %v564
        %vm1199 = vcmp.le.f32.partialorder %v1198, 0.7853982
        %vm1200 = vcmp.lt.s32.totalorder %v564, 0
        %v1201 = vand.u32 %v564, 2139095040
        %v1202 = vshrl.u32 %v1201, 23
        %v1203 = vsub.s32 %v1202, 127
        %v1204 = vand.u32 2147483647, %v564
        %v1205 = vand.u32 %v1204, 8388607
        %v1206 = vor.u32 %v1205, 8388608
        %v1207 = vsub.s32 0, %v1206
        %v1208 = vadd.s32 %v1203, 1
        %vm1209 = vcmp.gt.s32.totalorder %v1208, 0
        %v1210 = vsel %vm1209, %v1208, 0
        %v1211 = vshrl.u32 %v1210, 5
        %v1212 = vand.u32 %v1210, 31
        %v1213 = vsub.s32 32, %v1212
        %v1214 = vshrl.u32 683565275, %v1213
        %v1215 = vshll.u32 683565275, %v1212
        %v1216 = vshrl.u32 2475754826, %v1213
        %v1217 = vor.u32 %v1215, %v1216
        %v1218 = vshll.u32 2475754826, %v1212
        %v1219 = vshrl.u32 2131351028, %v1213
        %v1220 = vor.u32 %v1218, %v1219
        %v1221 = vshll.u32 2131351028, %v1212
        %v1222 = vshrl.u32 2102212464, %v1213
        %v1223 = vor.u32 %v1221, %v1222
        %v1224 = vshll.u32 2102212464, %v1212
        %v1225 = vshrl.u32 920167782, %v1213
        %v1226 = vor.u32 %v1224, %v1225
        %v1227 = vshll.u32 920167782, %v1212
        %v1228 = vshrl.u32 1326507024, %v1213
        %v1229 = vor.u32 %v1227, %v1228
        %vm1230 = vcmp.lt.s32.totalorder %v1211, 1
        %vm1231 = vcmp.lt.s32.totalorder %v1211, 2
        %vm1232 = vcmp.lt.s32.totalorder %v1211, 3
        %vm1233 = vcmp.lt.s32.totalorder %v1211, 4
        %v1234 = vsel %vm1230, %v1214, %v1217
        %v1235 = vsel %vm1233, %v1223, 2102212464
        %v1236 = vsel %vm1232, %v1220, %v1235
        %v1237 = vsel %vm1231, %v1234, %v1236
        %v1238 = vsel %vm1230, %v1217, %v1220
        %v1239 = vsel %vm1233, %v1226, 920167782
        %v1240 = vsel %vm1232, %v1223, %v1239
        %v1241 = vsel %vm1231, %v1238, %v1240
        %v1242 = vsel %vm1230, %v1220, %v1223
        %v1243 = vsel %vm1233, %v1229, 1326507024
        %v1244 = vsel %vm1232, %v1226, %v1243
        %v1245 = vsel %vm1231, %v1242, %v1244
        %v1246 = vshll.u32 %v1206, 8
        %v1247 = vmul.u32.u64.compose %v1246, %v1245
        %v1248 = vextract.low.u32 %v1247
        %v1249 = vextract.high.u32 %v1247
        %v1250 = vmul.u32.u64.compose %v1246, %v1241
        %v1251 = vextract.low.u32 %v1250
        %v1252 = vextract.high.u32 %v1250
        %v1253 = vmul.u32 %v1246, %v1237
        %v1254 = vadd.s32 %v1249, %v1251
        %vm1255 = vc.u32 %v1249, %v1251
        %v1256 = vadd.s32 %v1252, 1
        %v1257 = vsel %vm1255, %v1256, %v1252
        %v1258 = vadd.s32 %v1253, %v1257
        %v1259 = vadd.s32 %v1258, 536870912
        %v1260 = vshrl.u32 %v1259, 30
        %v1261 = vshll.u32 %v1260, 30
        %v1262 = vsub.s32 %v1258, %v1261
        %vm1263 = vcmp.lt.s32.totalorder %v1262, 0
        %v1264 = vsub.s32 0, %v1262
        %v1265 = vsel %vm1263, %v1264, %v1262
        %v1266 = vclz %v1265
        %v1267 = vsub.s32 %v1266, 2
        %vm1268 = vcmp.gt.s32.totalorder 0, %v1267
        %v1269 = vsel %vm1268, 0, %v1267
        %v1270 = vsub.s32 32, %v1269
        %v1271 = vshll.u32 %v1262, %v1269
        %v1272 = vshrl.u32 %v1254, %v1270
        %v1273 = vor.u32 %v1271, %v1272
        %v1274 = vsub.s32 4294967266, %v1269
        %v1275 = vadd.s32 %v1274, 127
        %v1276 = vshll.u32 %v1275, 23
        %v1277 = vor.u32 4788187, %v1276
        %v1278 = vand.u32 2147483647, %v1277
        %v1280 = vcvt.s32.f32 %v1273
        %v1281 = vmul.f32 %v1280, %v1278
        %v1282 = vxor.u32 %v1281, 2147483648
        %v1283 = vsel %vm1200, %v1282, %v1281
        %v1284 = vsub.s32 4, %v1260
        %v1285 = vsel %vm1200, %v1284, %v1260
        %v1286 = vsel %vm1199, %v564, %v1283
        %v1287 = vsel %vm1199, 0, %v1285
        %v1288 = vcosq.f32.pop %v1286
        %v1289 = vsinq.f32.pop %v1286
        %vm1290 = vweird.f32 %v564
        %v1291 = vadd.s32 %v1287, 3
        %v1292 = vand.u32 %v1291, 3
        %vm1293 = vcmp.lt.s32.totalorder %v1292, 2
        %vm1294 = vcmp.eq.s32.totalorder %v1292, 0
        %v1295 = vxor.u32 %v1289, 2147483648
        %v1296 = vsel %vm1294, %v1288, %v1295
        %vm1297 = vcmp.eq.s32.totalorder %v1292, 2
        %v1298 = vxor.u32 %v1288, 2147483648
        %v1299 = vsel %vm1297, %v1298, %v1289
        %v1300 = vsel %vm1293, %v1296, %v1299
        %v1301 = vsel %vm1290, nan, %v1300
        %v1302 = vand.u32 2147483647, %v565
        %vm1303 = vcmp.le.f32.partialorder %v1302, 0.7853982
        %vm1304 = vcmp.lt.s32.totalorder %v565, 0
        %v1305 = vand.u32 %v565, 2139095040
        %v1306 = vshrl.u32 %v1305, 23
        %v1307 = vsub.s32 %v1306, 127
        %v1308 = vand.u32 2147483647, %v565
        %v1309 = vand.u32 %v1308, 8388607
        %v1310 = vor.u32 %v1309, 8388608
        %v1311 = vsub.s32 0, %v1310
        %v1312 = vadd.s32 %v1307, 1
        %vm1313 = vcmp.gt.s32.totalorder %v1312, 0
        %v1314 = vsel %vm1313, %v1312, 0
        %v1315 = vshrl.u32 %v1314, 5
        %v1316 = vand.u32 %v1314, 31
        %v1317 = vsub.s32 32, %v1316
        %v1318 = vshrl.u32 683565275, %v1317
        %v1319 = vshll.u32 683565275, %v1316
        %v1320 = vshrl.u32 2475754826, %v1317
        %v1321 = vor.u32 %v1319, %v1320
        %v1322 = vshll.u32 2475754826, %v1316
        %v1323 = vshrl.u32 2131351028, %v1317
        %v1324 = vor.u32 %v1322, %v1323
        %v1325 = vshll.u32 2131351028, %v1316
        %v1326 = vshrl.u32 2102212464, %v1317
        %v1327 = vor.u32 %v1325, %v1326
        %v1328 = vshll.u32 2102212464, %v1316
        %v1329 = vshrl.u32 920167782, %v1317
        %v1330 = vor.u32 %v1328, %v1329
        %v1331 = vshll.u32 920167782, %v1316
        %v1332 = vshrl.u32 1326507024, %v1317
        %v1333 = vor.u32 %v1331, %v1332
        %vm1334 = vcmp.lt.s32.totalorder %v1315, 1
        %vm1335 = vcmp.lt.s32.totalorder %v1315, 2
        %vm1336 = vcmp.lt.s32.totalorder %v1315, 3
        %vm1337 = vcmp.lt.s32.totalorder %v1315, 4
        %v1338 = vsel %vm1334, %v1318, %v1321
        %v1339 = vsel %vm1337, %v1327, 2102212464
        %v1340 = vsel %vm1336, %v1324, %v1339
        %v1341 = vsel %vm1335, %v1338, %v1340
        %v1342 = vsel %vm1334, %v1321, %v1324
        %v1343 = vsel %vm1337, %v1330, 920167782
        %v1344 = vsel %vm1336, %v1327, %v1343
        %v1345 = vsel %vm1335, %v1342, %v1344
        %v1346 = vsel %vm1334, %v1324, %v1327
        %v1347 = vsel %vm1337, %v1333, 1326507024
        %v1348 = vsel %vm1336, %v1330, %v1347
        %v1349 = vsel %vm1335, %v1346, %v1348
        %v1350 = vshll.u32 %v1310, 8
        %v1351 = vmul.u32.u64.compose %v1350, %v1349
        %v1352 = vextract.low.u32 %v1351
        %v1353 = vextract.high.u32 %v1351
        %v1354 = vmul.u32.u64.compose %v1350, %v1345
        %v1355 = vextract.low.u32 %v1354
        %v1356 = vextract.high.u32 %v1354
        %v1357 = vmul.u32 %v1350, %v1341
        %v1358 = vadd.s32 %v1353, %v1355
        %vm1359 = vc.u32 %v1353, %v1355
        %v1360 = vadd.s32 %v1356, 1
        %v1361 = vsel %vm1359, %v1360, %v1356
        %v1362 = vadd.s32 %v1357, %v1361
        %v1363 = vadd.s32 %v1362, 536870912
        %v1364 = vshrl.u32 %v1363, 30
        %v1365 = vshll.u32 %v1364, 30
        %v1366 = vsub.s32 %v1362, %v1365
        %vm1367 = vcmp.lt.s32.totalorder %v1366, 0
        %v1368 = vsub.s32 0, %v1366
        %v1369 = vsel %vm1367, %v1368, %v1366
        %v1370 = vclz %v1369
        %v1371 = vsub.s32 %v1370, 2
        %vm1372 = vcmp.gt.s32.totalorder 0, %v1371
        %v1373 = vsel %vm1372, 0, %v1371
        %v1374 = vsub.s32 32, %v1373
        %v1375 = vshll.u32 %v1366, %v1373
        %v1376 = vshrl.u32 %v1358, %v1374
        %v1377 = vor.u32 %v1375, %v1376
        %v1378 = vsub.s32 4294967266, %v1373
        %v1379 = vadd.s32 %v1378, 127
        %v1380 = vshll.u32 %v1379, 23
        %v1381 = vor.u32 4788187, %v1380
        %v1382 = vand.u32 2147483647, %v1381
        %v1384 = vcvt.s32.f32 %v1377
        %v1385 = vmul.f32 %v1384, %v1382
        %v1386 = vxor.u32 %v1385, 2147483648
        %v1387 = vsel %vm1304, %v1386, %v1385
        %v1388 = vsub.s32 4, %v1364
        %v1389 = vsel %vm1304, %v1388, %v1364
        %v1390 = vsel %vm1303, %v565, %v1387
        %v1391 = vsel %vm1303, 0, %v1389
        %v1392 = vcosq.f32.pop %v1390
        %v1393 = vsinq.f32.pop %v1390
        %vm1394 = vweird.f32 %v565
        %v1395 = vadd.s32 %v1391, 3
        %v1396 = vand.u32 %v1395, 3
        %vm1397 = vcmp.lt.s32.totalorder %v1396, 2
        %vm1398 = vcmp.eq.s32.totalorder %v1396, 0
        %v1399 = vxor.u32 %v1393, 2147483648
        %v1400 = vsel %vm1398, %v1392, %v1399
        %vm1401 = vcmp.eq.s32.totalorder %v1396, 2
        %v1402 = vxor.u32 %v1392, 2147483648
        %v1403 = vsel %vm1401, %v1402, %v1393
        %v1404 = vsel %vm1397, %v1400, %v1403
        %v1405 = vsel %vm1394, nan, %v1404
        %v1406 = vand.u32 2147483647, %v566
        %vm1407 = vcmp.le.f32.partialorder %v1406, 0.7853982
        %vm1408 = vcmp.lt.s32.totalorder %v566, 0
        %v1409 = vand.u32 %v566, 2139095040
        %v1410 = vshrl.u32 %v1409, 23
        %v1411 = vsub.s32 %v1410, 127
        %v1412 = vand.u32 2147483647, %v566
        %v1413 = vand.u32 %v1412, 8388607
        %v1414 = vor.u32 %v1413, 8388608
        %v1415 = vsub.s32 0, %v1414
        %v1416 = vadd.s32 %v1411, 1
        %vm1417 = vcmp.gt.s32.totalorder %v1416, 0
        %v1418 = vsel %vm1417, %v1416, 0
        %v1419 = vshrl.u32 %v1418, 5
        %v1420 = vand.u32 %v1418, 31
        %v1421 = vsub.s32 32, %v1420
        %v1422 = vshrl.u32 683565275, %v1421
        %v1423 = vshll.u32 683565275, %v1420
        %v1424 = vshrl.u32 2475754826, %v1421
        %v1425 = vor.u32 %v1423, %v1424
        %v1426 = vshll.u32 2475754826, %v1420
        %v1427 = vshrl.u32 2131351028, %v1421
        %v1428 = vor.u32 %v1426, %v1427
        %v1429 = vshll.u32 2131351028, %v1420
        %v1430 = vshrl.u32 2102212464, %v1421
        %v1431 = vor.u32 %v1429, %v1430
        %v1432 = vshll.u32 2102212464, %v1420
        %v1433 = vshrl.u32 920167782, %v1421
        %v1434 = vor.u32 %v1432, %v1433
        %v1435 = vshll.u32 920167782, %v1420
        %v1436 = vshrl.u32 1326507024, %v1421
        %v1437 = vor.u32 %v1435, %v1436
        %vm1438 = vcmp.lt.s32.totalorder %v1419, 1
        %vm1439 = vcmp.lt.s32.totalorder %v1419, 2
        %vm1440 = vcmp.lt.s32.totalorder %v1419, 3
        %vm1441 = vcmp.lt.s32.totalorder %v1419, 4
        %v1442 = vsel %vm1438, %v1422, %v1425
        %v1443 = vsel %vm1441, %v1431, 2102212464
        %v1444 = vsel %vm1440, %v1428, %v1443
        %v1445 = vsel %vm1439, %v1442, %v1444
        %v1446 = vsel %vm1438, %v1425, %v1428
        %v1447 = vsel %vm1441, %v1434, 920167782
        %v1448 = vsel %vm1440, %v1431, %v1447
        %v1449 = vsel %vm1439, %v1446, %v1448
        %v1450 = vsel %vm1438, %v1428, %v1431
        %v1451 = vsel %vm1441, %v1437, 1326507024
        %v1452 = vsel %vm1440, %v1434, %v1451
        %v1453 = vsel %vm1439, %v1450, %v1452
        %v1454 = vshll.u32 %v1414, 8
        %v1455 = vmul.u32.u64.compose %v1454, %v1453
        %v1456 = vextract.low.u32 %v1455
        %v1457 = vextract.high.u32 %v1455
        %v1458 = vmul.u32.u64.compose %v1454, %v1449
        %v1459 = vextract.low.u32 %v1458
        %v1460 = vextract.high.u32 %v1458
        %v1461 = vmul.u32 %v1454, %v1445
        %v1462 = vadd.s32 %v1457, %v1459
        %vm1463 = vc.u32 %v1457, %v1459
        %v1464 = vadd.s32 %v1460, 1
        %v1465 = vsel %vm1463, %v1464, %v1460
        %v1466 = vadd.s32 %v1461, %v1465
        %v1467 = vadd.s32 %v1466, 536870912
        %v1468 = vshrl.u32 %v1467, 30
        %v1469 = vshll.u32 %v1468, 30
        %v1470 = vsub.s32 %v1466, %v1469
        %vm1471 = vcmp.lt.s32.totalorder %v1470, 0
        %v1472 = vsub.s32 0, %v1470
        %v1473 = vsel %vm1471, %v1472, %v1470
        %v1474 = vclz %v1473
        %v1475 = vsub.s32 %v1474, 2
        %vm1476 = vcmp.gt.s32.totalorder 0, %v1475
        %v1477 = vsel %vm1476, 0, %v1475
        %v1478 = vsub.s32 32, %v1477
        %v1479 = vshll.u32 %v1470, %v1477
        %v1480 = vshrl.u32 %v1462, %v1478
        %v1481 = vor.u32 %v1479, %v1480
        %v1482 = vsub.s32 4294967266, %v1477
        %v1483 = vadd.s32 %v1482, 127
        %v1484 = vshll.u32 %v1483, 23
        %v1485 = vor.u32 4788187, %v1484
        %v1486 = vand.u32 2147483647, %v1485
        %v1488 = vcvt.s32.f32 %v1481
        %v1489 = vmul.f32 %v1488, %v1486
        %v1490 = vxor.u32 %v1489, 2147483648
        %v1491 = vsel %vm1408, %v1490, %v1489
        %v1492 = vsub.s32 4, %v1468
        %v1493 = vsel %vm1408, %v1492, %v1468
        %v1494 = vsel %vm1407, %v566, %v1491
        %v1495 = vsel %vm1407, 0, %v1493
        %v1496 = vcosq.f32.pop %v1494
        %v1497 = vsinq.f32.pop %v1494
        %vm1498 = vweird.f32 %v566
        %v1499 = vadd.s32 %v1495, 3
        %v1500 = vand.u32 %v1499, 3
        %vm1501 = vcmp.lt.s32.totalorder %v1500, 2
        %vm1502 = vcmp.eq.s32.totalorder %v1500, 0
        %v1503 = vxor.u32 %v1497, 2147483648
        %v1504 = vsel %vm1502, %v1496, %v1503
        %vm1505 = vcmp.eq.s32.totalorder %v1500, 2
        %v1506 = vxor.u32 %v1496, 2147483648
        %v1507 = vsel %vm1505, %v1506, %v1497
        %v1508 = vsel %vm1501, %v1504, %v1507
        %v1509 = vsel %vm1498, nan, %v1508
        %v1510 = vand.u32 2147483647, %v567
        %vm1511 = vcmp.le.f32.partialorder %v1510, 0.7853982
        %vm1512 = vcmp.lt.s32.totalorder %v567, 0
        %v1513 = vand.u32 %v567, 2139095040
        %v1514 = vshrl.u32 %v1513, 23
        %v1515 = vsub.s32 %v1514, 127
        %v1516 = vand.u32 2147483647, %v567
        %v1517 = vand.u32 %v1516, 8388607
        %v1518 = vor.u32 %v1517, 8388608
        %v1519 = vsub.s32 0, %v1518
        %v1520 = vadd.s32 %v1515, 1
        %vm1521 = vcmp.gt.s32.totalorder %v1520, 0
        %v1522 = vsel %vm1521, %v1520, 0
        %v1523 = vshrl.u32 %v1522, 5
        %v1524 = vand.u32 %v1522, 31
        %v1525 = vsub.s32 32, %v1524
        %v1526 = vshrl.u32 683565275, %v1525
        %v1527 = vshll.u32 683565275, %v1524
        %v1528 = vshrl.u32 2475754826, %v1525
        %v1529 = vor.u32 %v1527, %v1528
        %v1530 = vshll.u32 2475754826, %v1524
        %v1531 = vshrl.u32 2131351028, %v1525
        %v1532 = vor.u32 %v1530, %v1531
        %v1533 = vshll.u32 2131351028, %v1524
        %v1534 = vshrl.u32 2102212464, %v1525
        %v1535 = vor.u32 %v1533, %v1534
        %v1536 = vshll.u32 2102212464, %v1524
        %v1537 = vshrl.u32 920167782, %v1525
        %v1538 = vor.u32 %v1536, %v1537
        %v1539 = vshll.u32 920167782, %v1524
        %v1540 = vshrl.u32 1326507024, %v1525
        %v1541 = vor.u32 %v1539, %v1540
        %vm1542 = vcmp.lt.s32.totalorder %v1523, 1
        %vm1543 = vcmp.lt.s32.totalorder %v1523, 2
        %vm1544 = vcmp.lt.s32.totalorder %v1523, 3
        %vm1545 = vcmp.lt.s32.totalorder %v1523, 4
        %v1546 = vsel %vm1542, %v1526, %v1529
        %v1547 = vsel %vm1545, %v1535, 2102212464
        %v1548 = vsel %vm1544, %v1532, %v1547
        %v1549 = vsel %vm1543, %v1546, %v1548
        %v1550 = vsel %vm1542, %v1529, %v1532
        %v1551 = vsel %vm1545, %v1538, 920167782
        %v1552 = vsel %vm1544, %v1535, %v1551
        %v1553 = vsel %vm1543, %v1550, %v1552
        %v1554 = vsel %vm1542, %v1532, %v1535
        %v1555 = vsel %vm1545, %v1541, 1326507024
        %v1556 = vsel %vm1544, %v1538, %v1555
        %v1557 = vsel %vm1543, %v1554, %v1556
        %v1558 = vshll.u32 %v1518, 8
        %v1559 = vmul.u32.u64.compose %v1558, %v1557
        %v1560 = vextract.low.u32 %v1559
        %v1561 = vextract.high.u32 %v1559
        %v1562 = vmul.u32.u64.compose %v1558, %v1553
        %v1563 = vextract.low.u32 %v1562
        %v1564 = vextract.high.u32 %v1562
        %v1565 = vmul.u32 %v1558, %v1549
        %v1566 = vadd.s32 %v1561, %v1563
        %vm1567 = vc.u32 %v1561, %v1563
        %v1568 = vadd.s32 %v1564, 1
        %v1569 = vsel %vm1567, %v1568, %v1564
        %v1570 = vadd.s32 %v1565, %v1569
        %v1571 = vadd.s32 %v1570, 536870912
        %v1572 = vshrl.u32 %v1571, 30
        %v1573 = vshll.u32 %v1572, 30
        %v1574 = vsub.s32 %v1570, %v1573
        %vm1575 = vcmp.lt.s32.totalorder %v1574, 0
        %v1576 = vsub.s32 0, %v1574
        %v1577 = vsel %vm1575, %v1576, %v1574
        %v1578 = vclz %v1577
        %v1579 = vsub.s32 %v1578, 2
        %vm1580 = vcmp.gt.s32.totalorder 0, %v1579
        %v1581 = vsel %vm1580, 0, %v1579
        %v1582 = vsub.s32 32, %v1581
        %v1583 = vshll.u32 %v1574, %v1581
        %v1584 = vshrl.u32 %v1566, %v1582
        %v1585 = vor.u32 %v1583, %v1584
        %v1586 = vsub.s32 4294967266, %v1581
        %v1587 = vadd.s32 %v1586, 127
        %v1588 = vshll.u32 %v1587, 23
        %v1589 = vor.u32 4788187, %v1588
        %v1590 = vand.u32 2147483647, %v1589
        %v1592 = vcvt.s32.f32 %v1585
        %v1593 = vmul.f32 %v1592, %v1590
        %v1594 = vxor.u32 %v1593, 2147483648
        %v1595 = vsel %vm1512, %v1594, %v1593
        %v1596 = vsub.s32 4, %v1572
        %v1597 = vsel %vm1512, %v1596, %v1572
        %v1598 = vsel %vm1511, %v567, %v1595
        %v1599 = vsel %vm1511, 0, %v1597
        %v1600 = vcosq.f32.pop %v1598
        %v1601 = vsinq.f32.pop %v1598
        %vm1602 = vweird.f32 %v567
        %v1603 = vadd.s32 %v1599, 3
        %v1604 = vand.u32 %v1603, 3
        %vm1605 = vcmp.lt.s32.totalorder %v1604, 2
        %vm1606 = vcmp.eq.s32.totalorder %v1604, 0
        %v1607 = vxor.u32 %v1601, 2147483648
        %v1608 = vsel %vm1606, %v1600, %v1607
        %vm1609 = vcmp.eq.s32.totalorder %v1604, 2
        %v1610 = vxor.u32 %v1600, 2147483648
        %v1611 = vsel %vm1609, %v1610, %v1601
        %v1612 = vsel %vm1605, %v1608, %v1611
        %v1613 = vsel %vm1602, nan, %v1612
        %v1614 = vand.u32 2147483647, %v568
        %vm1615 = vcmp.le.f32.partialorder %v1614, 0.7853982
        %vm1616 = vcmp.lt.s32.totalorder %v568, 0
        %v1617 = vand.u32 %v568, 2139095040
        %v1618 = vshrl.u32 %v1617, 23
        %v1619 = vsub.s32 %v1618, 127
        %v1620 = vand.u32 2147483647, %v568
        %v1621 = vand.u32 %v1620, 8388607
        %v1622 = vor.u32 %v1621, 8388608
        %v1623 = vsub.s32 0, %v1622
        %v1624 = vadd.s32 %v1619, 1
        %vm1625 = vcmp.gt.s32.totalorder %v1624, 0
        %v1626 = vsel %vm1625, %v1624, 0
        %v1627 = vshrl.u32 %v1626, 5
        %v1628 = vand.u32 %v1626, 31
        %v1629 = vsub.s32 32, %v1628
        %v1630 = vshrl.u32 683565275, %v1629
        %v1631 = vshll.u32 683565275, %v1628
        %v1632 = vshrl.u32 2475754826, %v1629
        %v1633 = vor.u32 %v1631, %v1632
        %v1634 = vshll.u32 2475754826, %v1628
        %v1635 = vshrl.u32 2131351028, %v1629
        %v1636 = vor.u32 %v1634, %v1635
        %v1637 = vshll.u32 2131351028, %v1628
        %v1638 = vshrl.u32 2102212464, %v1629
        %v1639 = vor.u32 %v1637, %v1638
        %v1640 = vshll.u32 2102212464, %v1628
        %v1641 = vshrl.u32 920167782, %v1629
        %v1642 = vor.u32 %v1640, %v1641
        %v1643 = vshll.u32 920167782, %v1628
        %v1644 = vshrl.u32 1326507024, %v1629
        %v1645 = vor.u32 %v1643, %v1644
        %vm1646 = vcmp.lt.s32.totalorder %v1627, 1
        %vm1647 = vcmp.lt.s32.totalorder %v1627, 2
        %vm1648 = vcmp.lt.s32.totalorder %v1627, 3
        %vm1649 = vcmp.lt.s32.totalorder %v1627, 4
        %v1650 = vsel %vm1646, %v1630, %v1633
        %v1651 = vsel %vm1649, %v1639, 2102212464
        %v1652 = vsel %vm1648, %v1636, %v1651
        %v1653 = vsel %vm1647, %v1650, %v1652
        %v1654 = vsel %vm1646, %v1633, %v1636
        %v1655 = vsel %vm1649, %v1642, 920167782
        %v1656 = vsel %vm1648, %v1639, %v1655
        %v1657 = vsel %vm1647, %v1654, %v1656
        %v1658 = vsel %vm1646, %v1636, %v1639
        %v1659 = vsel %vm1649, %v1645, 1326507024
        %v1660 = vsel %vm1648, %v1642, %v1659
        %v1661 = vsel %vm1647, %v1658, %v1660
        %v1662 = vshll.u32 %v1622, 8
        %v1663 = vmul.u32.u64.compose %v1662, %v1661
        %v1664 = vextract.low.u32 %v1663
        %v1665 = vextract.high.u32 %v1663
        %v1666 = vmul.u32.u64.compose %v1662, %v1657
        %v1667 = vextract.low.u32 %v1666
        %v1668 = vextract.high.u32 %v1666
        %v1669 = vmul.u32 %v1662, %v1653
        %v1670 = vadd.s32 %v1665, %v1667
        %vm1671 = vc.u32 %v1665, %v1667
        %v1672 = vadd.s32 %v1668, 1
        %v1673 = vsel %vm1671, %v1672, %v1668
        %v1674 = vadd.s32 %v1669, %v1673
        %v1675 = vadd.s32 %v1674, 536870912
        %v1676 = vshrl.u32 %v1675, 30
        %v1677 = vshll.u32 %v1676, 30
        %v1678 = vsub.s32 %v1674, %v1677
        %vm1679 = vcmp.lt.s32.totalorder %v1678, 0
        %v1680 = vsub.s32 0, %v1678
        %v1681 = vsel %vm1679, %v1680, %v1678
        %v1682 = vclz %v1681
        %v1683 = vsub.s32 %v1682, 2
        %vm1684 = vcmp.gt.s32.totalorder 0, %v1683
        %v1685 = vsel %vm1684, 0, %v1683
        %v1686 = vsub.s32 32, %v1685
        %v1687 = vshll.u32 %v1678, %v1685
        %v1688 = vshrl.u32 %v1670, %v1686
        %v1689 = vor.u32 %v1687, %v1688
        %v1690 = vsub.s32 4294967266, %v1685
        %v1691 = vadd.s32 %v1690, 127
        %v1692 = vshll.u32 %v1691, 23
        %v1693 = vor.u32 4788187, %v1692
        %v1694 = vand.u32 2147483647, %v1693
        %v1696 = vcvt.s32.f32 %v1689
        %v1697 = vmul.f32 %v1696, %v1694
        %v1698 = vxor.u32 %v1697, 2147483648
        %v1699 = vsel %vm1616, %v1698, %v1697
        %v1700 = vsub.s32 4, %v1676
        %v1701 = vsel %vm1616, %v1700, %v1676
        %v1702 = vsel %vm1615, %v568, %v1699
        %v1703 = vsel %vm1615, 0, %v1701
        %v1704 = vcosq.f32.pop %v1702
        %v1705 = vsinq.f32.pop %v1702
        %vm1706 = vweird.f32 %v568
        %v1707 = vadd.s32 %v1703, 3
        %v1708 = vand.u32 %v1707, 3
        %vm1709 = vcmp.lt.s32.totalorder %v1708, 2
        %vm1710 = vcmp.eq.s32.totalorder %v1708, 0
        %v1711 = vxor.u32 %v1705, 2147483648
        %v1712 = vsel %vm1710, %v1704, %v1711
        %vm1713 = vcmp.eq.s32.totalorder %v1708, 2
        %v1714 = vxor.u32 %v1704, 2147483648
        %v1715 = vsel %vm1713, %v1714, %v1705
        %v1716 = vsel %vm1709, %v1712, %v1715
        %v1717 = vsel %vm1706, nan, %v1716
        %v1718 = vand.u32 2147483647, %v569
        %vm1719 = vcmp.le.f32.partialorder %v1718, 0.7853982
        %vm1720 = vcmp.lt.s32.totalorder %v569, 0
        %v1721 = vand.u32 %v569, 2139095040
        %v1722 = vshrl.u32 %v1721, 23
        %v1723 = vsub.s32 %v1722, 127
        %v1724 = vand.u32 2147483647, %v569
        %v1725 = vand.u32 %v1724, 8388607
        %v1726 = vor.u32 %v1725, 8388608
        %v1727 = vsub.s32 0, %v1726
        %v1728 = vadd.s32 %v1723, 1
        %vm1729 = vcmp.gt.s32.totalorder %v1728, 0
        %v1730 = vsel %vm1729, %v1728, 0
        %v1731 = vshrl.u32 %v1730, 5
        %v1732 = vand.u32 %v1730, 31
        %v1733 = vsub.s32 32, %v1732
        %v1734 = vshrl.u32 683565275, %v1733
        %v1735 = vshll.u32 683565275, %v1732
        %v1736 = vshrl.u32 2475754826, %v1733
        %v1737 = vor.u32 %v1735, %v1736
        %v1738 = vshll.u32 2475754826, %v1732
        %v1739 = vshrl.u32 2131351028, %v1733
        %v1740 = vor.u32 %v1738, %v1739
        %v1741 = vshll.u32 2131351028, %v1732
        %v1742 = vshrl.u32 2102212464, %v1733
        %v1743 = vor.u32 %v1741, %v1742
        %v1744 = vshll.u32 2102212464, %v1732
        %v1745 = vshrl.u32 920167782, %v1733
        %v1746 = vor.u32 %v1744, %v1745
        %v1747 = vshll.u32 920167782, %v1732
        %v1748 = vshrl.u32 1326507024, %v1733
        %v1749 = vor.u32 %v1747, %v1748
        %vm1750 = vcmp.lt.s32.totalorder %v1731, 1
        %vm1751 = vcmp.lt.s32.totalorder %v1731, 2
        %vm1752 = vcmp.lt.s32.totalorder %v1731, 3
        %vm1753 = vcmp.lt.s32.totalorder %v1731, 4
        %v1754 = vsel %vm1750, %v1734, %v1737
        %v1755 = vsel %vm1753, %v1743, 2102212464
        %v1756 = vsel %vm1752, %v1740, %v1755
        %v1757 = vsel %vm1751, %v1754, %v1756
        %v1758 = vsel %vm1750, %v1737, %v1740
        %v1759 = vsel %vm1753, %v1746, 920167782
        %v1760 = vsel %vm1752, %v1743, %v1759
        %v1761 = vsel %vm1751, %v1758, %v1760
        %v1762 = vsel %vm1750, %v1740, %v1743
        %v1763 = vsel %vm1753, %v1749, 1326507024
        %v1764 = vsel %vm1752, %v1746, %v1763
        %v1765 = vsel %vm1751, %v1762, %v1764
        %v1766 = vshll.u32 %v1726, 8
        %v1767 = vmul.u32.u64.compose %v1766, %v1765
        %v1768 = vextract.low.u32 %v1767
        %v1769 = vextract.high.u32 %v1767
        %v1770 = vmul.u32.u64.compose %v1766, %v1761
        %v1771 = vextract.low.u32 %v1770
        %v1772 = vextract.high.u32 %v1770
        %v1773 = vmul.u32 %v1766, %v1757
        %v1774 = vadd.s32 %v1769, %v1771
        %vm1775 = vc.u32 %v1769, %v1771
        %v1776 = vadd.s32 %v1772, 1
        %v1777 = vsel %vm1775, %v1776, %v1772
        %v1778 = vadd.s32 %v1773, %v1777
        %v1779 = vadd.s32 %v1778, 536870912
        %v1780 = vshrl.u32 %v1779, 30
        %v1781 = vshll.u32 %v1780, 30
        %v1782 = vsub.s32 %v1778, %v1781
        %vm1783 = vcmp.lt.s32.totalorder %v1782, 0
        %v1784 = vsub.s32 0, %v1782
        %v1785 = vsel %vm1783, %v1784, %v1782
        %v1786 = vclz %v1785
        %v1787 = vsub.s32 %v1786, 2
        %vm1788 = vcmp.gt.s32.totalorder 0, %v1787
        %v1789 = vsel %vm1788, 0, %v1787
        %v1790 = vsub.s32 32, %v1789
        %v1791 = vshll.u32 %v1782, %v1789
        %v1792 = vshrl.u32 %v1774, %v1790
        %v1793 = vor.u32 %v1791, %v1792
        %v1794 = vsub.s32 4294967266, %v1789
        %v1795 = vadd.s32 %v1794, 127
        %v1796 = vshll.u32 %v1795, 23
        %v1797 = vor.u32 4788187, %v1796
        %v1798 = vand.u32 2147483647, %v1797
        %v1800 = vcvt.s32.f32 %v1793
        %v1801 = vmul.f32 %v1800, %v1798
        %v1802 = vxor.u32 %v1801, 2147483648
        %v1803 = vsel %vm1720, %v1802, %v1801
        %v1804 = vsub.s32 4, %v1780
        %v1805 = vsel %vm1720, %v1804, %v1780
        %v1806 = vsel %vm1719, %v569, %v1803
        %v1807 = vsel %vm1719, 0, %v1805
        %v1808 = vcosq.f32.pop %v1806
        %v1809 = vsinq.f32.pop %v1806
        %vm1810 = vweird.f32 %v569
        %v1811 = vadd.s32 %v1807, 3
        %v1812 = vand.u32 %v1811, 3
        %vm1813 = vcmp.lt.s32.totalorder %v1812, 2
        %vm1814 = vcmp.eq.s32.totalorder %v1812, 0
        %v1815 = vxor.u32 %v1809, 2147483648
        %v1816 = vsel %vm1814, %v1808, %v1815
        %vm1817 = vcmp.eq.s32.totalorder %v1812, 2
        %v1818 = vxor.u32 %v1808, 2147483648
        %v1819 = vsel %vm1817, %v1818, %v1809
        %v1820 = vsel %vm1813, %v1816, %v1819
        %v1821 = vsel %vm1810, nan, %v1820
        %v1822 = vand.u32 2147483647, %v570
        %vm1823 = vcmp.le.f32.partialorder %v1822, 0.7853982
        %vm1824 = vcmp.lt.s32.totalorder %v570, 0
        %v1825 = vand.u32 %v570, 2139095040
        %v1826 = vshrl.u32 %v1825, 23
        %v1827 = vsub.s32 %v1826, 127
        %v1828 = vand.u32 2147483647, %v570
        %v1829 = vand.u32 %v1828, 8388607
        %v1830 = vor.u32 %v1829, 8388608
        %v1831 = vsub.s32 0, %v1830
        %v1832 = vadd.s32 %v1827, 1
        %vm1833 = vcmp.gt.s32.totalorder %v1832, 0
        %v1834 = vsel %vm1833, %v1832, 0
        %v1835 = vshrl.u32 %v1834, 5
        %v1836 = vand.u32 %v1834, 31
        %v1837 = vsub.s32 32, %v1836
        %v1838 = vshrl.u32 683565275, %v1837
        %v1839 = vshll.u32 683565275, %v1836
        %v1840 = vshrl.u32 2475754826, %v1837
        %v1841 = vor.u32 %v1839, %v1840
        %v1842 = vshll.u32 2475754826, %v1836
        %v1843 = vshrl.u32 2131351028, %v1837
        %v1844 = vor.u32 %v1842, %v1843
        %v1845 = vshll.u32 2131351028, %v1836
        %v1846 = vshrl.u32 2102212464, %v1837
        %v1847 = vor.u32 %v1845, %v1846
        %v1848 = vshll.u32 2102212464, %v1836
        %v1849 = vshrl.u32 920167782, %v1837
        %v1850 = vor.u32 %v1848, %v1849
        %v1851 = vshll.u32 920167782, %v1836
        %v1852 = vshrl.u32 1326507024, %v1837
        %v1853 = vor.u32 %v1851, %v1852
        %vm1854 = vcmp.lt.s32.totalorder %v1835, 1
        %vm1855 = vcmp.lt.s32.totalorder %v1835, 2
        %vm1856 = vcmp.lt.s32.totalorder %v1835, 3
        %vm1857 = vcmp.lt.s32.totalorder %v1835, 4
        %v1858 = vsel %vm1854, %v1838, %v1841
        %v1859 = vsel %vm1857, %v1847, 2102212464
        %v1860 = vsel %vm1856, %v1844, %v1859
        %v1861 = vsel %vm1855, %v1858, %v1860
        %v1862 = vsel %vm1854, %v1841, %v1844
        %v1863 = vsel %vm1857, %v1850, 920167782
        %v1864 = vsel %vm1856, %v1847, %v1863
        %v1865 = vsel %vm1855, %v1862, %v1864
        %v1866 = vsel %vm1854, %v1844, %v1847
        %v1867 = vsel %vm1857, %v1853, 1326507024
        %v1868 = vsel %vm1856, %v1850, %v1867
        %v1869 = vsel %vm1855, %v1866, %v1868
        %v1870 = vshll.u32 %v1830, 8
        %v1871 = vmul.u32.u64.compose %v1870, %v1869
        %v1872 = vextract.low.u32 %v1871
        %v1873 = vextract.high.u32 %v1871
        %v1874 = vmul.u32.u64.compose %v1870, %v1865
        %v1875 = vextract.low.u32 %v1874
        %v1876 = vextract.high.u32 %v1874
        %v1877 = vmul.u32 %v1870, %v1861
        %v1878 = vadd.s32 %v1873, %v1875
        %vm1879 = vc.u32 %v1873, %v1875
        %v1880 = vadd.s32 %v1876, 1
        %v1881 = vsel %vm1879, %v1880, %v1876
        %v1882 = vadd.s32 %v1877, %v1881
        %v1883 = vadd.s32 %v1882, 536870912
        %v1884 = vshrl.u32 %v1883, 30
        %v1885 = vshll.u32 %v1884, 30
        %v1886 = vsub.s32 %v1882, %v1885
        %vm1887 = vcmp.lt.s32.totalorder %v1886, 0
        %v1888 = vsub.s32 0, %v1886
        %v1889 = vsel %vm1887, %v1888, %v1886
        %v1890 = vclz %v1889
        %v1891 = vsub.s32 %v1890, 2
        %vm1892 = vcmp.gt.s32.totalorder 0, %v1891
        %v1893 = vsel %vm1892, 0, %v1891
        %v1894 = vsub.s32 32, %v1893
        %v1895 = vshll.u32 %v1886, %v1893
        %v1896 = vshrl.u32 %v1878, %v1894
        %v1897 = vor.u32 %v1895, %v1896
        %v1898 = vsub.s32 4294967266, %v1893
        %v1899 = vadd.s32 %v1898, 127
        %v1900 = vshll.u32 %v1899, 23
        %v1901 = vor.u32 4788187, %v1900
        %v1902 = vand.u32 2147483647, %v1901
        %v1904 = vcvt.s32.f32 %v1897
        %v1905 = vmul.f32 %v1904, %v1902
        %v1906 = vxor.u32 %v1905, 2147483648
        %v1907 = vsel %vm1824, %v1906, %v1905
        %v1908 = vsub.s32 4, %v1884
        %v1909 = vsel %vm1824, %v1908, %v1884
        %v1910 = vsel %vm1823, %v570, %v1907
        %v1911 = vsel %vm1823, 0, %v1909
        %v1912 = vcosq.f32.pop %v1910
        %v1913 = vsinq.f32.pop %v1910
        %vm1914 = vweird.f32 %v570
        %v1915 = vadd.s32 %v1911, 3
        %v1916 = vand.u32 %v1915, 3
        %vm1917 = vcmp.lt.s32.totalorder %v1916, 2
        %vm1918 = vcmp.eq.s32.totalorder %v1916, 0
        %v1919 = vxor.u32 %v1913, 2147483648
        %v1920 = vsel %vm1918, %v1912, %v1919
        %vm1921 = vcmp.eq.s32.totalorder %v1916, 2
        %v1922 = vxor.u32 %v1912, 2147483648
        %v1923 = vsel %vm1921, %v1922, %v1913
        %v1924 = vsel %vm1917, %v1920, %v1923
        %v1925 = vsel %vm1914, nan, %v1924
        %v1926 = vand.u32 2147483647, %v571
        %vm1927 = vcmp.le.f32.partialorder %v1926, 0.7853982
        %vm1928 = vcmp.lt.s32.totalorder %v571, 0
        %v1929 = vand.u32 %v571, 2139095040
        %v1930 = vshrl.u32 %v1929, 23
        %v1931 = vsub.s32 %v1930, 127
        %v1932 = vand.u32 2147483647, %v571
        %v1933 = vand.u32 %v1932, 8388607
        %v1934 = vor.u32 %v1933, 8388608
        %v1935 = vsub.s32 0, %v1934
        %v1936 = vadd.s32 %v1931, 1
        %vm1937 = vcmp.gt.s32.totalorder %v1936, 0
        %v1938 = vsel %vm1937, %v1936, 0
        %v1939 = vshrl.u32 %v1938, 5
        %v1940 = vand.u32 %v1938, 31
        %v1941 = vsub.s32 32, %v1940
        %v1942 = vshrl.u32 683565275, %v1941
        %v1943 = vshll.u32 683565275, %v1940
        %v1944 = vshrl.u32 2475754826, %v1941
        %v1945 = vor.u32 %v1943, %v1944
        %v1946 = vshll.u32 2475754826, %v1940
        %v1947 = vshrl.u32 2131351028, %v1941
        %v1948 = vor.u32 %v1946, %v1947
        %v1949 = vshll.u32 2131351028, %v1940
        %v1950 = vshrl.u32 2102212464, %v1941
        %v1951 = vor.u32 %v1949, %v1950
        %v1952 = vshll.u32 2102212464, %v1940
        %v1953 = vshrl.u32 920167782, %v1941
        %v1954 = vor.u32 %v1952, %v1953
        %v1955 = vshll.u32 920167782, %v1940
        %v1956 = vshrl.u32 1326507024, %v1941
        %v1957 = vor.u32 %v1955, %v1956
        %vm1958 = vcmp.lt.s32.totalorder %v1939, 1
        %vm1959 = vcmp.lt.s32.totalorder %v1939, 2
        %vm1960 = vcmp.lt.s32.totalorder %v1939, 3
        %vm1961 = vcmp.lt.s32.totalorder %v1939, 4
        %v1962 = vsel %vm1958, %v1942, %v1945
        %v1963 = vsel %vm1961, %v1951, 2102212464
        %v1964 = vsel %vm1960, %v1948, %v1963
        %v1965 = vsel %vm1959, %v1962, %v1964
        %v1966 = vsel %vm1958, %v1945, %v1948
        %v1967 = vsel %vm1961, %v1954, 920167782
        %v1968 = vsel %vm1960, %v1951, %v1967
        %v1969 = vsel %vm1959, %v1966, %v1968
        %v1970 = vsel %vm1958, %v1948, %v1951
        %v1971 = vsel %vm1961, %v1957, 1326507024
        %v1972 = vsel %vm1960, %v1954, %v1971
        %v1973 = vsel %vm1959, %v1970, %v1972
        %v1974 = vshll.u32 %v1934, 8
        %v1975 = vmul.u32.u64.compose %v1974, %v1973
        %v1976 = vextract.low.u32 %v1975
        %v1977 = vextract.high.u32 %v1975
        %v1978 = vmul.u32.u64.compose %v1974, %v1969
        %v1979 = vextract.low.u32 %v1978
        %v1980 = vextract.high.u32 %v1978
        %v1981 = vmul.u32 %v1974, %v1965
        %v1982 = vadd.s32 %v1977, %v1979
        %vm1983 = vc.u32 %v1977, %v1979
        %v1984 = vadd.s32 %v1980, 1
        %v1985 = vsel %vm1983, %v1984, %v1980
        %v1986 = vadd.s32 %v1981, %v1985
        %v1987 = vadd.s32 %v1986, 536870912
        %v1988 = vshrl.u32 %v1987, 30
        %v1989 = vshll.u32 %v1988, 30
        %v1990 = vsub.s32 %v1986, %v1989
        %vm1991 = vcmp.lt.s32.totalorder %v1990, 0
        %v1992 = vsub.s32 0, %v1990
        %v1993 = vsel %vm1991, %v1992, %v1990
        %v1994 = vclz %v1993
        %v1995 = vsub.s32 %v1994, 2
        %vm1996 = vcmp.gt.s32.totalorder 0, %v1995
        %v1997 = vsel %vm1996, 0, %v1995
        %v1998 = vsub.s32 32, %v1997
        %v1999 = vshll.u32 %v1990, %v1997
        %v2000 = vshrl.u32 %v1982, %v1998
        %v2001 = vor.u32 %v1999, %v2000
        %v2002 = vsub.s32 4294967266, %v1997
        %v2003 = vadd.s32 %v2002, 127
        %v2004 = vshll.u32 %v2003, 23
        %v2005 = vor.u32 4788187, %v2004
        %v2006 = vand.u32 2147483647, %v2005
        %v2008 = vcvt.s32.f32 %v2001
        %v2009 = vmul.f32 %v2008, %v2006
        %v2010 = vxor.u32 %v2009, 2147483648
        %v2011 = vsel %vm1928, %v2010, %v2009
        %v2012 = vsub.s32 4, %v1988
        %v2013 = vsel %vm1928, %v2012, %v1988
        %v2014 = vsel %vm1927, %v571, %v2011
        %v2015 = vsel %vm1927, 0, %v2013
        %v2016 = vcosq.f32.pop %v2014
        %v2017 = vsinq.f32.pop %v2014
        %vm2018 = vweird.f32 %v571
        %v2019 = vadd.s32 %v2015, 3
        %v2020 = vand.u32 %v2019, 3
        %vm2021 = vcmp.lt.s32.totalorder %v2020, 2
        %vm2022 = vcmp.eq.s32.totalorder %v2020, 0
        %v2023 = vxor.u32 %v2017, 2147483648
        %v2024 = vsel %vm2022, %v2016, %v2023
        %vm2025 = vcmp.eq.s32.totalorder %v2020, 2
        %v2026 = vxor.u32 %v2016, 2147483648
        %v2027 = vsel %vm2025, %v2026, %v2017
        %v2028 = vsel %vm2021, %v2024, %v2027
        %v2029 = vsel %vm2018, nan, %v2028
        %v2030 = vand.u32 2147483647, %v572
        %vm2031 = vcmp.le.f32.partialorder %v2030, 0.7853982
        %vm2032 = vcmp.lt.s32.totalorder %v572, 0
        %v2033 = vand.u32 %v572, 2139095040
        %v2034 = vshrl.u32 %v2033, 23
        %v2035 = vsub.s32 %v2034, 127
        %v2036 = vand.u32 2147483647, %v572
        %v2037 = vand.u32 %v2036, 8388607
        %v2038 = vor.u32 %v2037, 8388608
        %v2039 = vsub.s32 0, %v2038
        %v2040 = vadd.s32 %v2035, 1
        %vm2041 = vcmp.gt.s32.totalorder %v2040, 0
        %v2042 = vsel %vm2041, %v2040, 0
        %v2043 = vshrl.u32 %v2042, 5
        %v2044 = vand.u32 %v2042, 31
        %v2045 = vsub.s32 32, %v2044
        %v2046 = vshrl.u32 683565275, %v2045
        %v2047 = vshll.u32 683565275, %v2044
        %v2048 = vshrl.u32 2475754826, %v2045
        %v2049 = vor.u32 %v2047, %v2048
        %v2050 = vshll.u32 2475754826, %v2044
        %v2051 = vshrl.u32 2131351028, %v2045
        %v2052 = vor.u32 %v2050, %v2051
        %v2053 = vshll.u32 2131351028, %v2044
        %v2054 = vshrl.u32 2102212464, %v2045
        %v2055 = vor.u32 %v2053, %v2054
        %v2056 = vshll.u32 2102212464, %v2044
        %v2057 = vshrl.u32 920167782, %v2045
        %v2058 = vor.u32 %v2056, %v2057
        %v2059 = vshll.u32 920167782, %v2044
        %v2060 = vshrl.u32 1326507024, %v2045
        %v2061 = vor.u32 %v2059, %v2060
        %vm2062 = vcmp.lt.s32.totalorder %v2043, 1
        %vm2063 = vcmp.lt.s32.totalorder %v2043, 2
        %vm2064 = vcmp.lt.s32.totalorder %v2043, 3
        %vm2065 = vcmp.lt.s32.totalorder %v2043, 4
        %v2066 = vsel %vm2062, %v2046, %v2049
        %v2067 = vsel %vm2065, %v2055, 2102212464
        %v2068 = vsel %vm2064, %v2052, %v2067
        %v2069 = vsel %vm2063, %v2066, %v2068
        %v2070 = vsel %vm2062, %v2049, %v2052
        %v2071 = vsel %vm2065, %v2058, 920167782
        %v2072 = vsel %vm2064, %v2055, %v2071
        %v2073 = vsel %vm2063, %v2070, %v2072
        %v2074 = vsel %vm2062, %v2052, %v2055
        %v2075 = vsel %vm2065, %v2061, 1326507024
        %v2076 = vsel %vm2064, %v2058, %v2075
        %v2077 = vsel %vm2063, %v2074, %v2076
        %v2078 = vshll.u32 %v2038, 8
        %v2079 = vmul.u32.u64.compose %v2078, %v2077
        %v2080 = vextract.low.u32 %v2079
        %v2081 = vextract.high.u32 %v2079
        %v2082 = vmul.u32.u64.compose %v2078, %v2073
        %v2083 = vextract.low.u32 %v2082
        %v2084 = vextract.high.u32 %v2082
        %v2085 = vmul.u32 %v2078, %v2069
        %v2086 = vadd.s32 %v2081, %v2083
        %vm2087 = vc.u32 %v2081, %v2083
        %v2088 = vadd.s32 %v2084, 1
        %v2089 = vsel %vm2087, %v2088, %v2084
        %v2090 = vadd.s32 %v2085, %v2089
        %v2091 = vadd.s32 %v2090, 536870912
        %v2092 = vshrl.u32 %v2091, 30
        %v2093 = vshll.u32 %v2092, 30
        %v2094 = vsub.s32 %v2090, %v2093
        %vm2095 = vcmp.lt.s32.totalorder %v2094, 0
        %v2096 = vsub.s32 0, %v2094
        %v2097 = vsel %vm2095, %v2096, %v2094
        %v2098 = vclz %v2097
        %v2099 = vsub.s32 %v2098, 2
        %vm2100 = vcmp.gt.s32.totalorder 0, %v2099
        %v2101 = vsel %vm2100, 0, %v2099
        %v2102 = vsub.s32 32, %v2101
        %v2103 = vshll.u32 %v2094, %v2101
        %v2104 = vshrl.u32 %v2086, %v2102
        %v2105 = vor.u32 %v2103, %v2104
        %v2106 = vsub.s32 4294967266, %v2101
        %v2107 = vadd.s32 %v2106, 127
        %v2108 = vshll.u32 %v2107, 23
        %v2109 = vor.u32 4788187, %v2108
        %v2110 = vand.u32 2147483647, %v2109
        %v2112 = vcvt.s32.f32 %v2105
        %v2113 = vmul.f32 %v2112, %v2110
        %v2114 = vxor.u32 %v2113, 2147483648
        %v2115 = vsel %vm2032, %v2114, %v2113
        %v2116 = vsub.s32 4, %v2092
        %v2117 = vsel %vm2032, %v2116, %v2092
        %v2118 = vsel %vm2031, %v572, %v2115
        %v2119 = vsel %vm2031, 0, %v2117
        %v2120 = vcosq.f32.pop %v2118
        %v2121 = vsinq.f32.pop %v2118
        %vm2122 = vweird.f32 %v572
        %v2123 = vadd.s32 %v2119, 3
        %v2124 = vand.u32 %v2123, 3
        %vm2125 = vcmp.lt.s32.totalorder %v2124, 2
        %vm2126 = vcmp.eq.s32.totalorder %v2124, 0
        %v2127 = vxor.u32 %v2121, 2147483648
        %v2128 = vsel %vm2126, %v2120, %v2127
        %vm2129 = vcmp.eq.s32.totalorder %v2124, 2
        %v2130 = vxor.u32 %v2120, 2147483648
        %v2131 = vsel %vm2129, %v2130, %v2121
        %v2132 = vsel %vm2125, %v2128, %v2131
        %v2133 = vsel %vm2122, nan, %v2132
        %v2134 = vand.u32 2147483647, %v573
        %vm2135 = vcmp.le.f32.partialorder %v2134, 0.7853982
        %vm2136 = vcmp.lt.s32.totalorder %v573, 0
        %v2137 = vand.u32 %v573, 2139095040
        %v2138 = vshrl.u32 %v2137, 23
        %v2139 = vsub.s32 %v2138, 127
        %v2140 = vand.u32 2147483647, %v573
        %v2141 = vand.u32 %v2140, 8388607
        %v2142 = vor.u32 %v2141, 8388608
        %v2143 = vsub.s32 0, %v2142
        %v2144 = vadd.s32 %v2139, 1
        %vm2145 = vcmp.gt.s32.totalorder %v2144, 0
        %v2146 = vsel %vm2145, %v2144, 0
        %v2147 = vshrl.u32 %v2146, 5
        %v2148 = vand.u32 %v2146, 31
        %v2149 = vsub.s32 32, %v2148
        %v2150 = vshrl.u32 683565275, %v2149
        %v2151 = vshll.u32 683565275, %v2148
        %v2152 = vshrl.u32 2475754826, %v2149
        %v2153 = vor.u32 %v2151, %v2152
        %v2154 = vshll.u32 2475754826, %v2148
        %v2155 = vshrl.u32 2131351028, %v2149
        %v2156 = vor.u32 %v2154, %v2155
        %v2157 = vshll.u32 2131351028, %v2148
        %v2158 = vshrl.u32 2102212464, %v2149
        %v2159 = vor.u32 %v2157, %v2158
        %v2160 = vshll.u32 2102212464, %v2148
        %v2161 = vshrl.u32 920167782, %v2149
        %v2162 = vor.u32 %v2160, %v2161
        %v2163 = vshll.u32 920167782, %v2148
        %v2164 = vshrl.u32 1326507024, %v2149
        %v2165 = vor.u32 %v2163, %v2164
        %vm2166 = vcmp.lt.s32.totalorder %v2147, 1
        %vm2167 = vcmp.lt.s32.totalorder %v2147, 2
        %vm2168 = vcmp.lt.s32.totalorder %v2147, 3
        %vm2169 = vcmp.lt.s32.totalorder %v2147, 4
        %v2170 = vsel %vm2166, %v2150, %v2153
        %v2171 = vsel %vm2169, %v2159, 2102212464
        %v2172 = vsel %vm2168, %v2156, %v2171
        %v2173 = vsel %vm2167, %v2170, %v2172
        %v2174 = vsel %vm2166, %v2153, %v2156
        %v2175 = vsel %vm2169, %v2162, 920167782
        %v2176 = vsel %vm2168, %v2159, %v2175
        %v2177 = vsel %vm2167, %v2174, %v2176
        %v2178 = vsel %vm2166, %v2156, %v2159
        %v2179 = vsel %vm2169, %v2165, 1326507024
        %v2180 = vsel %vm2168, %v2162, %v2179
        %v2181 = vsel %vm2167, %v2178, %v2180
        %v2182 = vshll.u32 %v2142, 8
        %v2183 = vmul.u32.u64.compose %v2182, %v2181
        %v2184 = vextract.low.u32 %v2183
        %v2185 = vextract.high.u32 %v2183
        %v2186 = vmul.u32.u64.compose %v2182, %v2177
        %v2187 = vextract.low.u32 %v2186
        %v2188 = vextract.high.u32 %v2186
        %v2189 = vmul.u32 %v2182, %v2173
        %v2190 = vadd.s32 %v2185, %v2187
        %vm2191 = vc.u32 %v2185, %v2187
        %v2192 = vadd.s32 %v2188, 1
        %v2193 = vsel %vm2191, %v2192, %v2188
        %v2194 = vadd.s32 %v2189, %v2193
        %v2195 = vadd.s32 %v2194, 536870912
        %v2196 = vshrl.u32 %v2195, 30
        %v2197 = vshll.u32 %v2196, 30
        %v2198 = vsub.s32 %v2194, %v2197
        %vm2199 = vcmp.lt.s32.totalorder %v2198, 0
        %v2200 = vsub.s32 0, %v2198
        %v2201 = vsel %vm2199, %v2200, %v2198
        %v2202 = vclz %v2201
        %v2203 = vsub.s32 %v2202, 2
        %vm2204 = vcmp.gt.s32.totalorder 0, %v2203
        %v2205 = vsel %vm2204, 0, %v2203
        %v2206 = vsub.s32 32, %v2205
        %v2207 = vshll.u32 %v2198, %v2205
        %v2208 = vshrl.u32 %v2190, %v2206
        %v2209 = vor.u32 %v2207, %v2208
        %v2210 = vsub.s32 4294967266, %v2205
        %v2211 = vadd.s32 %v2210, 127
        %v2212 = vshll.u32 %v2211, 23
        %v2213 = vor.u32 4788187, %v2212
        %v2214 = vand.u32 2147483647, %v2213
        %v2216 = vcvt.s32.f32 %v2209
        %v2217 = vmul.f32 %v2216, %v2214
        %v2218 = vxor.u32 %v2217, 2147483648
        %v2219 = vsel %vm2136, %v2218, %v2217
        %v2220 = vsub.s32 4, %v2196
        %v2221 = vsel %vm2136, %v2220, %v2196
        %v2222 = vsel %vm2135, %v573, %v2219
        %v2223 = vsel %vm2135, 0, %v2221
        %v2224 = vcosq.f32.pop %v2222
        %v2225 = vsinq.f32.pop %v2222
        %vm2226 = vweird.f32 %v573
        %v2227 = vadd.s32 %v2223, 3
        %v2228 = vand.u32 %v2227, 3
        %vm2229 = vcmp.lt.s32.totalorder %v2228, 2
        %vm2230 = vcmp.eq.s32.totalorder %v2228, 0
        %v2231 = vxor.u32 %v2225, 2147483648
        %v2232 = vsel %vm2230, %v2224, %v2231
        %vm2233 = vcmp.eq.s32.totalorder %v2228, 2
        %v2234 = vxor.u32 %v2224, 2147483648
        %v2235 = vsel %vm2233, %v2234, %v2225
        %v2236 = vsel %vm2229, %v2232, %v2235
        %v2237 = vsel %vm2226, nan, %v2236
        %v2238 = vld [vmem:[#allocation3] sm:$0xff]
        %v2239 = vld [vmem:[#allocation3 + $0x8] sm:$0xff]
        %v2240 = vld [vmem:[#allocation3 + $0x10] sm:$0xff]
        %v2241 = vld [vmem:[#allocation3 + $0x18] sm:$0xff]
        %2242 = vset.pattern.permute.xlu0 1
        %2243 = vperm.xlu0 %2242, %v518
        %v2244 = vpop.permute.xlu0 %2243
        %2246 = vset.pattern.permute.xlu0 1
        %2247 = vperm.xlu0 %2246, %v519
        %v2248 = vpop.permute.xlu0 %2247
        %2250 = vset.pattern.permute.xlu0 1
        %2251 = vperm.xlu0 %2250, %v520
        %v2252 = vpop.permute.xlu0 %2251
        %2254 = vset.pattern.permute.xlu0 1
        %2255 = vperm.xlu0 %2254, %v521
        %v2256 = vpop.permute.xlu0 %2255
        %vm2258 = vcmask 261120
        %v2260 = vsel %vm2258, %v2238, 0
        %v2263 = vsel %vm2258, %v2239, 0
        %v2266 = vsel %vm2258, %v2240, 0
        %v2269 = vsel %vm2258, %v2241, 0
        %2271 = vmatprep.subr.mxu0 %v781
        %2272 = vmatpush1.msra.mxu0 %v677
        %2273 = vmatprep.subr.mxu0 %v1197
        %2274 = vmatpush1.msra.mxu0 %v1093
        %2275 = vmatprep.subr.mxu0 %v1613
        %2276 = vmatpush1.msra.mxu0 %v1509
        %2277 = vmatprep.subr.mxu0 %v2029
        %2278 = vmatpush1.msra.mxu0 %v1925
        %2279 = vmatprep.subr.mxu0 0.0
        %2280 = vmatpush1.msra.mxu0 0.0
        %2281 = vmatprep.subr.mxu0 0.0
        %2282 = vmatpush1.msra.mxu0 0.0
        %2283 = vmatprep.subr.mxu0 0.0
        %2284 = vmatpush1.msra.mxu0 0.0
        %2285 = vmatprep.subr.mxu0 0.0
        %2286 = vmatpush1.msra.mxu0 0.0
        %2287 = vmatprep.subr.mxu0 0.0
        %2288 = vmatpush1.msra.mxu0 0.0
        %2289 = vmatprep.subr.mxu0 0.0
        %2290 = vmatpush1.msra.mxu0 0.0
        %2291 = vmatprep.subr.mxu0 0.0
        %2292 = vmatpush1.msra.mxu0 0.0
        %2293 = vmatprep.subr.mxu0 0.0
        %2294 = vmatpush1.msra.mxu0 0.0
        %2295 = vmatprep.subr.mxu0 0.0
        %2296 = vmatpush1.msra.mxu0 0.0
        %2297 = vmatprep.subr.mxu0 0.0
        %2298 = vmatpush1.msra.mxu0 0.0
        %2299 = vmatprep.subr.mxu0 0.0
        %2300 = vmatpush1.msra.mxu0 0.0
        %2301 = vmatprep.subr.mxu0 0.0
        %2302 = vmatpush1.msra.mxu0 0.0
        %2303 = vmatprep.subr.mxu0 0.0
        %2304 = vmatpush1.msra.mxu0 0.0
        %2305 = vmatprep.subr.mxu0 0.0
        %2306 = vmatpush1.msra.mxu0 0.0
        %2307 = vmatprep.subr.mxu0 0.0
        %2308 = vmatpush1.msra.mxu0 0.0
        %2309 = vmatprep.subr.mxu0 0.0
        %2310 = vmatpush1.msra.mxu0 0.0
        %2311 = vmatprep.subr.mxu0 0.0
        %2312 = vmatpush1.msra.mxu0 0.0
        %2313 = vmatprep.subr.mxu0 0.0
        %2314 = vmatpush1.msra.mxu0 0.0
        %2315 = vmatprep.subr.mxu0 0.0
        %2316 = vmatpush1.msra.mxu0 0.0
        %2317 = vmatprep.subr.mxu0 0.0
        %2318 = vmatpush1.msra.mxu0 0.0
        %2319 = vmatprep.subr.mxu0 0.0
        %2320 = vmatpush1.msra.mxu0 0.0
        %2321 = vmatprep.subr.mxu0 0.0
        %2322 = vmatpush1.msra.mxu0 0.0
        %2323 = vmatprep.subr.mxu0 0.0
        %2324 = vmatpush1.msra.mxu0 0.0
        %2325 = vmatprep.subr.mxu0 0.0
        %2326 = vmatpush1.msra.mxu0 0.0
        %2327 = vmatprep.subr.mxu0 0.0
        %2328 = vmatpush1.msra.mxu0 0.0
        %2329 = vmatprep.subr.mxu0 0.0
        %2330 = vmatpush1.msra.mxu0 0.0
        %2331 = vmatprep.subr.mxu0 0.0
        %2332 = vmatpush1.msra.mxu0 0.0
        %2333 = vmatprep.subr.mxu0 0.0
        %2334 = vmatpush1.msra.mxu0 0.0
        %2335 = vmatprep.mubr.f32.mxu0 0.0
        %2336 = vmatmul.mubr.f32.gmra.mrb[0].mxu0 %v2260
        %v2337 = vpop.f32.mrb[0].mxu0
        %v2338 = vadd.f32 %v2244, %v2337
        %v2339 = vpop.f32.mrb[0].mxu0
        %v2340 = vadd.f32 %v2244, %v2339
        %2341 = vmatprep.mubr.f32.mxu0 0.0
        %2342 = vmatmul.mubr.f32.gmra.mrb[0].mxu0 %v2263
        %v2343 = vpop.f32.mrb[0].mxu0
        %v2344 = vadd.f32 %v2248, %v2343
        %v2345 = vpop.f32.mrb[0].mxu0
        %v2346 = vadd.f32 %v2248, %v2345
        %2347 = vmatprep.mubr.f32.mxu0 0.0
        %2348 = vmatmul.mubr.f32.gmra.mrb[0].mxu0 %v2266
        %v2349 = vpop.f32.mrb[0].mxu0
        %v2350 = vadd.f32 %v2252, %v2349
        %v2351 = vpop.f32.mrb[0].mxu0
        %v2352 = vadd.f32 %v2252, %v2351
        %2353 = vmatprep.mubr.f32.mxu0 0.0
        %2354 = vmatmul.mubr.f32.gmra.mrb[0].mxu0 %v2269
        %v2355 = vpop.f32.mrb[0].mxu0
        %v2356 = vadd.f32 %v2256, %v2355
        %v2357 = vpop.f32.mrb[0].mxu0
        %v2358 = vadd.f32 %v2256, %v2357
        %2359 = vdwg.mxu0
        %2360 = vmatprep.subr.mxu0 %v989
        %2361 = vmatpush1.msra.mxu0 %v885
        %2362 = vmatprep.subr.mxu0 %v1405
        %2363 = vmatpush1.msra.mxu0 %v1301
        %2364 = vmatprep.subr.mxu0 %v1821
        %2365 = vmatpush1.msra.mxu0 %v1717
        %2366 = vmatprep.subr.mxu0 %v2237
        %2367 = vmatpush1.msra.mxu0 %v2133
        %2368 = vmatprep.subr.mxu0 0.0
        %2369 = vmatpush1.msra.mxu0 0.0
        %2370 = vmatprep.subr.mxu0 0.0
        %2371 = vmatpush1.msra.mxu0 0.0
        %2372 = vmatprep.subr.mxu0 0.0
        %2373 = vmatpush1.msra.mxu0 0.0
        %2374 = vmatprep.subr.mxu0 0.0
        %2375 = vmatpush1.msra.mxu0 0.0
        %2376 = vmatprep.subr.mxu0 0.0
        %2377 = vmatpush1.msra.mxu0 0.0
        %2378 = vmatprep.subr.mxu0 0.0
        %2379 = vmatpush1.msra.mxu0 0.0
        %2380 = vmatprep.subr.mxu0 0.0
        %2381 = vmatpush1.msra.mxu0 0.0
        %2382 = vmatprep.subr.mxu0 0.0
        %2383 = vmatpush1.msra.mxu0 0.0
        %2384 = vmatprep.subr.mxu0 0.0
        %2385 = vmatpush1.msra.mxu0 0.0
        %2386 = vmatprep.subr.mxu0 0.0
        %2387 = vmatpush1.msra.mxu0 0.0
        %2388 = vmatprep.subr.mxu0 0.0
        %2389 = vmatpush1.msra.mxu0 0.0
        %2390 = vmatprep.subr.mxu0 0.0
        %2391 = vmatpush1.msra.mxu0 0.0
        %2392 = vmatprep.subr.mxu0 0.0
        %2393 = vmatpush1.msra.mxu0 0.0
        %2394 = vmatprep.subr.mxu0 0.0
        %2395 = vmatpush1.msra.mxu0 0.0
        %2396 = vmatprep.subr.mxu0 0.0
        %2397 = vmatpush1.msra.mxu0 0.0
        %2398 = vmatprep.subr.mxu0 0.0
        %2399 = vmatpush1.msra.mxu0 0.0
        %2400 = vmatprep.subr.mxu0 0.0
        %2401 = vmatpush1.msra.mxu0 0.0
        %2402 = vmatprep.subr.mxu0 0.0
        %2403 = vmatpush1.msra.mxu0 0.0
        %2404 = vmatprep.subr.mxu0 0.0
        %2405 = vmatpush1.msra.mxu0 0.0
        %2406 = vmatprep.subr.mxu0 0.0
        %2407 = vmatpush1.msra.mxu0 0.0
        %2408 = vmatprep.subr.mxu0 0.0
        %2409 = vmatpush1.msra.mxu0 0.0
        %2410 = vmatprep.subr.mxu0 0.0
        %2411 = vmatpush1.msra.mxu0 0.0
        %2412 = vmatprep.subr.mxu0 0.0
        %2413 = vmatpush1.msra.mxu0 0.0
        %2414 = vmatprep.subr.mxu0 0.0
        %2415 = vmatpush1.msra.mxu0 0.0
        %2416 = vmatprep.subr.mxu0 0.0
        %2417 = vmatpush1.msra.mxu0 0.0
        %2418 = vmatprep.subr.mxu0 0.0
        %2419 = vmatpush1.msra.mxu0 0.0
        %2420 = vmatprep.subr.mxu0 0.0
        %2421 = vmatpush1.msra.mxu0 0.0
        %2422 = vmatprep.subr.mxu0 0.0
        %2423 = vmatpush1.msra.mxu0 0.0
        %2424 = vmatprep.mubr.f32.mxu0 0.0
        %2425 = vmatmul.mubr.f32.gmra.mrb[0].mxu0 %v2260
        %v2426 = vpop.f32.mrb[0].mxu0
        %v2427 = vadd.f32 %v2244, %v2426
        %v2428 = vpop.f32.mrb[0].mxu0
        %v2429 = vadd.f32 %v2244, %v2428
        %2430 = vmatprep.mubr.f32.mxu0 0.0
        %2431 = vmatmul.mubr.f32.gmra.mrb[0].mxu0 %v2263
        %v2432 = vpop.f32.mrb[0].mxu0
        %v2433 = vadd.f32 %v2248, %v2432
        %v2434 = vpop.f32.mrb[0].mxu0
        %v2435 = vadd.f32 %v2248, %v2434
        %2436 = vmatprep.mubr.f32.mxu0 0.0
        %2437 = vmatmul.mubr.f32.gmra.mrb[0].mxu0 %v2266
        %v2438 = vpop.f32.mrb[0].mxu0
        %v2439 = vadd.f32 %v2252, %v2438
        %v2440 = vpop.f32.mrb[0].mxu0
        %v2441 = vadd.f32 %v2252, %v2440
        %2442 = vmatprep.mubr.f32.mxu0 0.0
        %2443 = vmatmul.mubr.f32.gmra.mrb[0].mxu0 %v2269
        %v2444 = vpop.f32.mrb[0].mxu0
        %v2445 = vadd.f32 %v2256, %v2444
        %v2446 = vpop.f32.mrb[0].mxu0
        %v2447 = vadd.f32 %v2256, %v2446
        %2448 = vdwg.mxu0
        %v2449 = vmul.f32 %v2338, 30.0
        %v2450 = vmul.f32 %v2340, 30.0
        %v2451 = vmul.f32 %v2427, 30.0
        %v2452 = vmul.f32 %v2429, 30.0
        %v2453 = vmul.f32 %v2344, 30.0
        %v2454 = vmul.f32 %v2346, 30.0
        %v2455 = vmul.f32 %v2433, 30.0
        %v2456 = vmul.f32 %v2435, 30.0
        %v2457 = vmul.f32 %v2350, 30.0
        %v2458 = vmul.f32 %v2352, 30.0
        %v2459 = vmul.f32 %v2439, 30.0
        %v2460 = vmul.f32 %v2441, 30.0
        %v2461 = vmul.f32 %v2356, 30.0
        %v2462 = vmul.f32 %v2358, 30.0
        %v2463 = vmul.f32 %v2445, 30.0
        %v2464 = vmul.f32 %v2447, 30.0
        %v2465 = vand.u32 2147483647, %v2449
        %vm2466 = vcmp.le.f32.partialorder %v2465, 0.7853982
        %vm2467 = vcmp.lt.s32.totalorder %v2449, 0
        %v2468 = vand.u32 %v2449, 2139095040
        %v2469 = vshrl.u32 %v2468, 23
        %v2470 = vsub.s32 %v2469, 127
        %v2471 = vand.u32 2147483647, %v2449
        %v2472 = vand.u32 %v2471, 8388607
        %v2473 = vor.u32 %v2472, 8388608
        %v2474 = vsub.s32 0, %v2473
        %v2475 = vadd.s32 %v2470, 1
        %vm2476 = vcmp.gt.s32.totalorder %v2475, 0
        %v2477 = vsel %vm2476, %v2475, 0
        %v2478 = vshrl.u32 %v2477, 5
        %v2479 = vand.u32 %v2477, 31
        %v2480 = vsub.s32 32, %v2479
        %v2481 = vshrl.u32 683565275, %v2480
        %v2482 = vshll.u32 683565275, %v2479
        %v2483 = vshrl.u32 2475754826, %v2480
        %v2484 = vor.u32 %v2482, %v2483
        %v2485 = vshll.u32 2475754826, %v2479
        %v2486 = vshrl.u32 2131351028, %v2480
        %v2487 = vor.u32 %v2485, %v2486
        %v2488 = vshll.u32 2131351028, %v2479
        %v2489 = vshrl.u32 2102212464, %v2480
        %v2490 = vor.u32 %v2488, %v2489
        %v2491 = vshll.u32 2102212464, %v2479
        %v2492 = vshrl.u32 920167782, %v2480
        %v2493 = vor.u32 %v2491, %v2492
        %v2494 = vshll.u32 920167782, %v2479
        %v2495 = vshrl.u32 1326507024, %v2480
        %v2496 = vor.u32 %v2494, %v2495
        %vm2497 = vcmp.lt.s32.totalorder %v2478, 1
        %vm2498 = vcmp.lt.s32.totalorder %v2478, 2
        %vm2499 = vcmp.lt.s32.totalorder %v2478, 3
        %vm2500 = vcmp.lt.s32.totalorder %v2478, 4
        %v2501 = vsel %vm2497, %v2481, %v2484
        %v2502 = vsel %vm2500, %v2490, 2102212464
        %v2503 = vsel %vm2499, %v2487, %v2502
        %v2504 = vsel %vm2498, %v2501, %v2503
        %v2505 = vsel %vm2497, %v2484, %v2487
        %v2506 = vsel %vm2500, %v2493, 920167782
        %v2507 = vsel %vm2499, %v2490, %v2506
        %v2508 = vsel %vm2498, %v2505, %v2507
        %v2509 = vsel %vm2497, %v2487, %v2490
        %v2510 = vsel %vm2500, %v2496, 1326507024
        %v2511 = vsel %vm2499, %v2493, %v2510
        %v2512 = vsel %vm2498, %v2509, %v2511
        %v2513 = vshll.u32 %v2473, 8
        %v2514 = vmul.u32.u64.compose %v2513, %v2512
        %v2515 = vextract.low.u32 %v2514
        %v2516 = vextract.high.u32 %v2514
        %v2517 = vmul.u32.u64.compose %v2513, %v2508
        %v2518 = vextract.low.u32 %v2517
        %v2519 = vextract.high.u32 %v2517
        %v2520 = vmul.u32 %v2513, %v2504
        %v2521 = vadd.s32 %v2516, %v2518
        %vm2522 = vc.u32 %v2516, %v2518
        %v2523 = vadd.s32 %v2519, 1
        %v2524 = vsel %vm2522, %v2523, %v2519
        %v2525 = vadd.s32 %v2520, %v2524
        %v2526 = vadd.s32 %v2525, 536870912
        %v2527 = vshrl.u32 %v2526, 30
        %v2528 = vshll.u32 %v2527, 30
        %v2529 = vsub.s32 %v2525, %v2528
        %vm2530 = vcmp.lt.s32.totalorder %v2529, 0
        %v2531 = vsub.s32 0, %v2529
        %v2532 = vsel %vm2530, %v2531, %v2529
        %v2533 = vclz %v2532
        %v2534 = vsub.s32 %v2533, 2
        %vm2535 = vcmp.gt.s32.totalorder 0, %v2534
        %v2536 = vsel %vm2535, 0, %v2534
        %v2537 = vsub.s32 32, %v2536
        %v2538 = vshll.u32 %v2529, %v2536
        %v2539 = vshrl.u32 %v2521, %v2537
        %v2540 = vor.u32 %v2538, %v2539
        %v2541 = vsub.s32 4294967266, %v2536
        %v2542 = vadd.s32 %v2541, 127
        %v2543 = vshll.u32 %v2542, 23
        %v2544 = vor.u32 4788187, %v2543
        %v2545 = vand.u32 2147483647, %v2544
        %v2547 = vcvt.s32.f32 %v2540
        %v2548 = vmul.f32 %v2547, %v2545
        %v2549 = vxor.u32 %v2548, 2147483648
        %v2550 = vsel %vm2467, %v2549, %v2548
        %v2551 = vsub.s32 4, %v2527
        %v2552 = vsel %vm2467, %v2551, %v2527
        %v2553 = vsel %vm2466, %v2449, %v2550
        %v2554 = vsel %vm2466, 0, %v2552
        %v2555 = vcosq.f32.pop %v2553
        %v2556 = vsinq.f32.pop %v2553
        %vm2557 = vweird.f32 %v2449
        %v2558 = vadd.s32 %v2554, 3
        %v2559 = vand.u32 %v2558, 3
        %vm2560 = vcmp.lt.s32.totalorder %v2559, 2
        %vm2561 = vcmp.eq.s32.totalorder %v2559, 0
        %v2562 = vxor.u32 %v2556, 2147483648
        %v2563 = vsel %vm2561, %v2555, %v2562
        %vm2564 = vcmp.eq.s32.totalorder %v2559, 2
        %v2565 = vxor.u32 %v2555, 2147483648
        %v2566 = vsel %vm2564, %v2565, %v2556
        %v2567 = vsel %vm2560, %v2563, %v2566
        %v2568 = vsel %vm2557, nan, %v2567
        %v2569 = vand.u32 2147483647, %v2450
        %vm2570 = vcmp.le.f32.partialorder %v2569, 0.7853982
        %vm2571 = vcmp.lt.s32.totalorder %v2450, 0
        %v2572 = vand.u32 %v2450, 2139095040
        %v2573 = vshrl.u32 %v2572, 23
        %v2574 = vsub.s32 %v2573, 127
        %v2575 = vand.u32 2147483647, %v2450
        %v2576 = vand.u32 %v2575, 8388607
        %v2577 = vor.u32 %v2576, 8388608
        %v2578 = vsub.s32 0, %v2577
        %v2579 = vadd.s32 %v2574, 1
        %vm2580 = vcmp.gt.s32.totalorder %v2579, 0
        %v2581 = vsel %vm2580, %v2579, 0
        %v2582 = vshrl.u32 %v2581, 5
        %v2583 = vand.u32 %v2581, 31
        %v2584 = vsub.s32 32, %v2583
        %v2585 = vshrl.u32 683565275, %v2584
        %v2586 = vshll.u32 683565275, %v2583
        %v2587 = vshrl.u32 2475754826, %v2584
        %v2588 = vor.u32 %v2586, %v2587
        %v2589 = vshll.u32 2475754826, %v2583
        %v2590 = vshrl.u32 2131351028, %v2584
        %v2591 = vor.u32 %v2589, %v2590
        %v2592 = vshll.u32 2131351028, %v2583
        %v2593 = vshrl.u32 2102212464, %v2584
        %v2594 = vor.u32 %v2592, %v2593
        %v2595 = vshll.u32 2102212464, %v2583
        %v2596 = vshrl.u32 920167782, %v2584
        %v2597 = vor.u32 %v2595, %v2596
        %v2598 = vshll.u32 920167782, %v2583
        %v2599 = vshrl.u32 1326507024, %v2584
        %v2600 = vor.u32 %v2598, %v2599
        %vm2601 = vcmp.lt.s32.totalorder %v2582, 1
        %vm2602 = vcmp.lt.s32.totalorder %v2582, 2
        %vm2603 = vcmp.lt.s32.totalorder %v2582, 3
        %vm2604 = vcmp.lt.s32.totalorder %v2582, 4
        %v2605 = vsel %vm2601, %v2585, %v2588
        %v2606 = vsel %vm2604, %v2594, 2102212464
        %v2607 = vsel %vm2603, %v2591, %v2606
        %v2608 = vsel %vm2602, %v2605, %v2607
        %v2609 = vsel %vm2601, %v2588, %v2591
        %v2610 = vsel %vm2604, %v2597, 920167782
        %v2611 = vsel %vm2603, %v2594, %v2610
        %v2612 = vsel %vm2602, %v2609, %v2611
        %v2613 = vsel %vm2601, %v2591, %v2594
        %v2614 = vsel %vm2604, %v2600, 1326507024
        %v2615 = vsel %vm2603, %v2597, %v2614
        %v2616 = vsel %vm2602, %v2613, %v2615
        %v2617 = vshll.u32 %v2577, 8
        %v2618 = vmul.u32.u64.compose %v2617, %v2616
        %v2619 = vextract.low.u32 %v2618
        %v2620 = vextract.high.u32 %v2618
        %v2621 = vmul.u32.u64.compose %v2617, %v2612
        %v2622 = vextract.low.u32 %v2621
        %v2623 = vextract.high.u32 %v2621
        %v2624 = vmul.u32 %v2617, %v2608
        %v2625 = vadd.s32 %v2620, %v2622
        %vm2626 = vc.u32 %v2620, %v2622
        %v2627 = vadd.s32 %v2623, 1
        %v2628 = vsel %vm2626, %v2627, %v2623
        %v2629 = vadd.s32 %v2624, %v2628
        %v2630 = vadd.s32 %v2629, 536870912
        %v2631 = vshrl.u32 %v2630, 30
        %v2632 = vshll.u32 %v2631, 30
        %v2633 = vsub.s32 %v2629, %v2632
        %vm2634 = vcmp.lt.s32.totalorder %v2633, 0
        %v2635 = vsub.s32 0, %v2633
        %v2636 = vsel %vm2634, %v2635, %v2633
        %v2637 = vclz %v2636
        %v2638 = vsub.s32 %v2637, 2
        %vm2639 = vcmp.gt.s32.totalorder 0, %v2638
        %v2640 = vsel %vm2639, 0, %v2638
        %v2641 = vsub.s32 32, %v2640
        %v2642 = vshll.u32 %v2633, %v2640
        %v2643 = vshrl.u32 %v2625, %v2641
        %v2644 = vor.u32 %v2642, %v2643
        %v2645 = vsub.s32 4294967266, %v2640
        %v2646 = vadd.s32 %v2645, 127
        %v2647 = vshll.u32 %v2646, 23
        %v2648 = vor.u32 4788187, %v2647
        %v2649 = vand.u32 2147483647, %v2648
        %v2651 = vcvt.s32.f32 %v2644
        %v2652 = vmul.f32 %v2651, %v2649
        %v2653 = vxor.u32 %v2652, 2147483648
        %v2654 = vsel %vm2571, %v2653, %v2652
        %v2655 = vsub.s32 4, %v2631
        %v2656 = vsel %vm2571, %v2655, %v2631
        %v2657 = vsel %vm2570, %v2450, %v2654
        %v2658 = vsel %vm2570, 0, %v2656
        %v2659 = vcosq.f32.pop %v2657
        %v2660 = vsinq.f32.pop %v2657
        %vm2661 = vweird.f32 %v2450
        %v2662 = vadd.s32 %v2658, 3
        %v2663 = vand.u32 %v2662, 3
        %vm2664 = vcmp.lt.s32.totalorder %v2663, 2
        %vm2665 = vcmp.eq.s32.totalorder %v2663, 0
        %v2666 = vxor.u32 %v2660, 2147483648
        %v2667 = vsel %vm2665, %v2659, %v2666
        %vm2668 = vcmp.eq.s32.totalorder %v2663, 2
        %v2669 = vxor.u32 %v2659, 2147483648
        %v2670 = vsel %vm2668, %v2669, %v2660
        %v2671 = vsel %vm2664, %v2667, %v2670
        %v2672 = vsel %vm2661, nan, %v2671
        %v2673 = vand.u32 2147483647, %v2451
        %vm2674 = vcmp.le.f32.partialorder %v2673, 0.7853982
        %vm2675 = vcmp.lt.s32.totalorder %v2451, 0
        %v2676 = vand.u32 %v2451, 2139095040
        %v2677 = vshrl.u32 %v2676, 23
        %v2678 = vsub.s32 %v2677, 127
        %v2679 = vand.u32 2147483647, %v2451
        %v2680 = vand.u32 %v2679, 8388607
        %v2681 = vor.u32 %v2680, 8388608
        %v2682 = vsub.s32 0, %v2681
        %v2683 = vadd.s32 %v2678, 1
        %vm2684 = vcmp.gt.s32.totalorder %v2683, 0
        %v2685 = vsel %vm2684, %v2683, 0
        %v2686 = vshrl.u32 %v2685, 5
        %v2687 = vand.u32 %v2685, 31
        %v2688 = vsub.s32 32, %v2687
        %v2689 = vshrl.u32 683565275, %v2688
        %v2690 = vshll.u32 683565275, %v2687
        %v2691 = vshrl.u32 2475754826, %v2688
        %v2692 = vor.u32 %v2690, %v2691
        %v2693 = vshll.u32 2475754826, %v2687
        %v2694 = vshrl.u32 2131351028, %v2688
        %v2695 = vor.u32 %v2693, %v2694
        %v2696 = vshll.u32 2131351028, %v2687
        %v2697 = vshrl.u32 2102212464, %v2688
        %v2698 = vor.u32 %v2696, %v2697
        %v2699 = vshll.u32 2102212464, %v2687
        %v2700 = vshrl.u32 920167782, %v2688
        %v2701 = vor.u32 %v2699, %v2700
        %v2702 = vshll.u32 920167782, %v2687
        %v2703 = vshrl.u32 1326507024, %v2688
        %v2704 = vor.u32 %v2702, %v2703
        %vm2705 = vcmp.lt.s32.totalorder %v2686, 1
        %vm2706 = vcmp.lt.s32.totalorder %v2686, 2
        %vm2707 = vcmp.lt.s32.totalorder %v2686, 3
        %vm2708 = vcmp.lt.s32.totalorder %v2686, 4
        %v2709 = vsel %vm2705, %v2689, %v2692
        %v2710 = vsel %vm2708, %v2698, 2102212464
        %v2711 = vsel %vm2707, %v2695, %v2710
        %v2712 = vsel %vm2706, %v2709, %v2711
        %v2713 = vsel %vm2705, %v2692, %v2695
        %v2714 = vsel %vm2708, %v2701, 920167782
        %v2715 = vsel %vm2707, %v2698, %v2714
        %v2716 = vsel %vm2706, %v2713, %v2715
        %v2717 = vsel %vm2705, %v2695, %v2698
        %v2718 = vsel %vm2708, %v2704, 1326507024
        %v2719 = vsel %vm2707, %v2701, %v2718
        %v2720 = vsel %vm2706, %v2717, %v2719
        %v2721 = vshll.u32 %v2681, 8
        %v2722 = vmul.u32.u64.compose %v2721, %v2720
        %v2723 = vextract.low.u32 %v2722
        %v2724 = vextract.high.u32 %v2722
        %v2725 = vmul.u32.u64.compose %v2721, %v2716
        %v2726 = vextract.low.u32 %v2725
        %v2727 = vextract.high.u32 %v2725
        %v2728 = vmul.u32 %v2721, %v2712
        %v2729 = vadd.s32 %v2724, %v2726
        %vm2730 = vc.u32 %v2724, %v2726
        %v2731 = vadd.s32 %v2727, 1
        %v2732 = vsel %vm2730, %v2731, %v2727
        %v2733 = vadd.s32 %v2728, %v2732
        %v2734 = vadd.s32 %v2733, 536870912
        %v2735 = vshrl.u32 %v2734, 30
        %v2736 = vshll.u32 %v2735, 30
        %v2737 = vsub.s32 %v2733, %v2736
        %vm2738 = vcmp.lt.s32.totalorder %v2737, 0
        %v2739 = vsub.s32 0, %v2737
        %v2740 = vsel %vm2738, %v2739, %v2737
        %v2741 = vclz %v2740
        %v2742 = vsub.s32 %v2741, 2
        %vm2743 = vcmp.gt.s32.totalorder 0, %v2742
        %v2744 = vsel %vm2743, 0, %v2742
        %v2745 = vsub.s32 32, %v2744
        %v2746 = vshll.u32 %v2737, %v2744
        %v2747 = vshrl.u32 %v2729, %v2745
        %v2748 = vor.u32 %v2746, %v2747
        %v2749 = vsub.s32 4294967266, %v2744
        %v2750 = vadd.s32 %v2749, 127
        %v2751 = vshll.u32 %v2750, 23
        %v2752 = vor.u32 4788187, %v2751
        %v2753 = vand.u32 2147483647, %v2752
        %v2755 = vcvt.s32.f32 %v2748
        %v2756 = vmul.f32 %v2755, %v2753
        %v2757 = vxor.u32 %v2756, 2147483648
        %v2758 = vsel %vm2675, %v2757, %v2756
        %v2759 = vsub.s32 4, %v2735
        %v2760 = vsel %vm2675, %v2759, %v2735
        %v2761 = vsel %vm2674, %v2451, %v2758
        %v2762 = vsel %vm2674, 0, %v2760
        %v2763 = vcosq.f32.pop %v2761
        %v2764 = vsinq.f32.pop %v2761
        %vm2765 = vweird.f32 %v2451
        %v2766 = vadd.s32 %v2762, 3
        %v2767 = vand.u32 %v2766, 3
        %vm2768 = vcmp.lt.s32.totalorder %v2767, 2
        %vm2769 = vcmp.eq.s32.totalorder %v2767, 0
        %v2770 = vxor.u32 %v2764, 2147483648
        %v2771 = vsel %vm2769, %v2763, %v2770
        %vm2772 = vcmp.eq.s32.totalorder %v2767, 2
        %v2773 = vxor.u32 %v2763, 2147483648
        %v2774 = vsel %vm2772, %v2773, %v2764
        %v2775 = vsel %vm2768, %v2771, %v2774
        %v2776 = vsel %vm2765, nan, %v2775
        %v2777 = vand.u32 2147483647, %v2452
        %vm2778 = vcmp.le.f32.partialorder %v2777, 0.7853982
        %vm2779 = vcmp.lt.s32.totalorder %v2452, 0
        %v2780 = vand.u32 %v2452, 2139095040
        %v2781 = vshrl.u32 %v2780, 23
        %v2782 = vsub.s32 %v2781, 127
        %v2783 = vand.u32 2147483647, %v2452
        %v2784 = vand.u32 %v2783, 8388607
        %v2785 = vor.u32 %v2784, 8388608
        %v2786 = vsub.s32 0, %v2785
        %v2787 = vadd.s32 %v2782, 1
        %vm2788 = vcmp.gt.s32.totalorder %v2787, 0
        %v2789 = vsel %vm2788, %v2787, 0
        %v2790 = vshrl.u32 %v2789, 5
        %v2791 = vand.u32 %v2789, 31
        %v2792 = vsub.s32 32, %v2791
        %v2793 = vshrl.u32 683565275, %v2792
        %v2794 = vshll.u32 683565275, %v2791
        %v2795 = vshrl.u32 2475754826, %v2792
        %v2796 = vor.u32 %v2794, %v2795
        %v2797 = vshll.u32 2475754826, %v2791
        %v2798 = vshrl.u32 2131351028, %v2792
        %v2799 = vor.u32 %v2797, %v2798
        %v2800 = vshll.u32 2131351028, %v2791
        %v2801 = vshrl.u32 2102212464, %v2792
        %v2802 = vor.u32 %v2800, %v2801
        %v2803 = vshll.u32 2102212464, %v2791
        %v2804 = vshrl.u32 920167782, %v2792
        %v2805 = vor.u32 %v2803, %v2804
        %v2806 = vshll.u32 920167782, %v2791
        %v2807 = vshrl.u32 1326507024, %v2792
        %v2808 = vor.u32 %v2806, %v2807
        %vm2809 = vcmp.lt.s32.totalorder %v2790, 1
        %vm2810 = vcmp.lt.s32.totalorder %v2790, 2
        %vm2811 = vcmp.lt.s32.totalorder %v2790, 3
        %vm2812 = vcmp.lt.s32.totalorder %v2790, 4
        %v2813 = vsel %vm2809, %v2793, %v2796
        %v2814 = vsel %vm2812, %v2802, 2102212464
        %v2815 = vsel %vm2811, %v2799, %v2814
        %v2816 = vsel %vm2810, %v2813, %v2815
        %v2817 = vsel %vm2809, %v2796, %v2799
        %v2818 = vsel %vm2812, %v2805, 920167782
        %v2819 = vsel %vm2811, %v2802, %v2818
        %v2820 = vsel %vm2810, %v2817, %v2819
        %v2821 = vsel %vm2809, %v2799, %v2802
        %v2822 = vsel %vm2812, %v2808, 1326507024
        %v2823 = vsel %vm2811, %v2805, %v2822
        %v2824 = vsel %vm2810, %v2821, %v2823
        %v2825 = vshll.u32 %v2785, 8
        %v2826 = vmul.u32.u64.compose %v2825, %v2824
        %v2827 = vextract.low.u32 %v2826
        %v2828 = vextract.high.u32 %v2826
        %v2829 = vmul.u32.u64.compose %v2825, %v2820
        %v2830 = vextract.low.u32 %v2829
        %v2831 = vextract.high.u32 %v2829
        %v2832 = vmul.u32 %v2825, %v2816
        %v2833 = vadd.s32 %v2828, %v2830
        %vm2834 = vc.u32 %v2828, %v2830
        %v2835 = vadd.s32 %v2831, 1
        %v2836 = vsel %vm2834, %v2835, %v2831
        %v2837 = vadd.s32 %v2832, %v2836
        %v2838 = vadd.s32 %v2837, 536870912
        %v2839 = vshrl.u32 %v2838, 30
        %v2840 = vshll.u32 %v2839, 30
        %v2841 = vsub.s32 %v2837, %v2840
        %vm2842 = vcmp.lt.s32.totalorder %v2841, 0
        %v2843 = vsub.s32 0, %v2841
        %v2844 = vsel %vm2842, %v2843, %v2841
        %v2845 = vclz %v2844
        %v2846 = vsub.s32 %v2845, 2
        %vm2847 = vcmp.gt.s32.totalorder 0, %v2846
        %v2848 = vsel %vm2847, 0, %v2846
        %v2849 = vsub.s32 32, %v2848
        %v2850 = vshll.u32 %v2841, %v2848
        %v2851 = vshrl.u32 %v2833, %v2849
        %v2852 = vor.u32 %v2850, %v2851
        %v2853 = vsub.s32 4294967266, %v2848
        %v2854 = vadd.s32 %v2853, 127
        %v2855 = vshll.u32 %v2854, 23
        %v2856 = vor.u32 4788187, %v2855
        %v2857 = vand.u32 2147483647, %v2856
        %v2859 = vcvt.s32.f32 %v2852
        %v2860 = vmul.f32 %v2859, %v2857
        %v2861 = vxor.u32 %v2860, 2147483648
        %v2862 = vsel %vm2779, %v2861, %v2860
        %v2863 = vsub.s32 4, %v2839
        %v2864 = vsel %vm2779, %v2863, %v2839
        %v2865 = vsel %vm2778, %v2452, %v2862
        %v2866 = vsel %vm2778, 0, %v2864
        %v2867 = vcosq.f32.pop %v2865
        %v2868 = vsinq.f32.pop %v2865
        %vm2869 = vweird.f32 %v2452
        %v2870 = vadd.s32 %v2866, 3
        %v2871 = vand.u32 %v2870, 3
        %vm2872 = vcmp.lt.s32.totalorder %v2871, 2
        %vm2873 = vcmp.eq.s32.totalorder %v2871, 0
        %v2874 = vxor.u32 %v2868, 2147483648
        %v2875 = vsel %vm2873, %v2867, %v2874
        %vm2876 = vcmp.eq.s32.totalorder %v2871, 2
        %v2877 = vxor.u32 %v2867, 2147483648
        %v2878 = vsel %vm2876, %v2877, %v2868
        %v2879 = vsel %vm2872, %v2875, %v2878
        %v2880 = vsel %vm2869, nan, %v2879
        %v2881 = vand.u32 2147483647, %v2453
        %vm2882 = vcmp.le.f32.partialorder %v2881, 0.7853982
        %vm2883 = vcmp.lt.s32.totalorder %v2453, 0
        %v2884 = vand.u32 %v2453, 2139095040
        %v2885 = vshrl.u32 %v2884, 23
        %v2886 = vsub.s32 %v2885, 127
        %v2887 = vand.u32 2147483647, %v2453
        %v2888 = vand.u32 %v2887, 8388607
        %v2889 = vor.u32 %v2888, 8388608
        %v2890 = vsub.s32 0, %v2889
        %v2891 = vadd.s32 %v2886, 1
        %vm2892 = vcmp.gt.s32.totalorder %v2891, 0
        %v2893 = vsel %vm2892, %v2891, 0
        %v2894 = vshrl.u32 %v2893, 5
        %v2895 = vand.u32 %v2893, 31
        %v2896 = vsub.s32 32, %v2895
        %v2897 = vshrl.u32 683565275, %v2896
        %v2898 = vshll.u32 683565275, %v2895
        %v2899 = vshrl.u32 2475754826, %v2896
        %v2900 = vor.u32 %v2898, %v2899
        %v2901 = vshll.u32 2475754826, %v2895
        %v2902 = vshrl.u32 2131351028, %v2896
        %v2903 = vor.u32 %v2901, %v2902
        %v2904 = vshll.u32 2131351028, %v2895
        %v2905 = vshrl.u32 2102212464, %v2896
        %v2906 = vor.u32 %v2904, %v2905
        %v2907 = vshll.u32 2102212464, %v2895
        %v2908 = vshrl.u32 920167782, %v2896
        %v2909 = vor.u32 %v2907, %v2908
        %v2910 = vshll.u32 920167782, %v2895
        %v2911 = vshrl.u32 1326507024, %v2896
        %v2912 = vor.u32 %v2910, %v2911
        %vm2913 = vcmp.lt.s32.totalorder %v2894, 1
        %vm2914 = vcmp.lt.s32.totalorder %v2894, 2
        %vm2915 = vcmp.lt.s32.totalorder %v2894, 3
        %vm2916 = vcmp.lt.s32.totalorder %v2894, 4
        %v2917 = vsel %vm2913, %v2897, %v2900
        %v2918 = vsel %vm2916, %v2906, 2102212464
        %v2919 = vsel %vm2915, %v2903, %v2918
        %v2920 = vsel %vm2914, %v2917, %v2919
        %v2921 = vsel %vm2913, %v2900, %v2903
        %v2922 = vsel %vm2916, %v2909, 920167782
        %v2923 = vsel %vm2915, %v2906, %v2922
        %v2924 = vsel %vm2914, %v2921, %v2923
        %v2925 = vsel %vm2913, %v2903, %v2906
        %v2926 = vsel %vm2916, %v2912, 1326507024
        %v2927 = vsel %vm2915, %v2909, %v2926
        %v2928 = vsel %vm2914, %v2925, %v2927
        %v2929 = vshll.u32 %v2889, 8
        %v2930 = vmul.u32.u64.compose %v2929, %v2928
        %v2931 = vextract.low.u32 %v2930
        %v2932 = vextract.high.u32 %v2930
        %v2933 = vmul.u32.u64.compose %v2929, %v2924
        %v2934 = vextract.low.u32 %v2933
        %v2935 = vextract.high.u32 %v2933
        %v2936 = vmul.u32 %v2929, %v2920
        %v2937 = vadd.s32 %v2932, %v2934
        %vm2938 = vc.u32 %v2932, %v2934
        %v2939 = vadd.s32 %v2935, 1
        %v2940 = vsel %vm2938, %v2939, %v2935
        %v2941 = vadd.s32 %v2936, %v2940
        %v2942 = vadd.s32 %v2941, 536870912
        %v2943 = vshrl.u32 %v2942, 30
        %v2944 = vshll.u32 %v2943, 30
        %v2945 = vsub.s32 %v2941, %v2944
        %vm2946 = vcmp.lt.s32.totalorder %v2945, 0
        %v2947 = vsub.s32 0, %v2945
        %v2948 = vsel %vm2946, %v2947, %v2945
        %v2949 = vclz %v2948
        %v2950 = vsub.s32 %v2949, 2
        %vm2951 = vcmp.gt.s32.totalorder 0, %v2950
        %v2952 = vsel %vm2951, 0, %v2950
        %v2953 = vsub.s32 32, %v2952
        %v2954 = vshll.u32 %v2945, %v2952
        %v2955 = vshrl.u32 %v2937, %v2953
        %v2956 = vor.u32 %v2954, %v2955
        %v2957 = vsub.s32 4294967266, %v2952
        %v2958 = vadd.s32 %v2957, 127
        %v2959 = vshll.u32 %v2958, 23
        %v2960 = vor.u32 4788187, %v2959
        %v2961 = vand.u32 2147483647, %v2960
        %v2963 = vcvt.s32.f32 %v2956
        %v2964 = vmul.f32 %v2963, %v2961
        %v2965 = vxor.u32 %v2964, 2147483648
        %v2966 = vsel %vm2883, %v2965, %v2964
        %v2967 = vsub.s32 4, %v2943
        %v2968 = vsel %vm2883, %v2967, %v2943
        %v2969 = vsel %vm2882, %v2453, %v2966
        %v2970 = vsel %vm2882, 0, %v2968
        %v2971 = vcosq.f32.pop %v2969
        %v2972 = vsinq.f32.pop %v2969
        %vm2973 = vweird.f32 %v2453
        %v2974 = vadd.s32 %v2970, 3
        %v2975 = vand.u32 %v2974, 3
        %vm2976 = vcmp.lt.s32.totalorder %v2975, 2
        %vm2977 = vcmp.eq.s32.totalorder %v2975, 0
        %v2978 = vxor.u32 %v2972, 2147483648
        %v2979 = vsel %vm2977, %v2971, %v2978
        %vm2980 = vcmp.eq.s32.totalorder %v2975, 2
        %v2981 = vxor.u32 %v2971, 2147483648
        %v2982 = vsel %vm2980, %v2981, %v2972
        %v2983 = vsel %vm2976, %v2979, %v2982
        %v2984 = vsel %vm2973, nan, %v2983
        %v2985 = vand.u32 2147483647, %v2454
        %vm2986 = vcmp.le.f32.partialorder %v2985, 0.7853982
        %vm2987 = vcmp.lt.s32.totalorder %v2454, 0
        %v2988 = vand.u32 %v2454, 2139095040
        %v2989 = vshrl.u32 %v2988, 23
        %v2990 = vsub.s32 %v2989, 127
        %v2991 = vand.u32 2147483647, %v2454
        %v2992 = vand.u32 %v2991, 8388607
        %v2993 = vor.u32 %v2992, 8388608
        %v2994 = vsub.s32 0, %v2993
        %v2995 = vadd.s32 %v2990, 1
        %vm2996 = vcmp.gt.s32.totalorder %v2995, 0
        %v2997 = vsel %vm2996, %v2995, 0
        %v2998 = vshrl.u32 %v2997, 5
        %v2999 = vand.u32 %v2997, 31
        %v3000 = vsub.s32 32, %v2999
        %v3001 = vshrl.u32 683565275, %v3000
        %v3002 = vshll.u32 683565275, %v2999
        %v3003 = vshrl.u32 2475754826, %v3000
        %v3004 = vor.u32 %v3002, %v3003
        %v3005 = vshll.u32 2475754826, %v2999
        %v3006 = vshrl.u32 2131351028, %v3000
        %v3007 = vor.u32 %v3005, %v3006
        %v3008 = vshll.u32 2131351028, %v2999
        %v3009 = vshrl.u32 2102212464, %v3000
        %v3010 = vor.u32 %v3008, %v3009
        %v3011 = vshll.u32 2102212464, %v2999
        %v3012 = vshrl.u32 920167782, %v3000
        %v3013 = vor.u32 %v3011, %v3012
        %v3014 = vshll.u32 920167782, %v2999
        %v3015 = vshrl.u32 1326507024, %v3000
        %v3016 = vor.u32 %v3014, %v3015
        %vm3017 = vcmp.lt.s32.totalorder %v2998, 1
        %vm3018 = vcmp.lt.s32.totalorder %v2998, 2
        %vm3019 = vcmp.lt.s32.totalorder %v2998, 3
        %vm3020 = vcmp.lt.s32.totalorder %v2998, 4
        %v3021 = vsel %vm3017, %v3001, %v3004
        %v3022 = vsel %vm3020, %v3010, 2102212464
        %v3023 = vsel %vm3019, %v3007, %v3022
        %v3024 = vsel %vm3018, %v3021, %v3023
        %v3025 = vsel %vm3017, %v3004, %v3007
        %v3026 = vsel %vm3020, %v3013, 920167782
        %v3027 = vsel %vm3019, %v3010, %v3026
        %v3028 = vsel %vm3018, %v3025, %v3027
        %v3029 = vsel %vm3017, %v3007, %v3010
        %v3030 = vsel %vm3020, %v3016, 1326507024
        %v3031 = vsel %vm3019, %v3013, %v3030
        %v3032 = vsel %vm3018, %v3029, %v3031
        %v3033 = vshll.u32 %v2993, 8
        %v3034 = vmul.u32.u64.compose %v3033, %v3032
        %v3035 = vextract.low.u32 %v3034
        %v3036 = vextract.high.u32 %v3034
        %v3037 = vmul.u32.u64.compose %v3033, %v3028
        %v3038 = vextract.low.u32 %v3037
        %v3039 = vextract.high.u32 %v3037
        %v3040 = vmul.u32 %v3033, %v3024
        %v3041 = vadd.s32 %v3036, %v3038
        %vm3042 = vc.u32 %v3036, %v3038
        %v3043 = vadd.s32 %v3039, 1
        %v3044 = vsel %vm3042, %v3043, %v3039
        %v3045 = vadd.s32 %v3040, %v3044
        %v3046 = vadd.s32 %v3045, 536870912
        %v3047 = vshrl.u32 %v3046, 30
        %v3048 = vshll.u32 %v3047, 30
        %v3049 = vsub.s32 %v3045, %v3048
        %vm3050 = vcmp.lt.s32.totalorder %v3049, 0
        %v3051 = vsub.s32 0, %v3049
        %v3052 = vsel %vm3050, %v3051, %v3049
        %v3053 = vclz %v3052
        %v3054 = vsub.s32 %v3053, 2
        %vm3055 = vcmp.gt.s32.totalorder 0, %v3054
        %v3056 = vsel %vm3055, 0, %v3054
        %v3057 = vsub.s32 32, %v3056
        %v3058 = vshll.u32 %v3049, %v3056
        %v3059 = vshrl.u32 %v3041, %v3057
        %v3060 = vor.u32 %v3058, %v3059
        %v3061 = vsub.s32 4294967266, %v3056
        %v3062 = vadd.s32 %v3061, 127
        %v3063 = vshll.u32 %v3062, 23
        %v3064 = vor.u32 4788187, %v3063
        %v3065 = vand.u32 2147483647, %v3064
        %v3067 = vcvt.s32.f32 %v3060
        %v3068 = vmul.f32 %v3067, %v3065
        %v3069 = vxor.u32 %v3068, 2147483648
        %v3070 = vsel %vm2987, %v3069, %v3068
        %v3071 = vsub.s32 4, %v3047
        %v3072 = vsel %vm2987, %v3071, %v3047
        %v3073 = vsel %vm2986, %v2454, %v3070
        %v3074 = vsel %vm2986, 0, %v3072
        %v3075 = vcosq.f32.pop %v3073
        %v3076 = vsinq.f32.pop %v3073
        %vm3077 = vweird.f32 %v2454
        %v3078 = vadd.s32 %v3074, 3
        %v3079 = vand.u32 %v3078, 3
        %vm3080 = vcmp.lt.s32.totalorder %v3079, 2
        %vm3081 = vcmp.eq.s32.totalorder %v3079, 0
        %v3082 = vxor.u32 %v3076, 2147483648
        %v3083 = vsel %vm3081, %v3075, %v3082
        %vm3084 = vcmp.eq.s32.totalorder %v3079, 2
        %v3085 = vxor.u32 %v3075, 2147483648
        %v3086 = vsel %vm3084, %v3085, %v3076
        %v3087 = vsel %vm3080, %v3083, %v3086
        %v3088 = vsel %vm3077, nan, %v3087
        %v3089 = vand.u32 2147483647, %v2455
        %vm3090 = vcmp.le.f32.partialorder %v3089, 0.7853982
        %vm3091 = vcmp.lt.s32.totalorder %v2455, 0
        %v3092 = vand.u32 %v2455, 2139095040
        %v3093 = vshrl.u32 %v3092, 23
        %v3094 = vsub.s32 %v3093, 127
        %v3095 = vand.u32 2147483647, %v2455
        %v3096 = vand.u32 %v3095, 8388607
        %v3097 = vor.u32 %v3096, 8388608
        %v3098 = vsub.s32 0, %v3097
        %v3099 = vadd.s32 %v3094, 1
        %vm3100 = vcmp.gt.s32.totalorder %v3099, 0
        %v3101 = vsel %vm3100, %v3099, 0
        %v3102 = vshrl.u32 %v3101, 5
        %v3103 = vand.u32 %v3101, 31
        %v3104 = vsub.s32 32, %v3103
        %v3105 = vshrl.u32 683565275, %v3104
        %v3106 = vshll.u32 683565275, %v3103
        %v3107 = vshrl.u32 2475754826, %v3104
        %v3108 = vor.u32 %v3106, %v3107
        %v3109 = vshll.u32 2475754826, %v3103
        %v3110 = vshrl.u32 2131351028, %v3104
        %v3111 = vor.u32 %v3109, %v3110
        %v3112 = vshll.u32 2131351028, %v3103
        %v3113 = vshrl.u32 2102212464, %v3104
        %v3114 = vor.u32 %v3112, %v3113
        %v3115 = vshll.u32 2102212464, %v3103
        %v3116 = vshrl.u32 920167782, %v3104
        %v3117 = vor.u32 %v3115, %v3116
        %v3118 = vshll.u32 920167782, %v3103
        %v3119 = vshrl.u32 1326507024, %v3104
        %v3120 = vor.u32 %v3118, %v3119
        %vm3121 = vcmp.lt.s32.totalorder %v3102, 1
        %vm3122 = vcmp.lt.s32.totalorder %v3102, 2
        %vm3123 = vcmp.lt.s32.totalorder %v3102, 3
        %vm3124 = vcmp.lt.s32.totalorder %v3102, 4
        %v3125 = vsel %vm3121, %v3105, %v3108
        %v3126 = vsel %vm3124, %v3114, 2102212464
        %v3127 = vsel %vm3123, %v3111, %v3126
        %v3128 = vsel %vm3122, %v3125, %v3127
        %v3129 = vsel %vm3121, %v3108, %v3111
        %v3130 = vsel %vm3124, %v3117, 920167782
        %v3131 = vsel %vm3123, %v3114, %v3130
        %v3132 = vsel %vm3122, %v3129, %v3131
        %v3133 = vsel %vm3121, %v3111, %v3114
        %v3134 = vsel %vm3124, %v3120, 1326507024
        %v3135 = vsel %vm3123, %v3117, %v3134
        %v3136 = vsel %vm3122, %v3133, %v3135
        %v3137 = vshll.u32 %v3097, 8
        %v3138 = vmul.u32.u64.compose %v3137, %v3136
        %v3139 = vextract.low.u32 %v3138
        %v3140 = vextract.high.u32 %v3138
        %v3141 = vmul.u32.u64.compose %v3137, %v3132
        %v3142 = vextract.low.u32 %v3141
        %v3143 = vextract.high.u32 %v3141
        %v3144 = vmul.u32 %v3137, %v3128
        %v3145 = vadd.s32 %v3140, %v3142
        %vm3146 = vc.u32 %v3140, %v3142
        %v3147 = vadd.s32 %v3143, 1
        %v3148 = vsel %vm3146, %v3147, %v3143
        %v3149 = vadd.s32 %v3144, %v3148
        %v3150 = vadd.s32 %v3149, 536870912
        %v3151 = vshrl.u32 %v3150, 30
        %v3152 = vshll.u32 %v3151, 30
        %v3153 = vsub.s32 %v3149, %v3152
        %vm3154 = vcmp.lt.s32.totalorder %v3153, 0
        %v3155 = vsub.s32 0, %v3153
        %v3156 = vsel %vm3154, %v3155, %v3153
        %v3157 = vclz %v3156
        %v3158 = vsub.s32 %v3157, 2
        %vm3159 = vcmp.gt.s32.totalorder 0, %v3158
        %v3160 = vsel %vm3159, 0, %v3158
        %v3161 = vsub.s32 32, %v3160
        %v3162 = vshll.u32 %v3153, %v3160
        %v3163 = vshrl.u32 %v3145, %v3161
        %v3164 = vor.u32 %v3162, %v3163
        %v3165 = vsub.s32 4294967266, %v3160
        %v3166 = vadd.s32 %v3165, 127
        %v3167 = vshll.u32 %v3166, 23
        %v3168 = vor.u32 4788187, %v3167
        %v3169 = vand.u32 2147483647, %v3168
        %v3171 = vcvt.s32.f32 %v3164
        %v3172 = vmul.f32 %v3171, %v3169
        %v3173 = vxor.u32 %v3172, 2147483648
        %v3174 = vsel %vm3091, %v3173, %v3172
        %v3175 = vsub.s32 4, %v3151
        %v3176 = vsel %vm3091, %v3175, %v3151
        %v3177 = vsel %vm3090, %v2455, %v3174
        %v3178 = vsel %vm3090, 0, %v3176
        %v3179 = vcosq.f32.pop %v3177
        %v3180 = vsinq.f32.pop %v3177
        %vm3181 = vweird.f32 %v2455
        %v3182 = vadd.s32 %v3178, 3
        %v3183 = vand.u32 %v3182, 3
        %vm3184 = vcmp.lt.s32.totalorder %v3183, 2
        %vm3185 = vcmp.eq.s32.totalorder %v3183, 0
        %v3186 = vxor.u32 %v3180, 2147483648
        %v3187 = vsel %vm3185, %v3179, %v3186
        %vm3188 = vcmp.eq.s32.totalorder %v3183, 2
        %v3189 = vxor.u32 %v3179, 2147483648
        %v3190 = vsel %vm3188, %v3189, %v3180
        %v3191 = vsel %vm3184, %v3187, %v3190
        %v3192 = vsel %vm3181, nan, %v3191
        %v3193 = vand.u32 2147483647, %v2456
        %vm3194 = vcmp.le.f32.partialorder %v3193, 0.7853982
        %vm3195 = vcmp.lt.s32.totalorder %v2456, 0
        %v3196 = vand.u32 %v2456, 2139095040
        %v3197 = vshrl.u32 %v3196, 23
        %v3198 = vsub.s32 %v3197, 127
        %v3199 = vand.u32 2147483647, %v2456
        %v3200 = vand.u32 %v3199, 8388607
        %v3201 = vor.u32 %v3200, 8388608
        %v3202 = vsub.s32 0, %v3201
        %v3203 = vadd.s32 %v3198, 1
        %vm3204 = vcmp.gt.s32.totalorder %v3203, 0
        %v3205 = vsel %vm3204, %v3203, 0
        %v3206 = vshrl.u32 %v3205, 5
        %v3207 = vand.u32 %v3205, 31
        %v3208 = vsub.s32 32, %v3207
        %v3209 = vshrl.u32 683565275, %v3208
        %v3210 = vshll.u32 683565275, %v3207
        %v3211 = vshrl.u32 2475754826, %v3208
        %v3212 = vor.u32 %v3210, %v3211
        %v3213 = vshll.u32 2475754826, %v3207
        %v3214 = vshrl.u32 2131351028, %v3208
        %v3215 = vor.u32 %v3213, %v3214
        %v3216 = vshll.u32 2131351028, %v3207
        %v3217 = vshrl.u32 2102212464, %v3208
        %v3218 = vor.u32 %v3216, %v3217
        %v3219 = vshll.u32 2102212464, %v3207
        %v3220 = vshrl.u32 920167782, %v3208
        %v3221 = vor.u32 %v3219, %v3220
        %v3222 = vshll.u32 920167782, %v3207
        %v3223 = vshrl.u32 1326507024, %v3208
        %v3224 = vor.u32 %v3222, %v3223
        %vm3225 = vcmp.lt.s32.totalorder %v3206, 1
        %vm3226 = vcmp.lt.s32.totalorder %v3206, 2
        %vm3227 = vcmp.lt.s32.totalorder %v3206, 3
        %vm3228 = vcmp.lt.s32.totalorder %v3206, 4
        %v3229 = vsel %vm3225, %v3209, %v3212
        %v3230 = vsel %vm3228, %v3218, 2102212464
        %v3231 = vsel %vm3227, %v3215, %v3230
        %v3232 = vsel %vm3226, %v3229, %v3231
        %v3233 = vsel %vm3225, %v3212, %v3215
        %v3234 = vsel %vm3228, %v3221, 920167782
        %v3235 = vsel %vm3227, %v3218, %v3234
        %v3236 = vsel %vm3226, %v3233, %v3235
        %v3237 = vsel %vm3225, %v3215, %v3218
        %v3238 = vsel %vm3228, %v3224, 1326507024
        %v3239 = vsel %vm3227, %v3221, %v3238
        %v3240 = vsel %vm3226, %v3237, %v3239
        %v3241 = vshll.u32 %v3201, 8
        %v3242 = vmul.u32.u64.compose %v3241, %v3240
        %v3243 = vextract.low.u32 %v3242
        %v3244 = vextract.high.u32 %v3242
        %v3245 = vmul.u32.u64.compose %v3241, %v3236
        %v3246 = vextract.low.u32 %v3245
        %v3247 = vextract.high.u32 %v3245
        %v3248 = vmul.u32 %v3241, %v3232
        %v3249 = vadd.s32 %v3244, %v3246
        %vm3250 = vc.u32 %v3244, %v3246
        %v3251 = vadd.s32 %v3247, 1
        %v3252 = vsel %vm3250, %v3251, %v3247
        %v3253 = vadd.s32 %v3248, %v3252
        %v3254 = vadd.s32 %v3253, 536870912
        %v3255 = vshrl.u32 %v3254, 30
        %v3256 = vshll.u32 %v3255, 30
        %v3257 = vsub.s32 %v3253, %v3256
        %vm3258 = vcmp.lt.s32.totalorder %v3257, 0
        %v3259 = vsub.s32 0, %v3257
        %v3260 = vsel %vm3258, %v3259, %v3257
        %v3261 = vclz %v3260
        %v3262 = vsub.s32 %v3261, 2
        %vm3263 = vcmp.gt.s32.totalorder 0, %v3262
        %v3264 = vsel %vm3263, 0, %v3262
        %v3265 = vsub.s32 32, %v3264
        %v3266 = vshll.u32 %v3257, %v3264
        %v3267 = vshrl.u32 %v3249, %v3265
        %v3268 = vor.u32 %v3266, %v3267
        %v3269 = vsub.s32 4294967266, %v3264
        %v3270 = vadd.s32 %v3269, 127
        %v3271 = vshll.u32 %v3270, 23
        %v3272 = vor.u32 4788187, %v3271
        %v3273 = vand.u32 2147483647, %v3272
        %v3275 = vcvt.s32.f32 %v3268
        %v3276 = vmul.f32 %v3275, %v3273
        %v3277 = vxor.u32 %v3276, 2147483648
        %v3278 = vsel %vm3195, %v3277, %v3276
        %v3279 = vsub.s32 4, %v3255
        %v3280 = vsel %vm3195, %v3279, %v3255
        %v3281 = vsel %vm3194, %v2456, %v3278
        %v3282 = vsel %vm3194, 0, %v3280
        %v3283 = vcosq.f32.pop %v3281
        %v3284 = vsinq.f32.pop %v3281
        %vm3285 = vweird.f32 %v2456
        %v3286 = vadd.s32 %v3282, 3
        %v3287 = vand.u32 %v3286, 3
        %vm3288 = vcmp.lt.s32.totalorder %v3287, 2
        %vm3289 = vcmp.eq.s32.totalorder %v3287, 0
        %v3290 = vxor.u32 %v3284, 2147483648
        %v3291 = vsel %vm3289, %v3283, %v3290
        %vm3292 = vcmp.eq.s32.totalorder %v3287, 2
        %v3293 = vxor.u32 %v3283, 2147483648
        %v3294 = vsel %vm3292, %v3293, %v3284
        %v3295 = vsel %vm3288, %v3291, %v3294
        %v3296 = vsel %vm3285, nan, %v3295
        %v3297 = vand.u32 2147483647, %v2457
        %vm3298 = vcmp.le.f32.partialorder %v3297, 0.7853982
        %vm3299 = vcmp.lt.s32.totalorder %v2457, 0
        %v3300 = vand.u32 %v2457, 2139095040
        %v3301 = vshrl.u32 %v3300, 23
        %v3302 = vsub.s32 %v3301, 127
        %v3303 = vand.u32 2147483647, %v2457
        %v3304 = vand.u32 %v3303, 8388607
        %v3305 = vor.u32 %v3304, 8388608
        %v3306 = vsub.s32 0, %v3305
        %v3307 = vadd.s32 %v3302, 1
        %vm3308 = vcmp.gt.s32.totalorder %v3307, 0
        %v3309 = vsel %vm3308, %v3307, 0
        %v3310 = vshrl.u32 %v3309, 5
        %v3311 = vand.u32 %v3309, 31
        %v3312 = vsub.s32 32, %v3311
        %v3313 = vshrl.u32 683565275, %v3312
        %v3314 = vshll.u32 683565275, %v3311
        %v3315 = vshrl.u32 2475754826, %v3312
        %v3316 = vor.u32 %v3314, %v3315
        %v3317 = vshll.u32 2475754826, %v3311
        %v3318 = vshrl.u32 2131351028, %v3312
        %v3319 = vor.u32 %v3317, %v3318
        %v3320 = vshll.u32 2131351028, %v3311
        %v3321 = vshrl.u32 2102212464, %v3312
        %v3322 = vor.u32 %v3320, %v3321
        %v3323 = vshll.u32 2102212464, %v3311
        %v3324 = vshrl.u32 920167782, %v3312
        %v3325 = vor.u32 %v3323, %v3324
        %v3326 = vshll.u32 920167782, %v3311
        %v3327 = vshrl.u32 1326507024, %v3312
        %v3328 = vor.u32 %v3326, %v3327
        %vm3329 = vcmp.lt.s32.totalorder %v3310, 1
        %vm3330 = vcmp.lt.s32.totalorder %v3310, 2
        %vm3331 = vcmp.lt.s32.totalorder %v3310, 3
        %vm3332 = vcmp.lt.s32.totalorder %v3310, 4
        %v3333 = vsel %vm3329, %v3313, %v3316
        %v3334 = vsel %vm3332, %v3322, 2102212464
        %v3335 = vsel %vm3331, %v3319, %v3334
        %v3336 = vsel %vm3330, %v3333, %v3335
        %v3337 = vsel %vm3329, %v3316, %v3319
        %v3338 = vsel %vm3332, %v3325, 920167782
        %v3339 = vsel %vm3331, %v3322, %v3338
        %v3340 = vsel %vm3330, %v3337, %v3339
        %v3341 = vsel %vm3329, %v3319, %v3322
        %v3342 = vsel %vm3332, %v3328, 1326507024
        %v3343 = vsel %vm3331, %v3325, %v3342
        %v3344 = vsel %vm3330, %v3341, %v3343
        %v3345 = vshll.u32 %v3305, 8
        %v3346 = vmul.u32.u64.compose %v3345, %v3344
        %v3347 = vextract.low.u32 %v3346
        %v3348 = vextract.high.u32 %v3346
        %v3349 = vmul.u32.u64.compose %v3345, %v3340
        %v3350 = vextract.low.u32 %v3349
        %v3351 = vextract.high.u32 %v3349
        %v3352 = vmul.u32 %v3345, %v3336
        %v3353 = vadd.s32 %v3348, %v3350
        %vm3354 = vc.u32 %v3348, %v3350
        %v3355 = vadd.s32 %v3351, 1
        %v3356 = vsel %vm3354, %v3355, %v3351
        %v3357 = vadd.s32 %v3352, %v3356
        %v3358 = vadd.s32 %v3357, 536870912
        %v3359 = vshrl.u32 %v3358, 30
        %v3360 = vshll.u32 %v3359, 30
        %v3361 = vsub.s32 %v3357, %v3360
        %vm3362 = vcmp.lt.s32.totalorder %v3361, 0
        %v3363 = vsub.s32 0, %v3361
        %v3364 = vsel %vm3362, %v3363, %v3361
        %v3365 = vclz %v3364
        %v3366 = vsub.s32 %v3365, 2
        %vm3367 = vcmp.gt.s32.totalorder 0, %v3366
        %v3368 = vsel %vm3367, 0, %v3366
        %v3369 = vsub.s32 32, %v3368
        %v3370 = vshll.u32 %v3361, %v3368
        %v3371 = vshrl.u32 %v3353, %v3369
        %v3372 = vor.u32 %v3370, %v3371
        %v3373 = vsub.s32 4294967266, %v3368
        %v3374 = vadd.s32 %v3373, 127
        %v3375 = vshll.u32 %v3374, 23
        %v3376 = vor.u32 4788187, %v3375
        %v3377 = vand.u32 2147483647, %v3376
        %v3379 = vcvt.s32.f32 %v3372
        %v3380 = vmul.f32 %v3379, %v3377
        %v3381 = vxor.u32 %v3380, 2147483648
        %v3382 = vsel %vm3299, %v3381, %v3380
        %v3383 = vsub.s32 4, %v3359
        %v3384 = vsel %vm3299, %v3383, %v3359
        %v3385 = vsel %vm3298, %v2457, %v3382
        %v3386 = vsel %vm3298, 0, %v3384
        %v3387 = vcosq.f32.pop %v3385
        %v3388 = vsinq.f32.pop %v3385
        %vm3389 = vweird.f32 %v2457
        %v3390 = vadd.s32 %v3386, 3
        %v3391 = vand.u32 %v3390, 3
        %vm3392 = vcmp.lt.s32.totalorder %v3391, 2
        %vm3393 = vcmp.eq.s32.totalorder %v3391, 0
        %v3394 = vxor.u32 %v3388, 2147483648
        %v3395 = vsel %vm3393, %v3387, %v3394
        %vm3396 = vcmp.eq.s32.totalorder %v3391, 2
        %v3397 = vxor.u32 %v3387, 2147483648
        %v3398 = vsel %vm3396, %v3397, %v3388
        %v3399 = vsel %vm3392, %v3395, %v3398
        %v3400 = vsel %vm3389, nan, %v3399
        %v3401 = vand.u32 2147483647, %v2458
        %vm3402 = vcmp.le.f32.partialorder %v3401, 0.7853982
        %vm3403 = vcmp.lt.s32.totalorder %v2458, 0
        %v3404 = vand.u32 %v2458, 2139095040
        %v3405 = vshrl.u32 %v3404, 23
        %v3406 = vsub.s32 %v3405, 127
        %v3407 = vand.u32 2147483647, %v2458
        %v3408 = vand.u32 %v3407, 8388607
        %v3409 = vor.u32 %v3408, 8388608
        %v3410 = vsub.s32 0, %v3409
        %v3411 = vadd.s32 %v3406, 1
        %vm3412 = vcmp.gt.s32.totalorder %v3411, 0
        %v3413 = vsel %vm3412, %v3411, 0
        %v3414 = vshrl.u32 %v3413, 5
        %v3415 = vand.u32 %v3413, 31
        %v3416 = vsub.s32 32, %v3415
        %v3417 = vshrl.u32 683565275, %v3416
        %v3418 = vshll.u32 683565275, %v3415
        %v3419 = vshrl.u32 2475754826, %v3416
        %v3420 = vor.u32 %v3418, %v3419
        %v3421 = vshll.u32 2475754826, %v3415
        %v3422 = vshrl.u32 2131351028, %v3416
        %v3423 = vor.u32 %v3421, %v3422
        %v3424 = vshll.u32 2131351028, %v3415
        %v3425 = vshrl.u32 2102212464, %v3416
        %v3426 = vor.u32 %v3424, %v3425
        %v3427 = vshll.u32 2102212464, %v3415
        %v3428 = vshrl.u32 920167782, %v3416
        %v3429 = vor.u32 %v3427, %v3428
        %v3430 = vshll.u32 920167782, %v3415
        %v3431 = vshrl.u32 1326507024, %v3416
        %v3432 = vor.u32 %v3430, %v3431
        %vm3433 = vcmp.lt.s32.totalorder %v3414, 1
        %vm3434 = vcmp.lt.s32.totalorder %v3414, 2
        %vm3435 = vcmp.lt.s32.totalorder %v3414, 3
        %vm3436 = vcmp.lt.s32.totalorder %v3414, 4
        %v3437 = vsel %vm3433, %v3417, %v3420
        %v3438 = vsel %vm3436, %v3426, 2102212464
        %v3439 = vsel %vm3435, %v3423, %v3438
        %v3440 = vsel %vm3434, %v3437, %v3439
        %v3441 = vsel %vm3433, %v3420, %v3423
        %v3442 = vsel %vm3436, %v3429, 920167782
        %v3443 = vsel %vm3435, %v3426, %v3442
        %v3444 = vsel %vm3434, %v3441, %v3443
        %v3445 = vsel %vm3433, %v3423, %v3426
        %v3446 = vsel %vm3436, %v3432, 1326507024
        %v3447 = vsel %vm3435, %v3429, %v3446
        %v3448 = vsel %vm3434, %v3445, %v3447
        %v3449 = vshll.u32 %v3409, 8
        %v3450 = vmul.u32.u64.compose %v3449, %v3448
        %v3451 = vextract.low.u32 %v3450
        %v3452 = vextract.high.u32 %v3450
        %v3453 = vmul.u32.u64.compose %v3449, %v3444
        %v3454 = vextract.low.u32 %v3453
        %v3455 = vextract.high.u32 %v3453
        %v3456 = vmul.u32 %v3449, %v3440
        %v3457 = vadd.s32 %v3452, %v3454
        %vm3458 = vc.u32 %v3452, %v3454
        %v3459 = vadd.s32 %v3455, 1
        %v3460 = vsel %vm3458, %v3459, %v3455
        %v3461 = vadd.s32 %v3456, %v3460
        %v3462 = vadd.s32 %v3461, 536870912
        %v3463 = vshrl.u32 %v3462, 30
        %v3464 = vshll.u32 %v3463, 30
        %v3465 = vsub.s32 %v3461, %v3464
        %vm3466 = vcmp.lt.s32.totalorder %v3465, 0
        %v3467 = vsub.s32 0, %v3465
        %v3468 = vsel %vm3466, %v3467, %v3465
        %v3469 = vclz %v3468
        %v3470 = vsub.s32 %v3469, 2
        %vm3471 = vcmp.gt.s32.totalorder 0, %v3470
        %v3472 = vsel %vm3471, 0, %v3470
        %v3473 = vsub.s32 32, %v3472
        %v3474 = vshll.u32 %v3465, %v3472
        %v3475 = vshrl.u32 %v3457, %v3473
        %v3476 = vor.u32 %v3474, %v3475
        %v3477 = vsub.s32 4294967266, %v3472
        %v3478 = vadd.s32 %v3477, 127
        %v3479 = vshll.u32 %v3478, 23
        %v3480 = vor.u32 4788187, %v3479
        %v3481 = vand.u32 2147483647, %v3480
        %v3483 = vcvt.s32.f32 %v3476
        %v3484 = vmul.f32 %v3483, %v3481
        %v3485 = vxor.u32 %v3484, 2147483648
        %v3486 = vsel %vm3403, %v3485, %v3484
        %v3487 = vsub.s32 4, %v3463
        %v3488 = vsel %vm3403, %v3487, %v3463
        %v3489 = vsel %vm3402, %v2458, %v3486
        %v3490 = vsel %vm3402, 0, %v3488
        %v3491 = vcosq.f32.pop %v3489
        %v3492 = vsinq.f32.pop %v3489
        %vm3493 = vweird.f32 %v2458
        %v3494 = vadd.s32 %v3490, 3
        %v3495 = vand.u32 %v3494, 3
        %vm3496 = vcmp.lt.s32.totalorder %v3495, 2
        %vm3497 = vcmp.eq.s32.totalorder %v3495, 0
        %v3498 = vxor.u32 %v3492, 2147483648
        %v3499 = vsel %vm3497, %v3491, %v3498
        %vm3500 = vcmp.eq.s32.totalorder %v3495, 2
        %v3501 = vxor.u32 %v3491, 2147483648
        %v3502 = vsel %vm3500, %v3501, %v3492
        %v3503 = vsel %vm3496, %v3499, %v3502
        %v3504 = vsel %vm3493, nan, %v3503
        %v3505 = vand.u32 2147483647, %v2459
        %vm3506 = vcmp.le.f32.partialorder %v3505, 0.7853982
        %vm3507 = vcmp.lt.s32.totalorder %v2459, 0
        %v3508 = vand.u32 %v2459, 2139095040
        %v3509 = vshrl.u32 %v3508, 23
        %v3510 = vsub.s32 %v3509, 127
        %v3511 = vand.u32 2147483647, %v2459
        %v3512 = vand.u32 %v3511, 8388607
        %v3513 = vor.u32 %v3512, 8388608
        %v3514 = vsub.s32 0, %v3513
        %v3515 = vadd.s32 %v3510, 1
        %vm3516 = vcmp.gt.s32.totalorder %v3515, 0
        %v3517 = vsel %vm3516, %v3515, 0
        %v3518 = vshrl.u32 %v3517, 5
        %v3519 = vand.u32 %v3517, 31
        %v3520 = vsub.s32 32, %v3519
        %v3521 = vshrl.u32 683565275, %v3520
        %v3522 = vshll.u32 683565275, %v3519
        %v3523 = vshrl.u32 2475754826, %v3520
        %v3524 = vor.u32 %v3522, %v3523
        %v3525 = vshll.u32 2475754826, %v3519
        %v3526 = vshrl.u32 2131351028, %v3520
        %v3527 = vor.u32 %v3525, %v3526
        %v3528 = vshll.u32 2131351028, %v3519
        %v3529 = vshrl.u32 2102212464, %v3520
        %v3530 = vor.u32 %v3528, %v3529
        %v3531 = vshll.u32 2102212464, %v3519
        %v3532 = vshrl.u32 920167782, %v3520
        %v3533 = vor.u32 %v3531, %v3532
        %v3534 = vshll.u32 920167782, %v3519
        %v3535 = vshrl.u32 1326507024, %v3520
        %v3536 = vor.u32 %v3534, %v3535
        %vm3537 = vcmp.lt.s32.totalorder %v3518, 1
        %vm3538 = vcmp.lt.s32.totalorder %v3518, 2
        %vm3539 = vcmp.lt.s32.totalorder %v3518, 3
        %vm3540 = vcmp.lt.s32.totalorder %v3518, 4
        %v3541 = vsel %vm3537, %v3521, %v3524
        %v3542 = vsel %vm3540, %v3530, 2102212464
        %v3543 = vsel %vm3539, %v3527, %v3542
        %v3544 = vsel %vm3538, %v3541, %v3543
        %v3545 = vsel %vm3537, %v3524, %v3527
        %v3546 = vsel %vm3540, %v3533, 920167782
        %v3547 = vsel %vm3539, %v3530, %v3546
        %v3548 = vsel %vm3538, %v3545, %v3547
        %v3549 = vsel %vm3537, %v3527, %v3530
        %v3550 = vsel %vm3540, %v3536, 1326507024
        %v3551 = vsel %vm3539, %v3533, %v3550
        %v3552 = vsel %vm3538, %v3549, %v3551
        %v3553 = vshll.u32 %v3513, 8
        %v3554 = vmul.u32.u64.compose %v3553, %v3552
        %v3555 = vextract.low.u32 %v3554
        %v3556 = vextract.high.u32 %v3554
        %v3557 = vmul.u32.u64.compose %v3553, %v3548
        %v3558 = vextract.low.u32 %v3557
        %v3559 = vextract.high.u32 %v3557
        %v3560 = vmul.u32 %v3553, %v3544
        %v3561 = vadd.s32 %v3556, %v3558
        %vm3562 = vc.u32 %v3556, %v3558
        %v3563 = vadd.s32 %v3559, 1
        %v3564 = vsel %vm3562, %v3563, %v3559
        %v3565 = vadd.s32 %v3560, %v3564
        %v3566 = vadd.s32 %v3565, 536870912
        %v3567 = vshrl.u32 %v3566, 30
        %v3568 = vshll.u32 %v3567, 30
        %v3569 = vsub.s32 %v3565, %v3568
        %vm3570 = vcmp.lt.s32.totalorder %v3569, 0
        %v3571 = vsub.s32 0, %v3569
        %v3572 = vsel %vm3570, %v3571, %v3569
        %v3573 = vclz %v3572
        %v3574 = vsub.s32 %v3573, 2
        %vm3575 = vcmp.gt.s32.totalorder 0, %v3574
        %v3576 = vsel %vm3575, 0, %v3574
        %v3577 = vsub.s32 32, %v3576
        %v3578 = vshll.u32 %v3569, %v3576
        %v3579 = vshrl.u32 %v3561, %v3577
        %v3580 = vor.u32 %v3578, %v3579
        %v3581 = vsub.s32 4294967266, %v3576
        %v3582 = vadd.s32 %v3581, 127
        %v3583 = vshll.u32 %v3582, 23
        %v3584 = vor.u32 4788187, %v3583
        %v3585 = vand.u32 2147483647, %v3584
        %v3587 = vcvt.s32.f32 %v3580
        %v3588 = vmul.f32 %v3587, %v3585
        %v3589 = vxor.u32 %v3588, 2147483648
        %v3590 = vsel %vm3507, %v3589, %v3588
        %v3591 = vsub.s32 4, %v3567
        %v3592 = vsel %vm3507, %v3591, %v3567
        %v3593 = vsel %vm3506, %v2459, %v3590
        %v3594 = vsel %vm3506, 0, %v3592
        %v3595 = vcosq.f32.pop %v3593
        %v3596 = vsinq.f32.pop %v3593
        %vm3597 = vweird.f32 %v2459
        %v3598 = vadd.s32 %v3594, 3
        %v3599 = vand.u32 %v3598, 3
        %vm3600 = vcmp.lt.s32.totalorder %v3599, 2
        %vm3601 = vcmp.eq.s32.totalorder %v3599, 0
        %v3602 = vxor.u32 %v3596, 2147483648
        %v3603 = vsel %vm3601, %v3595, %v3602
        %vm3604 = vcmp.eq.s32.totalorder %v3599, 2
        %v3605 = vxor.u32 %v3595, 2147483648
        %v3606 = vsel %vm3604, %v3605, %v3596
        %v3607 = vsel %vm3600, %v3603, %v3606
        %v3608 = vsel %vm3597, nan, %v3607
        %v3609 = vand.u32 2147483647, %v2460
        %vm3610 = vcmp.le.f32.partialorder %v3609, 0.7853982
        %vm3611 = vcmp.lt.s32.totalorder %v2460, 0
        %v3612 = vand.u32 %v2460, 2139095040
        %v3613 = vshrl.u32 %v3612, 23
        %v3614 = vsub.s32 %v3613, 127
        %v3615 = vand.u32 2147483647, %v2460
        %v3616 = vand.u32 %v3615, 8388607
        %v3617 = vor.u32 %v3616, 8388608
        %v3618 = vsub.s32 0, %v3617
        %v3619 = vadd.s32 %v3614, 1
        %vm3620 = vcmp.gt.s32.totalorder %v3619, 0
        %v3621 = vsel %vm3620, %v3619, 0
        %v3622 = vshrl.u32 %v3621, 5
        %v3623 = vand.u32 %v3621, 31
        %v3624 = vsub.s32 32, %v3623
        %v3625 = vshrl.u32 683565275, %v3624
        %v3626 = vshll.u32 683565275, %v3623
        %v3627 = vshrl.u32 2475754826, %v3624
        %v3628 = vor.u32 %v3626, %v3627
        %v3629 = vshll.u32 2475754826, %v3623
        %v3630 = vshrl.u32 2131351028, %v3624
        %v3631 = vor.u32 %v3629, %v3630
        %v3632 = vshll.u32 2131351028, %v3623
        %v3633 = vshrl.u32 2102212464, %v3624
        %v3634 = vor.u32 %v3632, %v3633
        %v3635 = vshll.u32 2102212464, %v3623
        %v3636 = vshrl.u32 920167782, %v3624
        %v3637 = vor.u32 %v3635, %v3636
        %v3638 = vshll.u32 920167782, %v3623
        %v3639 = vshrl.u32 1326507024, %v3624
        %v3640 = vor.u32 %v3638, %v3639
        %vm3641 = vcmp.lt.s32.totalorder %v3622, 1
        %vm3642 = vcmp.lt.s32.totalorder %v3622, 2
        %vm3643 = vcmp.lt.s32.totalorder %v3622, 3
        %vm3644 = vcmp.lt.s32.totalorder %v3622, 4
        %v3645 = vsel %vm3641, %v3625, %v3628
        %v3646 = vsel %vm3644, %v3634, 2102212464
        %v3647 = vsel %vm3643, %v3631, %v3646
        %v3648 = vsel %vm3642, %v3645, %v3647
        %v3649 = vsel %vm3641, %v3628, %v3631
        %v3650 = vsel %vm3644, %v3637, 920167782
        %v3651 = vsel %vm3643, %v3634, %v3650
        %v3652 = vsel %vm3642, %v3649, %v3651
        %v3653 = vsel %vm3641, %v3631, %v3634
        %v3654 = vsel %vm3644, %v3640, 1326507024
        %v3655 = vsel %vm3643, %v3637, %v3654
        %v3656 = vsel %vm3642, %v3653, %v3655
        %v3657 = vshll.u32 %v3617, 8
        %v3658 = vmul.u32.u64.compose %v3657, %v3656
        %v3659 = vextract.low.u32 %v3658
        %v3660 = vextract.high.u32 %v3658
        %v3661 = vmul.u32.u64.compose %v3657, %v3652
        %v3662 = vextract.low.u32 %v3661
        %v3663 = vextract.high.u32 %v3661
        %v3664 = vmul.u32 %v3657, %v3648
        %v3665 = vadd.s32 %v3660, %v3662
        %vm3666 = vc.u32 %v3660, %v3662
        %v3667 = vadd.s32 %v3663, 1
        %v3668 = vsel %vm3666, %v3667, %v3663
        %v3669 = vadd.s32 %v3664, %v3668
        %v3670 = vadd.s32 %v3669, 536870912
        %v3671 = vshrl.u32 %v3670, 30
        %v3672 = vshll.u32 %v3671, 30
        %v3673 = vsub.s32 %v3669, %v3672
        %vm3674 = vcmp.lt.s32.totalorder %v3673, 0
        %v3675 = vsub.s32 0, %v3673
        %v3676 = vsel %vm3674, %v3675, %v3673
        %v3677 = vclz %v3676
        %v3678 = vsub.s32 %v3677, 2
        %vm3679 = vcmp.gt.s32.totalorder 0, %v3678
        %v3680 = vsel %vm3679, 0, %v3678
        %v3681 = vsub.s32 32, %v3680
        %v3682 = vshll.u32 %v3673, %v3680
        %v3683 = vshrl.u32 %v3665, %v3681
        %v3684 = vor.u32 %v3682, %v3683
        %v3685 = vsub.s32 4294967266, %v3680
        %v3686 = vadd.s32 %v3685, 127
        %v3687 = vshll.u32 %v3686, 23
        %v3688 = vor.u32 4788187, %v3687
        %v3689 = vand.u32 2147483647, %v3688
        %v3691 = vcvt.s32.f32 %v3684
        %v3692 = vmul.f32 %v3691, %v3689
        %v3693 = vxor.u32 %v3692, 2147483648
        %v3694 = vsel %vm3611, %v3693, %v3692
        %v3695 = vsub.s32 4, %v3671
        %v3696 = vsel %vm3611, %v3695, %v3671
        %v3697 = vsel %vm3610, %v2460, %v3694
        %v3698 = vsel %vm3610, 0, %v3696
        %v3699 = vcosq.f32.pop %v3697
        %v3700 = vsinq.f32.pop %v3697
        %vm3701 = vweird.f32 %v2460
        %v3702 = vadd.s32 %v3698, 3
        %v3703 = vand.u32 %v3702, 3
        %vm3704 = vcmp.lt.s32.totalorder %v3703, 2
        %vm3705 = vcmp.eq.s32.totalorder %v3703, 0
        %v3706 = vxor.u32 %v3700, 2147483648
        %v3707 = vsel %vm3705, %v3699, %v3706
        %vm3708 = vcmp.eq.s32.totalorder %v3703, 2
        %v3709 = vxor.u32 %v3699, 2147483648
        %v3710 = vsel %vm3708, %v3709, %v3700
        %v3711 = vsel %vm3704, %v3707, %v3710
        %v3712 = vsel %vm3701, nan, %v3711
        %v3713 = vand.u32 2147483647, %v2461
        %vm3714 = vcmp.le.f32.partialorder %v3713, 0.7853982
        %vm3715 = vcmp.lt.s32.totalorder %v2461, 0
        %v3716 = vand.u32 %v2461, 2139095040
        %v3717 = vshrl.u32 %v3716, 23
        %v3718 = vsub.s32 %v3717, 127
        %v3719 = vand.u32 2147483647, %v2461
        %v3720 = vand.u32 %v3719, 8388607
        %v3721 = vor.u32 %v3720, 8388608
        %v3722 = vsub.s32 0, %v3721
        %v3723 = vadd.s32 %v3718, 1
        %vm3724 = vcmp.gt.s32.totalorder %v3723, 0
        %v3725 = vsel %vm3724, %v3723, 0
        %v3726 = vshrl.u32 %v3725, 5
        %v3727 = vand.u32 %v3725, 31
        %v3728 = vsub.s32 32, %v3727
        %v3729 = vshrl.u32 683565275, %v3728
        %v3730 = vshll.u32 683565275, %v3727
        %v3731 = vshrl.u32 2475754826, %v3728
        %v3732 = vor.u32 %v3730, %v3731
        %v3733 = vshll.u32 2475754826, %v3727
        %v3734 = vshrl.u32 2131351028, %v3728
        %v3735 = vor.u32 %v3733, %v3734
        %v3736 = vshll.u32 2131351028, %v3727
        %v3737 = vshrl.u32 2102212464, %v3728
        %v3738 = vor.u32 %v3736, %v3737
        %v3739 = vshll.u32 2102212464, %v3727
        %v3740 = vshrl.u32 920167782, %v3728
        %v3741 = vor.u32 %v3739, %v3740
        %v3742 = vshll.u32 920167782, %v3727
        %v3743 = vshrl.u32 1326507024, %v3728
        %v3744 = vor.u32 %v3742, %v3743
        %vm3745 = vcmp.lt.s32.totalorder %v3726, 1
        %vm3746 = vcmp.lt.s32.totalorder %v3726, 2
        %vm3747 = vcmp.lt.s32.totalorder %v3726, 3
        %vm3748 = vcmp.lt.s32.totalorder %v3726, 4
        %v3749 = vsel %vm3745, %v3729, %v3732
        %v3750 = vsel %vm3748, %v3738, 2102212464
        %v3751 = vsel %vm3747, %v3735, %v3750
        %v3752 = vsel %vm3746, %v3749, %v3751
        %v3753 = vsel %vm3745, %v3732, %v3735
        %v3754 = vsel %vm3748, %v3741, 920167782
        %v3755 = vsel %vm3747, %v3738, %v3754
        %v3756 = vsel %vm3746, %v3753, %v3755
        %v3757 = vsel %vm3745, %v3735, %v3738
        %v3758 = vsel %vm3748, %v3744, 1326507024
        %v3759 = vsel %vm3747, %v3741, %v3758
        %v3760 = vsel %vm3746, %v3757, %v3759
        %v3761 = vshll.u32 %v3721, 8
        %v3762 = vmul.u32.u64.compose %v3761, %v3760
        %v3763 = vextract.low.u32 %v3762
        %v3764 = vextract.high.u32 %v3762
        %v3765 = vmul.u32.u64.compose %v3761, %v3756
        %v3766 = vextract.low.u32 %v3765
        %v3767 = vextract.high.u32 %v3765
        %v3768 = vmul.u32 %v3761, %v3752
        %v3769 = vadd.s32 %v3764, %v3766
        %vm3770 = vc.u32 %v3764, %v3766
        %v3771 = vadd.s32 %v3767, 1
        %v3772 = vsel %vm3770, %v3771, %v3767
        %v3773 = vadd.s32 %v3768, %v3772
        %v3774 = vadd.s32 %v3773, 536870912
        %v3775 = vshrl.u32 %v3774, 30
        %v3776 = vshll.u32 %v3775, 30
        %v3777 = vsub.s32 %v3773, %v3776
        %vm3778 = vcmp.lt.s32.totalorder %v3777, 0
        %v3779 = vsub.s32 0, %v3777
        %v3780 = vsel %vm3778, %v3779, %v3777
        %v3781 = vclz %v3780
        %v3782 = vsub.s32 %v3781, 2
        %vm3783 = vcmp.gt.s32.totalorder 0, %v3782
        %v3784 = vsel %vm3783, 0, %v3782
        %v3785 = vsub.s32 32, %v3784
        %v3786 = vshll.u32 %v3777, %v3784
        %v3787 = vshrl.u32 %v3769, %v3785
        %v3788 = vor.u32 %v3786, %v3787
        %v3789 = vsub.s32 4294967266, %v3784
        %v3790 = vadd.s32 %v3789, 127
        %v3791 = vshll.u32 %v3790, 23
        %v3792 = vor.u32 4788187, %v3791
        %v3793 = vand.u32 2147483647, %v3792
        %v3795 = vcvt.s32.f32 %v3788
        %v3796 = vmul.f32 %v3795, %v3793
        %v3797 = vxor.u32 %v3796, 2147483648
        %v3798 = vsel %vm3715, %v3797, %v3796
        %v3799 = vsub.s32 4, %v3775
        %v3800 = vsel %vm3715, %v3799, %v3775
        %v3801 = vsel %vm3714, %v2461, %v3798
        %v3802 = vsel %vm3714, 0, %v3800
        %v3803 = vcosq.f32.pop %v3801
        %v3804 = vsinq.f32.pop %v3801
        %vm3805 = vweird.f32 %v2461
        %v3806 = vadd.s32 %v3802, 3
        %v3807 = vand.u32 %v3806, 3
        %vm3808 = vcmp.lt.s32.totalorder %v3807, 2
        %vm3809 = vcmp.eq.s32.totalorder %v3807, 0
        %v3810 = vxor.u32 %v3804, 2147483648
        %v3811 = vsel %vm3809, %v3803, %v3810
        %vm3812 = vcmp.eq.s32.totalorder %v3807, 2
        %v3813 = vxor.u32 %v3803, 2147483648
        %v3814 = vsel %vm3812, %v3813, %v3804
        %v3815 = vsel %vm3808, %v3811, %v3814
        %v3816 = vsel %vm3805, nan, %v3815
        %v3817 = vand.u32 2147483647, %v2462
        %vm3818 = vcmp.le.f32.partialorder %v3817, 0.7853982
        %vm3819 = vcmp.lt.s32.totalorder %v2462, 0
        %v3820 = vand.u32 %v2462, 2139095040
        %v3821 = vshrl.u32 %v3820, 23
        %v3822 = vsub.s32 %v3821, 127
        %v3823 = vand.u32 2147483647, %v2462
        %v3824 = vand.u32 %v3823, 8388607
        %v3825 = vor.u32 %v3824, 8388608
        %v3826 = vsub.s32 0, %v3825
        %v3827 = vadd.s32 %v3822, 1
        %vm3828 = vcmp.gt.s32.totalorder %v3827, 0
        %v3829 = vsel %vm3828, %v3827, 0
        %v3830 = vshrl.u32 %v3829, 5
        %v3831 = vand.u32 %v3829, 31
        %v3832 = vsub.s32 32, %v3831
        %v3833 = vshrl.u32 683565275, %v3832
        %v3834 = vshll.u32 683565275, %v3831
        %v3835 = vshrl.u32 2475754826, %v3832
        %v3836 = vor.u32 %v3834, %v3835
        %v3837 = vshll.u32 2475754826, %v3831
        %v3838 = vshrl.u32 2131351028, %v3832
        %v3839 = vor.u32 %v3837, %v3838
        %v3840 = vshll.u32 2131351028, %v3831
        %v3841 = vshrl.u32 2102212464, %v3832
        %v3842 = vor.u32 %v3840, %v3841
        %v3843 = vshll.u32 2102212464, %v3831
        %v3844 = vshrl.u32 920167782, %v3832
        %v3845 = vor.u32 %v3843, %v3844
        %v3846 = vshll.u32 920167782, %v3831
        %v3847 = vshrl.u32 1326507024, %v3832
        %v3848 = vor.u32 %v3846, %v3847
        %vm3849 = vcmp.lt.s32.totalorder %v3830, 1
        %vm3850 = vcmp.lt.s32.totalorder %v3830, 2
        %vm3851 = vcmp.lt.s32.totalorder %v3830, 3
        %vm3852 = vcmp.lt.s32.totalorder %v3830, 4
        %v3853 = vsel %vm3849, %v3833, %v3836
        %v3854 = vsel %vm3852, %v3842, 2102212464
        %v3855 = vsel %vm3851, %v3839, %v3854
        %v3856 = vsel %vm3850, %v3853, %v3855
        %v3857 = vsel %vm3849, %v3836, %v3839
        %v3858 = vsel %vm3852, %v3845, 920167782
        %v3859 = vsel %vm3851, %v3842, %v3858
        %v3860 = vsel %vm3850, %v3857, %v3859
        %v3861 = vsel %vm3849, %v3839, %v3842
        %v3862 = vsel %vm3852, %v3848, 1326507024
        %v3863 = vsel %vm3851, %v3845, %v3862
        %v3864 = vsel %vm3850, %v3861, %v3863
        %v3865 = vshll.u32 %v3825, 8
        %v3866 = vmul.u32.u64.compose %v3865, %v3864
        %v3867 = vextract.low.u32 %v3866
        %v3868 = vextract.high.u32 %v3866
        %v3869 = vmul.u32.u64.compose %v3865, %v3860
        %v3870 = vextract.low.u32 %v3869
        %v3871 = vextract.high.u32 %v3869
        %v3872 = vmul.u32 %v3865, %v3856
        %v3873 = vadd.s32 %v3868, %v3870
        %vm3874 = vc.u32 %v3868, %v3870
        %v3875 = vadd.s32 %v3871, 1
        %v3876 = vsel %vm3874, %v3875, %v3871
        %v3877 = vadd.s32 %v3872, %v3876
        %v3878 = vadd.s32 %v3877, 536870912
        %v3879 = vshrl.u32 %v3878, 30
        %v3880 = vshll.u32 %v3879, 30
        %v3881 = vsub.s32 %v3877, %v3880
        %vm3882 = vcmp.lt.s32.totalorder %v3881, 0
        %v3883 = vsub.s32 0, %v3881
        %v3884 = vsel %vm3882, %v3883, %v3881
        %v3885 = vclz %v3884
        %v3886 = vsub.s32 %v3885, 2
        %vm3887 = vcmp.gt.s32.totalorder 0, %v3886
        %v3888 = vsel %vm3887, 0, %v3886
        %v3889 = vsub.s32 32, %v3888
        %v3890 = vshll.u32 %v3881, %v3888
        %v3891 = vshrl.u32 %v3873, %v3889
        %v3892 = vor.u32 %v3890, %v3891
        %v3893 = vsub.s32 4294967266, %v3888
        %v3894 = vadd.s32 %v3893, 127
        %v3895 = vshll.u32 %v3894, 23
        %v3896 = vor.u32 4788187, %v3895
        %v3897 = vand.u32 2147483647, %v3896
        %v3899 = vcvt.s32.f32 %v3892
        %v3900 = vmul.f32 %v3899, %v3897
        %v3901 = vxor.u32 %v3900, 2147483648
        %v3902 = vsel %vm3819, %v3901, %v3900
        %v3903 = vsub.s32 4, %v3879
        %v3904 = vsel %vm3819, %v3903, %v3879
        %v3905 = vsel %vm3818, %v2462, %v3902
        %v3906 = vsel %vm3818, 0, %v3904
        %v3907 = vcosq.f32.pop %v3905
        %v3908 = vsinq.f32.pop %v3905
        %vm3909 = vweird.f32 %v2462
        %v3910 = vadd.s32 %v3906, 3
        %v3911 = vand.u32 %v3910, 3
        %vm3912 = vcmp.lt.s32.totalorder %v3911, 2
        %vm3913 = vcmp.eq.s32.totalorder %v3911, 0
        %v3914 = vxor.u32 %v3908, 2147483648
        %v3915 = vsel %vm3913, %v3907, %v3914
        %vm3916 = vcmp.eq.s32.totalorder %v3911, 2
        %v3917 = vxor.u32 %v3907, 2147483648
        %v3918 = vsel %vm3916, %v3917, %v3908
        %v3919 = vsel %vm3912, %v3915, %v3918
        %v3920 = vsel %vm3909, nan, %v3919
        %v3921 = vand.u32 2147483647, %v2463
        %vm3922 = vcmp.le.f32.partialorder %v3921, 0.7853982
        %vm3923 = vcmp.lt.s32.totalorder %v2463, 0
        %v3924 = vand.u32 %v2463, 2139095040
        %v3925 = vshrl.u32 %v3924, 23
        %v3926 = vsub.s32 %v3925, 127
        %v3927 = vand.u32 2147483647, %v2463
        %v3928 = vand.u32 %v3927, 8388607
        %v3929 = vor.u32 %v3928, 8388608
        %v3930 = vsub.s32 0, %v3929
        %v3931 = vadd.s32 %v3926, 1
        %vm3932 = vcmp.gt.s32.totalorder %v3931, 0
        %v3933 = vsel %vm3932, %v3931, 0
        %v3934 = vshrl.u32 %v3933, 5
        %v3935 = vand.u32 %v3933, 31
        %v3936 = vsub.s32 32, %v3935
        %v3937 = vshrl.u32 683565275, %v3936
        %v3938 = vshll.u32 683565275, %v3935
        %v3939 = vshrl.u32 2475754826, %v3936
        %v3940 = vor.u32 %v3938, %v3939
        %v3941 = vshll.u32 2475754826, %v3935
        %v3942 = vshrl.u32 2131351028, %v3936
        %v3943 = vor.u32 %v3941, %v3942
        %v3944 = vshll.u32 2131351028, %v3935
        %v3945 = vshrl.u32 2102212464, %v3936
        %v3946 = vor.u32 %v3944, %v3945
        %v3947 = vshll.u32 2102212464, %v3935
        %v3948 = vshrl.u32 920167782, %v3936
        %v3949 = vor.u32 %v3947, %v3948
        %v3950 = vshll.u32 920167782, %v3935
        %v3951 = vshrl.u32 1326507024, %v3936
        %v3952 = vor.u32 %v3950, %v3951
        %vm3953 = vcmp.lt.s32.totalorder %v3934, 1
        %vm3954 = vcmp.lt.s32.totalorder %v3934, 2
        %vm3955 = vcmp.lt.s32.totalorder %v3934, 3
        %vm3956 = vcmp.lt.s32.totalorder %v3934, 4
        %v3957 = vsel %vm3953, %v3937, %v3940
        %v3958 = vsel %vm3956, %v3946, 2102212464
        %v3959 = vsel %vm3955, %v3943, %v3958
        %v3960 = vsel %vm3954, %v3957, %v3959
        %v3961 = vsel %vm3953, %v3940, %v3943
        %v3962 = vsel %vm3956, %v3949, 920167782
        %v3963 = vsel %vm3955, %v3946, %v3962
        %v3964 = vsel %vm3954, %v3961, %v3963
        %v3965 = vsel %vm3953, %v3943, %v3946
        %v3966 = vsel %vm3956, %v3952, 1326507024
        %v3967 = vsel %vm3955, %v3949, %v3966
        %v3968 = vsel %vm3954, %v3965, %v3967
        %v3969 = vshll.u32 %v3929, 8
        %v3970 = vmul.u32.u64.compose %v3969, %v3968
        %v3971 = vextract.low.u32 %v3970
        %v3972 = vextract.high.u32 %v3970
        %v3973 = vmul.u32.u64.compose %v3969, %v3964
        %v3974 = vextract.low.u32 %v3973
        %v3975 = vextract.high.u32 %v3973
        %v3976 = vmul.u32 %v3969, %v3960
        %v3977 = vadd.s32 %v3972, %v3974
        %vm3978 = vc.u32 %v3972, %v3974
        %v3979 = vadd.s32 %v3975, 1
        %v3980 = vsel %vm3978, %v3979, %v3975
        %v3981 = vadd.s32 %v3976, %v3980
        %v3982 = vadd.s32 %v3981, 536870912
        %v3983 = vshrl.u32 %v3982, 30
        %v3984 = vshll.u32 %v3983, 30
        %v3985 = vsub.s32 %v3981, %v3984
        %vm3986 = vcmp.lt.s32.totalorder %v3985, 0
        %v3987 = vsub.s32 0, %v3985
        %v3988 = vsel %vm3986, %v3987, %v3985
        %v3989 = vclz %v3988
        %v3990 = vsub.s32 %v3989, 2
        %vm3991 = vcmp.gt.s32.totalorder 0, %v3990
        %v3992 = vsel %vm3991, 0, %v3990
        %v3993 = vsub.s32 32, %v3992
        %v3994 = vshll.u32 %v3985, %v3992
        %v3995 = vshrl.u32 %v3977, %v3993
        %v3996 = vor.u32 %v3994, %v3995
        %v3997 = vsub.s32 4294967266, %v3992
        %v3998 = vadd.s32 %v3997, 127
        %v3999 = vshll.u32 %v3998, 23
        %v4000 = vor.u32 4788187, %v3999
        %v4001 = vand.u32 2147483647, %v4000
        %v4003 = vcvt.s32.f32 %v3996
        %v4004 = vmul.f32 %v4003, %v4001
        %v4005 = vxor.u32 %v4004, 2147483648
        %v4006 = vsel %vm3923, %v4005, %v4004
        %v4007 = vsub.s32 4, %v3983
        %v4008 = vsel %vm3923, %v4007, %v3983
        %v4009 = vsel %vm3922, %v2463, %v4006
        %v4010 = vsel %vm3922, 0, %v4008
        %v4011 = vcosq.f32.pop %v4009
        %v4012 = vsinq.f32.pop %v4009
        %vm4013 = vweird.f32 %v2463
        %v4014 = vadd.s32 %v4010, 3
        %v4015 = vand.u32 %v4014, 3
        %vm4016 = vcmp.lt.s32.totalorder %v4015, 2
        %vm4017 = vcmp.eq.s32.totalorder %v4015, 0
        %v4018 = vxor.u32 %v4012, 2147483648
        %v4019 = vsel %vm4017, %v4011, %v4018
        %vm4020 = vcmp.eq.s32.totalorder %v4015, 2
        %v4021 = vxor.u32 %v4011, 2147483648
        %v4022 = vsel %vm4020, %v4021, %v4012
        %v4023 = vsel %vm4016, %v4019, %v4022
        %v4024 = vsel %vm4013, nan, %v4023
        %v4025 = vand.u32 2147483647, %v2464
        %vm4026 = vcmp.le.f32.partialorder %v4025, 0.7853982
        %vm4027 = vcmp.lt.s32.totalorder %v2464, 0
        %v4028 = vand.u32 %v2464, 2139095040
        %v4029 = vshrl.u32 %v4028, 23
        %v4030 = vsub.s32 %v4029, 127
        %v4031 = vand.u32 2147483647, %v2464
        %v4032 = vand.u32 %v4031, 8388607
        %v4033 = vor.u32 %v4032, 8388608
        %v4034 = vsub.s32 0, %v4033
        %v4035 = vadd.s32 %v4030, 1
        %vm4036 = vcmp.gt.s32.totalorder %v4035, 0
        %v4037 = vsel %vm4036, %v4035, 0
        %v4038 = vshrl.u32 %v4037, 5
        %v4039 = vand.u32 %v4037, 31
        %v4040 = vsub.s32 32, %v4039
        %v4041 = vshrl.u32 683565275, %v4040
        %v4042 = vshll.u32 683565275, %v4039
        %v4043 = vshrl.u32 2475754826, %v4040
        %v4044 = vor.u32 %v4042, %v4043
        %v4045 = vshll.u32 2475754826, %v4039
        %v4046 = vshrl.u32 2131351028, %v4040
        %v4047 = vor.u32 %v4045, %v4046
        %v4048 = vshll.u32 2131351028, %v4039
        %v4049 = vshrl.u32 2102212464, %v4040
        %v4050 = vor.u32 %v4048, %v4049
        %v4051 = vshll.u32 2102212464, %v4039
        %v4052 = vshrl.u32 920167782, %v4040
        %v4053 = vor.u32 %v4051, %v4052
        %v4054 = vshll.u32 920167782, %v4039
        %v4055 = vshrl.u32 1326507024, %v4040
        %v4056 = vor.u32 %v4054, %v4055
        %vm4057 = vcmp.lt.s32.totalorder %v4038, 1
        %vm4058 = vcmp.lt.s32.totalorder %v4038, 2
        %vm4059 = vcmp.lt.s32.totalorder %v4038, 3
        %vm4060 = vcmp.lt.s32.totalorder %v4038, 4
        %v4061 = vsel %vm4057, %v4041, %v4044
        %v4062 = vsel %vm4060, %v4050, 2102212464
        %v4063 = vsel %vm4059, %v4047, %v4062
        %v4064 = vsel %vm4058, %v4061, %v4063
        %v4065 = vsel %vm4057, %v4044, %v4047
        %v4066 = vsel %vm4060, %v4053, 920167782
        %v4067 = vsel %vm4059, %v4050, %v4066
        %v4068 = vsel %vm4058, %v4065, %v4067
        %v4069 = vsel %vm4057, %v4047, %v4050
        %v4070 = vsel %vm4060, %v4056, 1326507024
        %v4071 = vsel %vm4059, %v4053, %v4070
        %v4072 = vsel %vm4058, %v4069, %v4071
        %v4073 = vshll.u32 %v4033, 8
        %v4074 = vmul.u32.u64.compose %v4073, %v4072
        %v4075 = vextract.low.u32 %v4074
        %v4076 = vextract.high.u32 %v4074
        %v4077 = vmul.u32.u64.compose %v4073, %v4068
        %v4078 = vextract.low.u32 %v4077
        %v4079 = vextract.high.u32 %v4077
        %v4080 = vmul.u32 %v4073, %v4064
        %v4081 = vadd.s32 %v4076, %v4078
        %vm4082 = vc.u32 %v4076, %v4078
        %v4083 = vadd.s32 %v4079, 1
        %v4084 = vsel %vm4082, %v4083, %v4079
        %v4085 = vadd.s32 %v4080, %v4084
        %v4086 = vadd.s32 %v4085, 536870912
        %v4087 = vshrl.u32 %v4086, 30
        %v4088 = vshll.u32 %v4087, 30
        %v4089 = vsub.s32 %v4085, %v4088
        %vm4090 = vcmp.lt.s32.totalorder %v4089, 0
        %v4091 = vsub.s32 0, %v4089
        %v4092 = vsel %vm4090, %v4091, %v4089
        %v4093 = vclz %v4092
        %v4094 = vsub.s32 %v4093, 2
        %vm4095 = vcmp.gt.s32.totalorder 0, %v4094
        %v4096 = vsel %vm4095, 0, %v4094
        %v4097 = vsub.s32 32, %v4096
        %v4098 = vshll.u32 %v4089, %v4096
        %v4099 = vshrl.u32 %v4081, %v4097
        %v4100 = vor.u32 %v4098, %v4099
        %v4101 = vsub.s32 4294967266, %v4096
        %v4102 = vadd.s32 %v4101, 127
        %v4103 = vshll.u32 %v4102, 23
        %v4104 = vor.u32 4788187, %v4103
        %v4105 = vand.u32 2147483647, %v4104
        %v4107 = vcvt.s32.f32 %v4100
        %v4108 = vmul.f32 %v4107, %v4105
        %v4109 = vxor.u32 %v4108, 2147483648
        %v4110 = vsel %vm4027, %v4109, %v4108
        %v4111 = vsub.s32 4, %v4087
        %v4112 = vsel %vm4027, %v4111, %v4087
        %v4113 = vsel %vm4026, %v2464, %v4110
        %v4114 = vsel %vm4026, 0, %v4112
        %v4115 = vcosq.f32.pop %v4113
        %v4116 = vsinq.f32.pop %v4113
        %vm4117 = vweird.f32 %v2464
        %v4118 = vadd.s32 %v4114, 3
        %v4119 = vand.u32 %v4118, 3
        %vm4120 = vcmp.lt.s32.totalorder %v4119, 2
        %vm4121 = vcmp.eq.s32.totalorder %v4119, 0
        %v4122 = vxor.u32 %v4116, 2147483648
        %v4123 = vsel %vm4121, %v4115, %v4122
        %vm4124 = vcmp.eq.s32.totalorder %v4119, 2
        %v4125 = vxor.u32 %v4115, 2147483648
        %v4126 = vsel %vm4124, %v4125, %v4116
        %v4127 = vsel %vm4120, %v4123, %v4126
        %v4128 = vsel %vm4117, nan, %v4127
        %s4129 = scalar_lea.vmem [#allocation3], 32
        %v4130 = vld [vmem:[%s4129] sm:$0xff]
        %v4131 = vld [vmem:[%s4129 + $0x8] sm:$0xff]
        %v4132 = vld [vmem:[%s4129 + $0x10] sm:$0xff]
        %v4133 = vld [vmem:[%s4129 + $0x18] sm:$0xff]
        %4134 = vset.pattern.permute.xlu0 2
        %4135 = vperm.xlu0 %4134, %v518
        %v4136 = vpop.permute.xlu0 %4135
        %4138 = vset.pattern.permute.xlu0 2
        %4139 = vperm.xlu0 %4138, %v519
        %v4140 = vpop.permute.xlu0 %4139
        %4142 = vset.pattern.permute.xlu0 2
        %4143 = vperm.xlu0 %4142, %v520
        %v4144 = vpop.permute.xlu0 %4143
        %4146 = vset.pattern.permute.xlu0 2
        %4147 = vperm.xlu0 %4146, %v521
        %v4148 = vpop.permute.xlu0 %4147
        %v4151 = vsel %vm2258, %v4130, 0
        %v4154 = vsel %vm2258, %v4131, 0
        %v4157 = vsel %vm2258, %v4132, 0
        %v4160 = vsel %vm2258, %v4133, 0
        %4162 = vmatprep.subr.mxu0 %v2672
        %4163 = vmatpush1.msra.mxu0 %v2568
        %4164 = vmatprep.subr.mxu0 %v3088
        %4165 = vmatpush1.msra.mxu0 %v2984
        %4166 = vmatprep.subr.mxu0 %v3504
        %4167 = vmatpush1.msra.mxu0 %v3400
        %4168 = vmatprep.subr.mxu0 %v3920
        %4169 = vmatpush1.msra.mxu0 %v3816
        %4170 = vmatprep.subr.mxu0 0.0
        %4171 = vmatpush1.msra.mxu0 0.0
        %4172 = vmatprep.subr.mxu0 0.0
        %4173 = vmatpush1.msra.mxu0 0.0
        %4174 = vmatprep.subr.mxu0 0.0
        %4175 = vmatpush1.msra.mxu0 0.0
        %4176 = vmatprep.subr.mxu0 0.0
        %4177 = vmatpush1.msra.mxu0 0.0
        %4178 = vmatprep.subr.mxu0 0.0
        %4179 = vmatpush1.msra.mxu0 0.0
        %4180 = vmatprep.subr.mxu0 0.0
        %4181 = vmatpush1.msra.mxu0 0.0
        %4182 = vmatprep.subr.mxu0 0.0
        %4183 = vmatpush1.msra.mxu0 0.0
        %4184 = vmatprep.subr.mxu0 0.0
        %4185 = vmatpush1.msra.mxu0 0.0
        %4186 = vmatprep.subr.mxu0 0.0
        %4187 = vmatpush1.msra.mxu0 0.0
        %4188 = vmatprep.subr.mxu0 0.0
        %4189 = vmatpush1.msra.mxu0 0.0
        %4190 = vmatprep.subr.mxu0 0.0
        %4191 = vmatpush1.msra.mxu0 0.0
        %4192 = vmatprep.subr.mxu0 0.0
        %4193 = vmatpush1.msra.mxu0 0.0
        %4194 = vmatprep.subr.mxu0 0.0
        %4195 = vmatpush1.msra.mxu0 0.0
        %4196 = vmatprep.subr.mxu0 0.0
        %4197 = vmatpush1.msra.mxu0 0.0
        %4198 = vmatprep.subr.mxu0 0.0
        %4199 = vmatpush1.msra.mxu0 0.0
        %4200 = vmatprep.subr.mxu0 0.0
        %4201 = vmatpush1.msra.mxu0 0.0
        %4202 = vmatprep.subr.mxu0 0.0
        %4203 = vmatpush1.msra.mxu0 0.0
        %4204 = vmatprep.subr.mxu0 0.0
        %4205 = vmatpush1.msra.mxu0 0.0
        %4206 = vmatprep.subr.mxu0 0.0
        %4207 = vmatpush1.msra.mxu0 0.0
        %4208 = vmatprep.subr.mxu0 0.0
        %4209 = vmatpush1.msra.mxu0 0.0
        %4210 = vmatprep.subr.mxu0 0.0
        %4211 = vmatpush1.msra.mxu0 0.0
        %4212 = vmatprep.subr.mxu0 0.0
        %4213 = vmatpush1.msra.mxu0 0.0
        %4214 = vmatprep.subr.mxu0 0.0
        %4215 = vmatpush1.msra.mxu0 0.0
        %4216 = vmatprep.subr.mxu0 0.0
        %4217 = vmatpush1.msra.mxu0 0.0
        %4218 = vmatprep.subr.mxu0 0.0
        %4219 = vmatpush1.msra.mxu0 0.0
        %4220 = vmatprep.subr.mxu0 0.0
        %4221 = vmatpush1.msra.mxu0 0.0
        %4222 = vmatprep.subr.mxu0 0.0
        %4223 = vmatpush1.msra.mxu0 0.0
        %4224 = vmatprep.subr.mxu0 0.0
        %4225 = vmatpush1.msra.mxu0 0.0
        %4226 = vmatprep.mubr.f32.mxu0 0.0
        %4227 = vmatmul.mubr.f32.gmra.mrb[0].mxu0 %v4151
        %v4228 = vpop.f32.mrb[0].mxu0
        %v4229 = vadd.f32 %v4136, %v4228
        %v4230 = vpop.f32.mrb[0].mxu0
        %v4231 = vadd.f32 %v4136, %v4230
        %4232 = vmatprep.mubr.f32.mxu0 0.0
        %4233 = vmatmul.mubr.f32.gmra.mrb[0].mxu0 %v4154
        %v4234 = vpop.f32.mrb[0].mxu0
        %v4235 = vadd.f32 %v4140, %v4234
        %v4236 = vpop.f32.mrb[0].mxu0
        %v4237 = vadd.f32 %v4140, %v4236
        %4238 = vmatprep.mubr.f32.mxu0 0.0
        %4239 = vmatmul.mubr.f32.gmra.mrb[0].mxu0 %v4157
        %v4240 = vpop.f32.mrb[0].mxu0
        %v4241 = vadd.f32 %v4144, %v4240
        %v4242 = vpop.f32.mrb[0].mxu0
        %v4243 = vadd.f32 %v4144, %v4242
        %4244 = vmatprep.mubr.f32.mxu0 0.0
        %4245 = vmatmul.mubr.f32.gmra.mrb[0].mxu0 %v4160
        %v4246 = vpop.f32.mrb[0].mxu0
        %v4247 = vadd.f32 %v4148, %v4246
        %v4248 = vpop.f32.mrb[0].mxu0
        %v4249 = vadd.f32 %v4148, %v4248
        %4250 = vdwg.mxu0
        %4251 = vmatprep.subr.mxu0 %v2880
        %4252 = vmatpush1.msra.mxu0 %v2776
        %4253 = vmatprep.subr.mxu0 %v3296
        %4254 = vmatpush1.msra.mxu0 %v3192
        %4255 = vmatprep.subr.mxu0 %v3712
        %4256 = vmatpush1.msra.mxu0 %v3608
        %4257 = vmatprep.subr.mxu0 %v4128
        %4258 = vmatpush1.msra.mxu0 %v4024
        %4259 = vmatprep.subr.mxu0 0.0
        %4260 = vmatpush1.msra.mxu0 0.0
        %4261 = vmatprep.subr.mxu0 0.0
        %4262 = vmatpush1.msra.mxu0 0.0
        %4263 = vmatprep.subr.mxu0 0.0
        %4264 = vmatpush1.msra.mxu0 0.0
        %4265 = vmatprep.subr.mxu0 0.0
        %4266 = vmatpush1.msra.mxu0 0.0
        %4267 = vmatprep.subr.mxu0 0.0
        %4268 = vmatpush1.msra.mxu0 0.0
        %4269 = vmatprep.subr.mxu0 0.0
        %4270 = vmatpush1.msra.mxu0 0.0
        %4271 = vmatprep.subr.mxu0 0.0
        %4272 = vmatpush1.msra.mxu0 0.0
        %4273 = vmatprep.subr.mxu0 0.0
        %4274 = vmatpush1.msra.mxu0 0.0
        %4275 = vmatprep.subr.mxu0 0.0
        %4276 = vmatpush1.msra.mxu0 0.0
        %4277 = vmatprep.subr.mxu0 0.0
        %4278 = vmatpush1.msra.mxu0 0.0
        %4279 = vmatprep.subr.mxu0 0.0
        %4280 = vmatpush1.msra.mxu0 0.0
        %4281 = vmatprep.subr.mxu0 0.0
        %4282 = vmatpush1.msra.mxu0 0.0
        %4283 = vmatprep.subr.mxu0 0.0
        %4284 = vmatpush1.msra.mxu0 0.0
        %4285 = vmatprep.subr.mxu0 0.0
        %4286 = vmatpush1.msra.mxu0 0.0
        %4287 = vmatprep.subr.mxu0 0.0
        %4288 = vmatpush1.msra.mxu0 0.0
        %4289 = vmatprep.subr.mxu0 0.0
        %4290 = vmatpush1.msra.mxu0 0.0
        %4291 = vmatprep.subr.mxu0 0.0
        %4292 = vmatpush1.msra.mxu0 0.0
        %4293 = vmatprep.subr.mxu0 0.0
        %4294 = vmatpush1.msra.mxu0 0.0
        %4295 = vmatprep.subr.mxu0 0.0
        %4296 = vmatpush1.msra.mxu0 0.0
        %4297 = vmatprep.subr.mxu0 0.0
        %4298 = vmatpush1.msra.mxu0 0.0
        %4299 = vmatprep.subr.mxu0 0.0
        %4300 = vmatpush1.msra.mxu0 0.0
        %4301 = vmatprep.subr.mxu0 0.0
        %4302 = vmatpush1.msra.mxu0 0.0
        %4303 = vmatprep.subr.mxu0 0.0
        %4304 = vmatpush1.msra.mxu0 0.0
        %4305 = vmatprep.subr.mxu0 0.0
        %4306 = vmatpush1.msra.mxu0 0.0
        %4307 = vmatprep.subr.mxu0 0.0
        %4308 = vmatpush1.msra.mxu0 0.0
        %4309 = vmatprep.subr.mxu0 0.0
        %4310 = vmatpush1.msra.mxu0 0.0
        %4311 = vmatprep.subr.mxu0 0.0
        %4312 = vmatpush1.msra.mxu0 0.0
        %4313 = vmatprep.subr.mxu0 0.0
        %4314 = vmatpush1.msra.mxu0 0.0
        %4315 = vmatprep.mubr.f32.mxu0 0.0
        %4316 = vmatmul.mubr.f32.gmra.mrb[0].mxu0 %v4151
        %v4317 = vpop.f32.mrb[0].mxu0
        %v4318 = vadd.f32 %v4136, %v4317
        %v4319 = vpop.f32.mrb[0].mxu0
        %v4320 = vadd.f32 %v4136, %v4319
        %4321 = vmatprep.mubr.f32.mxu0 0.0
        %4322 = vmatmul.mubr.f32.gmra.mrb[0].mxu0 %v4154
        %v4323 = vpop.f32.mrb[0].mxu0
        %v4324 = vadd.f32 %v4140, %v4323
        %v4325 = vpop.f32.mrb[0].mxu0
        %v4326 = vadd.f32 %v4140, %v4325
        %4327 = vmatprep.mubr.f32.mxu0 0.0
        %4328 = vmatmul.mubr.f32.gmra.mrb[0].mxu0 %v4157
        %v4329 = vpop.f32.mrb[0].mxu0
        %v4330 = vadd.f32 %v4144, %v4329
        %v4331 = vpop.f32.mrb[0].mxu0
        %v4332 = vadd.f32 %v4144, %v4331
        %4333 = vmatprep.mubr.f32.mxu0 0.0
        %4334 = vmatmul.mubr.f32.gmra.mrb[0].mxu0 %v4160
        %v4335 = vpop.f32.mrb[0].mxu0
        %v4336 = vadd.f32 %v4148, %v4335
        %v4337 = vpop.f32.mrb[0].mxu0
        %v4338 = vadd.f32 %v4148, %v4337
        %4339 = vdwg.mxu0
        %v4340 = vmul.f32 %v4229, 30.0
        %v4341 = vmul.f32 %v4231, 30.0
        %v4342 = vmul.f32 %v4318, 30.0
        %v4343 = vmul.f32 %v4320, 30.0
        %v4344 = vmul.f32 %v4235, 30.0
        %v4345 = vmul.f32 %v4237, 30.0
        %v4346 = vmul.f32 %v4324, 30.0
        %v4347 = vmul.f32 %v4326, 30.0
        %v4348 = vmul.f32 %v4241, 30.0
        %v4349 = vmul.f32 %v4243, 30.0
        %v4350 = vmul.f32 %v4330, 30.0
        %v4351 = vmul.f32 %v4332, 30.0
        %v4352 = vmul.f32 %v4247, 30.0
        %v4353 = vmul.f32 %v4249, 30.0
        %v4354 = vmul.f32 %v4336, 30.0
        %v4355 = vmul.f32 %v4338, 30.0
        %v4356 = vand.u32 2147483647, %v4340
        %vm4357 = vcmp.le.f32.partialorder %v4356, 0.7853982
        %vm4358 = vcmp.lt.s32.totalorder %v4340, 0
        %v4359 = vand.u32 %v4340, 2139095040
        %v4360 = vshrl.u32 %v4359, 23
        %v4361 = vsub.s32 %v4360, 127
        %v4362 = vand.u32 2147483647, %v4340
        %v4363 = vand.u32 %v4362, 8388607
        %v4364 = vor.u32 %v4363, 8388608
        %v4365 = vsub.s32 0, %v4364
        %v4366 = vadd.s32 %v4361, 1
        %vm4367 = vcmp.gt.s32.totalorder %v4366, 0
        %v4368 = vsel %vm4367, %v4366, 0
        %v4369 = vshrl.u32 %v4368, 5
        %v4370 = vand.u32 %v4368, 31
        %v4371 = vsub.s32 32, %v4370
        %v4372 = vshrl.u32 683565275, %v4371
        %v4373 = vshll.u32 683565275, %v4370
        %v4374 = vshrl.u32 2475754826, %v4371
        %v4375 = vor.u32 %v4373, %v4374
        %v4376 = vshll.u32 2475754826, %v4370
        %v4377 = vshrl.u32 2131351028, %v4371
        %v4378 = vor.u32 %v4376, %v4377
        %v4379 = vshll.u32 2131351028, %v4370
        %v4380 = vshrl.u32 2102212464, %v4371
        %v4381 = vor.u32 %v4379, %v4380
        %v4382 = vshll.u32 2102212464, %v4370
        %v4383 = vshrl.u32 920167782, %v4371
        %v4384 = vor.u32 %v4382, %v4383
        %v4385 = vshll.u32 920167782, %v4370
        %v4386 = vshrl.u32 1326507024, %v4371
        %v4387 = vor.u32 %v4385, %v4386
        %vm4388 = vcmp.lt.s32.totalorder %v4369, 1
        %vm4389 = vcmp.lt.s32.totalorder %v4369, 2
        %vm4390 = vcmp.lt.s32.totalorder %v4369, 3
        %vm4391 = vcmp.lt.s32.totalorder %v4369, 4
        %v4392 = vsel %vm4388, %v4372, %v4375
        %v4393 = vsel %vm4391, %v4381, 2102212464
        %v4394 = vsel %vm4390, %v4378, %v4393
        %v4395 = vsel %vm4389, %v4392, %v4394
        %v4396 = vsel %vm4388, %v4375, %v4378
        %v4397 = vsel %vm4391, %v4384, 920167782
        %v4398 = vsel %vm4390, %v4381, %v4397
        %v4399 = vsel %vm4389, %v4396, %v4398
        %v4400 = vsel %vm4388, %v4378, %v4381
        %v4401 = vsel %vm4391, %v4387, 1326507024
        %v4402 = vsel %vm4390, %v4384, %v4401
        %v4403 = vsel %vm4389, %v4400, %v4402
        %v4404 = vshll.u32 %v4364, 8
        %v4405 = vmul.u32.u64.compose %v4404, %v4403
        %v4406 = vextract.low.u32 %v4405
        %v4407 = vextract.high.u32 %v4405
        %v4408 = vmul.u32.u64.compose %v4404, %v4399
        %v4409 = vextract.low.u32 %v4408
        %v4410 = vextract.high.u32 %v4408
        %v4411 = vmul.u32 %v4404, %v4395
        %v4412 = vadd.s32 %v4407, %v4409
        %vm4413 = vc.u32 %v4407, %v4409
        %v4414 = vadd.s32 %v4410, 1
        %v4415 = vsel %vm4413, %v4414, %v4410
        %v4416 = vadd.s32 %v4411, %v4415
        %v4417 = vadd.s32 %v4416, 536870912
        %v4418 = vshrl.u32 %v4417, 30
        %v4419 = vshll.u32 %v4418, 30
        %v4420 = vsub.s32 %v4416, %v4419
        %vm4421 = vcmp.lt.s32.totalorder %v4420, 0
        %v4422 = vsub.s32 0, %v4420
        %v4423 = vsel %vm4421, %v4422, %v4420
        %v4424 = vclz %v4423
        %v4425 = vsub.s32 %v4424, 2
        %vm4426 = vcmp.gt.s32.totalorder 0, %v4425
        %v4427 = vsel %vm4426, 0, %v4425
        %v4428 = vsub.s32 32, %v4427
        %v4429 = vshll.u32 %v4420, %v4427
        %v4430 = vshrl.u32 %v4412, %v4428
        %v4431 = vor.u32 %v4429, %v4430
        %v4432 = vsub.s32 4294967266, %v4427
        %v4433 = vadd.s32 %v4432, 127
        %v4434 = vshll.u32 %v4433, 23
        %v4435 = vor.u32 4788187, %v4434
        %v4436 = vand.u32 2147483647, %v4435
        %v4438 = vcvt.s32.f32 %v4431
        %v4439 = vmul.f32 %v4438, %v4436
        %v4440 = vxor.u32 %v4439, 2147483648
        %v4441 = vsel %vm4358, %v4440, %v4439
        %v4442 = vsub.s32 4, %v4418
        %v4443 = vsel %vm4358, %v4442, %v4418
        %v4444 = vsel %vm4357, %v4340, %v4441
        %v4445 = vsel %vm4357, 0, %v4443
        %v4446 = vcosq.f32.pop %v4444
        %v4447 = vsinq.f32.pop %v4444
        %vm4448 = vweird.f32 %v4340
        %v4449 = vadd.s32 %v4445, 3
        %v4450 = vand.u32 %v4449, 3
        %vm4451 = vcmp.lt.s32.totalorder %v4450, 2
        %vm4452 = vcmp.eq.s32.totalorder %v4450, 0
        %v4453 = vxor.u32 %v4447, 2147483648
        %v4454 = vsel %vm4452, %v4446, %v4453
        %vm4455 = vcmp.eq.s32.totalorder %v4450, 2
        %v4456 = vxor.u32 %v4446, 2147483648
        %v4457 = vsel %vm4455, %v4456, %v4447
        %v4458 = vsel %vm4451, %v4454, %v4457
        %v4459 = vsel %vm4448, nan, %v4458
        %v4460 = vand.u32 2147483647, %v4341
        %vm4461 = vcmp.le.f32.partialorder %v4460, 0.7853982
        %vm4462 = vcmp.lt.s32.totalorder %v4341, 0
        %v4463 = vand.u32 %v4341, 2139095040
        %v4464 = vshrl.u32 %v4463, 23
        %v4465 = vsub.s32 %v4464, 127
        %v4466 = vand.u32 2147483647, %v4341
        %v4467 = vand.u32 %v4466, 8388607
        %v4468 = vor.u32 %v4467, 8388608
        %v4469 = vsub.s32 0, %v4468
        %v4470 = vadd.s32 %v4465, 1
        %vm4471 = vcmp.gt.s32.totalorder %v4470, 0
        %v4472 = vsel %vm4471, %v4470, 0
        %v4473 = vshrl.u32 %v4472, 5
        %v4474 = vand.u32 %v4472, 31
        %v4475 = vsub.s32 32, %v4474
        %v4476 = vshrl.u32 683565275, %v4475
        %v4477 = vshll.u32 683565275, %v4474
        %v4478 = vshrl.u32 2475754826, %v4475
        %v4479 = vor.u32 %v4477, %v4478
        %v4480 = vshll.u32 2475754826, %v4474
        %v4481 = vshrl.u32 2131351028, %v4475
        %v4482 = vor.u32 %v4480, %v4481
        %v4483 = vshll.u32 2131351028, %v4474
        %v4484 = vshrl.u32 2102212464, %v4475
        %v4485 = vor.u32 %v4483, %v4484
        %v4486 = vshll.u32 2102212464, %v4474
        %v4487 = vshrl.u32 920167782, %v4475
        %v4488 = vor.u32 %v4486, %v4487
        %v4489 = vshll.u32 920167782, %v4474
        %v4490 = vshrl.u32 1326507024, %v4475
        %v4491 = vor.u32 %v4489, %v4490
        %vm4492 = vcmp.lt.s32.totalorder %v4473, 1
        %vm4493 = vcmp.lt.s32.totalorder %v4473, 2
        %vm4494 = vcmp.lt.s32.totalorder %v4473, 3
        %vm4495 = vcmp.lt.s32.totalorder %v4473, 4
        %v4496 = vsel %vm4492, %v4476, %v4479
        %v4497 = vsel %vm4495, %v4485, 2102212464
        %v4498 = vsel %vm4494, %v4482, %v4497
        %v4499 = vsel %vm4493, %v4496, %v4498
        %v4500 = vsel %vm4492, %v4479, %v4482
        %v4501 = vsel %vm4495, %v4488, 920167782
        %v4502 = vsel %vm4494, %v4485, %v4501
        %v4503 = vsel %vm4493, %v4500, %v4502
        %v4504 = vsel %vm4492, %v4482, %v4485
        %v4505 = vsel %vm4495, %v4491, 1326507024
        %v4506 = vsel %vm4494, %v4488, %v4505
        %v4507 = vsel %vm4493, %v4504, %v4506
        %v4508 = vshll.u32 %v4468, 8
        %v4509 = vmul.u32.u64.compose %v4508, %v4507
        %v4510 = vextract.low.u32 %v4509
        %v4511 = vextract.high.u32 %v4509
        %v4512 = vmul.u32.u64.compose %v4508, %v4503
        %v4513 = vextract.low.u32 %v4512
        %v4514 = vextract.high.u32 %v4512
        %v4515 = vmul.u32 %v4508, %v4499
        %v4516 = vadd.s32 %v4511, %v4513
        %vm4517 = vc.u32 %v4511, %v4513
        %v4518 = vadd.s32 %v4514, 1
        %v4519 = vsel %vm4517, %v4518, %v4514
        %v4520 = vadd.s32 %v4515, %v4519
        %v4521 = vadd.s32 %v4520, 536870912
        %v4522 = vshrl.u32 %v4521, 30
        %v4523 = vshll.u32 %v4522, 30
        %v4524 = vsub.s32 %v4520, %v4523
        %vm4525 = vcmp.lt.s32.totalorder %v4524, 0
        %v4526 = vsub.s32 0, %v4524
        %v4527 = vsel %vm4525, %v4526, %v4524
        %v4528 = vclz %v4527
        %v4529 = vsub.s32 %v4528, 2
        %vm4530 = vcmp.gt.s32.totalorder 0, %v4529
        %v4531 = vsel %vm4530, 0, %v4529
        %v4532 = vsub.s32 32, %v4531
        %v4533 = vshll.u32 %v4524, %v4531
        %v4534 = vshrl.u32 %v4516, %v4532
        %v4535 = vor.u32 %v4533, %v4534
        %v4536 = vsub.s32 4294967266, %v4531
        %v4537 = vadd.s32 %v4536, 127
        %v4538 = vshll.u32 %v4537, 23
        %v4539 = vor.u32 4788187, %v4538
        %v4540 = vand.u32 2147483647, %v4539
        %v4542 = vcvt.s32.f32 %v4535
        %v4543 = vmul.f32 %v4542, %v4540
        %v4544 = vxor.u32 %v4543, 2147483648
        %v4545 = vsel %vm4462, %v4544, %v4543
        %v4546 = vsub.s32 4, %v4522
        %v4547 = vsel %vm4462, %v4546, %v4522
        %v4548 = vsel %vm4461, %v4341, %v4545
        %v4549 = vsel %vm4461, 0, %v4547
        %v4550 = vcosq.f32.pop %v4548
        %v4551 = vsinq.f32.pop %v4548
        %vm4552 = vweird.f32 %v4341
        %v4553 = vadd.s32 %v4549, 3
        %v4554 = vand.u32 %v4553, 3
        %vm4555 = vcmp.lt.s32.totalorder %v4554, 2
        %vm4556 = vcmp.eq.s32.totalorder %v4554, 0
        %v4557 = vxor.u32 %v4551, 2147483648
        %v4558 = vsel %vm4556, %v4550, %v4557
        %vm4559 = vcmp.eq.s32.totalorder %v4554, 2
        %v4560 = vxor.u32 %v4550, 2147483648
        %v4561 = vsel %vm4559, %v4560, %v4551
        %v4562 = vsel %vm4555, %v4558, %v4561
        %v4563 = vsel %vm4552, nan, %v4562
        %v4564 = vand.u32 2147483647, %v4342
        %vm4565 = vcmp.le.f32.partialorder %v4564, 0.7853982
        %vm4566 = vcmp.lt.s32.totalorder %v4342, 0
        %v4567 = vand.u32 %v4342, 2139095040
        %v4568 = vshrl.u32 %v4567, 23
        %v4569 = vsub.s32 %v4568, 127
        %v4570 = vand.u32 2147483647, %v4342
        %v4571 = vand.u32 %v4570, 8388607
        %v4572 = vor.u32 %v4571, 8388608
        %v4573 = vsub.s32 0, %v4572
        %v4574 = vadd.s32 %v4569, 1
        %vm4575 = vcmp.gt.s32.totalorder %v4574, 0
        %v4576 = vsel %vm4575, %v4574, 0
        %v4577 = vshrl.u32 %v4576, 5
        %v4578 = vand.u32 %v4576, 31
        %v4579 = vsub.s32 32, %v4578
        %v4580 = vshrl.u32 683565275, %v4579
        %v4581 = vshll.u32 683565275, %v4578
        %v4582 = vshrl.u32 2475754826, %v4579
        %v4583 = vor.u32 %v4581, %v4582
        %v4584 = vshll.u32 2475754826, %v4578
        %v4585 = vshrl.u32 2131351028, %v4579
        %v4586 = vor.u32 %v4584, %v4585
        %v4587 = vshll.u32 2131351028, %v4578
        %v4588 = vshrl.u32 2102212464, %v4579
        %v4589 = vor.u32 %v4587, %v4588
        %v4590 = vshll.u32 2102212464, %v4578
        %v4591 = vshrl.u32 920167782, %v4579
        %v4592 = vor.u32 %v4590, %v4591
        %v4593 = vshll.u32 920167782, %v4578
        %v4594 = vshrl.u32 1326507024, %v4579
        %v4595 = vor.u32 %v4593, %v4594
        %vm4596 = vcmp.lt.s32.totalorder %v4577, 1
        %vm4597 = vcmp.lt.s32.totalorder %v4577, 2
        %vm4598 = vcmp.lt.s32.totalorder %v4577, 3
        %vm4599 = vcmp.lt.s32.totalorder %v4577, 4
        %v4600 = vsel %vm4596, %v4580, %v4583
        %v4601 = vsel %vm4599, %v4589, 2102212464
        %v4602 = vsel %vm4598, %v4586, %v4601
        %v4603 = vsel %vm4597, %v4600, %v4602
        %v4604 = vsel %vm4596, %v4583, %v4586
        %v4605 = vsel %vm4599, %v4592, 920167782
        %v4606 = vsel %vm4598, %v4589, %v4605
        %v4607 = vsel %vm4597, %v4604, %v4606
        %v4608 = vsel %vm4596, %v4586, %v4589
        %v4609 = vsel %vm4599, %v4595, 1326507024
        %v4610 = vsel %vm4598, %v4592, %v4609
        %v4611 = vsel %vm4597, %v4608, %v4610
        %v4612 = vshll.u32 %v4572, 8
        %v4613 = vmul.u32.u64.compose %v4612, %v4611
        %v4614 = vextract.low.u32 %v4613
        %v4615 = vextract.high.u32 %v4613
        %v4616 = vmul.u32.u64.compose %v4612, %v4607
        %v4617 = vextract.low.u32 %v4616
        %v4618 = vextract.high.u32 %v4616
        %v4619 = vmul.u32 %v4612, %v4603
        %v4620 = vadd.s32 %v4615, %v4617
        %vm4621 = vc.u32 %v4615, %v4617
        %v4622 = vadd.s32 %v4618, 1
        %v4623 = vsel %vm4621, %v4622, %v4618
        %v4624 = vadd.s32 %v4619, %v4623
        %v4625 = vadd.s32 %v4624, 536870912
        %v4626 = vshrl.u32 %v4625, 30
        %v4627 = vshll.u32 %v4626, 30
        %v4628 = vsub.s32 %v4624, %v4627
        %vm4629 = vcmp.lt.s32.totalorder %v4628, 0
        %v4630 = vsub.s32 0, %v4628
        %v4631 = vsel %vm4629, %v4630, %v4628
        %v4632 = vclz %v4631
        %v4633 = vsub.s32 %v4632, 2
        %vm4634 = vcmp.gt.s32.totalorder 0, %v4633
        %v4635 = vsel %vm4634, 0, %v4633
        %v4636 = vsub.s32 32, %v4635
        %v4637 = vshll.u32 %v4628, %v4635
        %v4638 = vshrl.u32 %v4620, %v4636
        %v4639 = vor.u32 %v4637, %v4638
        %v4640 = vsub.s32 4294967266, %v4635
        %v4641 = vadd.s32 %v4640, 127
        %v4642 = vshll.u32 %v4641, 23
        %v4643 = vor.u32 4788187, %v4642
        %v4644 = vand.u32 2147483647, %v4643
        %v4646 = vcvt.s32.f32 %v4639
        %v4647 = vmul.f32 %v4646, %v4644
        %v4648 = vxor.u32 %v4647, 2147483648
        %v4649 = vsel %vm4566, %v4648, %v4647
        %v4650 = vsub.s32 4, %v4626
        %v4651 = vsel %vm4566, %v4650, %v4626
        %v4652 = vsel %vm4565, %v4342, %v4649
        %v4653 = vsel %vm4565, 0, %v4651
        %v4654 = vcosq.f32.pop %v4652
        %v4655 = vsinq.f32.pop %v4652
        %vm4656 = vweird.f32 %v4342
        %v4657 = vadd.s32 %v4653, 3
        %v4658 = vand.u32 %v4657, 3
        %vm4659 = vcmp.lt.s32.totalorder %v4658, 2
        %vm4660 = vcmp.eq.s32.totalorder %v4658, 0
        %v4661 = vxor.u32 %v4655, 2147483648
        %v4662 = vsel %vm4660, %v4654, %v4661
        %vm4663 = vcmp.eq.s32.totalorder %v4658, 2
        %v4664 = vxor.u32 %v4654, 2147483648
        %v4665 = vsel %vm4663, %v4664, %v4655
        %v4666 = vsel %vm4659, %v4662, %v4665
        %v4667 = vsel %vm4656, nan, %v4666
        %v4668 = vand.u32 2147483647, %v4343
        %vm4669 = vcmp.le.f32.partialorder %v4668, 0.7853982
        %vm4670 = vcmp.lt.s32.totalorder %v4343, 0
        %v4671 = vand.u32 %v4343, 2139095040
        %v4672 = vshrl.u32 %v4671, 23
        %v4673 = vsub.s32 %v4672, 127
        %v4674 = vand.u32 2147483647, %v4343
        %v4675 = vand.u32 %v4674, 8388607
        %v4676 = vor.u32 %v4675, 8388608
        %v4677 = vsub.s32 0, %v4676
        %v4678 = vadd.s32 %v4673, 1
        %vm4679 = vcmp.gt.s32.totalorder %v4678, 0
        %v4680 = vsel %vm4679, %v4678, 0
        %v4681 = vshrl.u32 %v4680, 5
        %v4682 = vand.u32 %v4680, 31
        %v4683 = vsub.s32 32, %v4682
        %v4684 = vshrl.u32 683565275, %v4683
        %v4685 = vshll.u32 683565275, %v4682
        %v4686 = vshrl.u32 2475754826, %v4683
        %v4687 = vor.u32 %v4685, %v4686
        %v4688 = vshll.u32 2475754826, %v4682
        %v4689 = vshrl.u32 2131351028, %v4683
        %v4690 = vor.u32 %v4688, %v4689
        %v4691 = vshll.u32 2131351028, %v4682
        %v4692 = vshrl.u32 2102212464, %v4683
        %v4693 = vor.u32 %v4691, %v4692
        %v4694 = vshll.u32 2102212464, %v4682
        %v4695 = vshrl.u32 920167782, %v4683
        %v4696 = vor.u32 %v4694, %v4695
        %v4697 = vshll.u32 920167782, %v4682
        %v4698 = vshrl.u32 1326507024, %v4683
        %v4699 = vor.u32 %v4697, %v4698
        %vm4700 = vcmp.lt.s32.totalorder %v4681, 1
        %vm4701 = vcmp.lt.s32.totalorder %v4681, 2
        %vm4702 = vcmp.lt.s32.totalorder %v4681, 3
        %vm4703 = vcmp.lt.s32.totalorder %v4681, 4
        %v4704 = vsel %vm4700, %v4684, %v4687
        %v4705 = vsel %vm4703, %v4693, 2102212464
        %v4706 = vsel %vm4702, %v4690, %v4705
        %v4707 = vsel %vm4701, %v4704, %v4706
        %v4708 = vsel %vm4700, %v4687, %v4690
        %v4709 = vsel %vm4703, %v4696, 920167782
        %v4710 = vsel %vm4702, %v4693, %v4709
        %v4711 = vsel %vm4701, %v4708, %v4710
        %v4712 = vsel %vm4700, %v4690, %v4693
        %v4713 = vsel %vm4703, %v4699, 1326507024
        %v4714 = vsel %vm4702, %v4696, %v4713
        %v4715 = vsel %vm4701, %v4712, %v4714
        %v4716 = vshll.u32 %v4676, 8
        %v4717 = vmul.u32.u64.compose %v4716, %v4715
        %v4718 = vextract.low.u32 %v4717
        %v4719 = vextract.high.u32 %v4717
        %v4720 = vmul.u32.u64.compose %v4716, %v4711
        %v4721 = vextract.low.u32 %v4720
        %v4722 = vextract.high.u32 %v4720
        %v4723 = vmul.u32 %v4716, %v4707
        %v4724 = vadd.s32 %v4719, %v4721
        %vm4725 = vc.u32 %v4719, %v4721
        %v4726 = vadd.s32 %v4722, 1
        %v4727 = vsel %vm4725, %v4726, %v4722
        %v4728 = vadd.s32 %v4723, %v4727
        %v4729 = vadd.s32 %v4728, 536870912
        %v4730 = vshrl.u32 %v4729, 30
        %v4731 = vshll.u32 %v4730, 30
        %v4732 = vsub.s32 %v4728, %v4731
        %vm4733 = vcmp.lt.s32.totalorder %v4732, 0
        %v4734 = vsub.s32 0, %v4732
        %v4735 = vsel %vm4733, %v4734, %v4732
        %v4736 = vclz %v4735
        %v4737 = vsub.s32 %v4736, 2
        %vm4738 = vcmp.gt.s32.totalorder 0, %v4737
        %v4739 = vsel %vm4738, 0, %v4737
        %v4740 = vsub.s32 32, %v4739
        %v4741 = vshll.u32 %v4732, %v4739
        %v4742 = vshrl.u32 %v4724, %v4740
        %v4743 = vor.u32 %v4741, %v4742
        %v4744 = vsub.s32 4294967266, %v4739
        %v4745 = vadd.s32 %v4744, 127
        %v4746 = vshll.u32 %v4745, 23
        %v4747 = vor.u32 4788187, %v4746
        %v4748 = vand.u32 2147483647, %v4747
        %v4750 = vcvt.s32.f32 %v4743
        %v4751 = vmul.f32 %v4750, %v4748
        %v4752 = vxor.u32 %v4751, 2147483648
        %v4753 = vsel %vm4670, %v4752, %v4751
        %v4754 = vsub.s32 4, %v4730
        %v4755 = vsel %vm4670, %v4754, %v4730
        %v4756 = vsel %vm4669, %v4343, %v4753
        %v4757 = vsel %vm4669, 0, %v4755
        %v4758 = vcosq.f32.pop %v4756
        %v4759 = vsinq.f32.pop %v4756
        %vm4760 = vweird.f32 %v4343
        %v4761 = vadd.s32 %v4757, 3
        %v4762 = vand.u32 %v4761, 3
        %vm4763 = vcmp.lt.s32.totalorder %v4762, 2
        %vm4764 = vcmp.eq.s32.totalorder %v4762, 0
        %v4765 = vxor.u32 %v4759, 2147483648
        %v4766 = vsel %vm4764, %v4758, %v4765
        %vm4767 = vcmp.eq.s32.totalorder %v4762, 2
        %v4768 = vxor.u32 %v4758, 2147483648
        %v4769 = vsel %vm4767, %v4768, %v4759
        %v4770 = vsel %vm4763, %v4766, %v4769
        %v4771 = vsel %vm4760, nan, %v4770
        %v4772 = vand.u32 2147483647, %v4344
        %vm4773 = vcmp.le.f32.partialorder %v4772, 0.7853982
        %vm4774 = vcmp.lt.s32.totalorder %v4344, 0
        %v4775 = vand.u32 %v4344, 2139095040
        %v4776 = vshrl.u32 %v4775, 23
        %v4777 = vsub.s32 %v4776, 127
        %v4778 = vand.u32 2147483647, %v4344
        %v4779 = vand.u32 %v4778, 8388607
        %v4780 = vor.u32 %v4779, 8388608
        %v4781 = vsub.s32 0, %v4780
        %v4782 = vadd.s32 %v4777, 1
        %vm4783 = vcmp.gt.s32.totalorder %v4782, 0
        %v4784 = vsel %vm4783, %v4782, 0
        %v4785 = vshrl.u32 %v4784, 5
        %v4786 = vand.u32 %v4784, 31
        %v4787 = vsub.s32 32, %v4786
        %v4788 = vshrl.u32 683565275, %v4787
        %v4789 = vshll.u32 683565275, %v4786
        %v4790 = vshrl.u32 2475754826, %v4787
        %v4791 = vor.u32 %v4789, %v4790
        %v4792 = vshll.u32 2475754826, %v4786
        %v4793 = vshrl.u32 2131351028, %v4787
        %v4794 = vor.u32 %v4792, %v4793
        %v4795 = vshll.u32 2131351028, %v4786
        %v4796 = vshrl.u32 2102212464, %v4787
        %v4797 = vor.u32 %v4795, %v4796
        %v4798 = vshll.u32 2102212464, %v4786
        %v4799 = vshrl.u32 920167782, %v4787
        %v4800 = vor.u32 %v4798, %v4799
        %v4801 = vshll.u32 920167782, %v4786
        %v4802 = vshrl.u32 1326507024, %v4787
        %v4803 = vor.u32 %v4801, %v4802
        %vm4804 = vcmp.lt.s32.totalorder %v4785, 1
        %vm4805 = vcmp.lt.s32.totalorder %v4785, 2
        %vm4806 = vcmp.lt.s32.totalorder %v4785, 3
        %vm4807 = vcmp.lt.s32.totalorder %v4785, 4
        %v4808 = vsel %vm4804, %v4788, %v4791
        %v4809 = vsel %vm4807, %v4797, 2102212464
        %v4810 = vsel %vm4806, %v4794, %v4809
        %v4811 = vsel %vm4805, %v4808, %v4810
        %v4812 = vsel %vm4804, %v4791, %v4794
        %v4813 = vsel %vm4807, %v4800, 920167782
        %v4814 = vsel %vm4806, %v4797, %v4813
        %v4815 = vsel %vm4805, %v4812, %v4814
        %v4816 = vsel %vm4804, %v4794, %v4797
        %v4817 = vsel %vm4807, %v4803, 1326507024
        %v4818 = vsel %vm4806, %v4800, %v4817
        %v4819 = vsel %vm4805, %v4816, %v4818
        %v4820 = vshll.u32 %v4780, 8
        %v4821 = vmul.u32.u64.compose %v4820, %v4819
        %v4822 = vextract.low.u32 %v4821
        %v4823 = vextract.high.u32 %v4821
        %v4824 = vmul.u32.u64.compose %v4820, %v4815
        %v4825 = vextract.low.u32 %v4824
        %v4826 = vextract.high.u32 %v4824
        %v4827 = vmul.u32 %v4820, %v4811
        %v4828 = vadd.s32 %v4823, %v4825
        %vm4829 = vc.u32 %v4823, %v4825
        %v4830 = vadd.s32 %v4826, 1
        %v4831 = vsel %vm4829, %v4830, %v4826
        %v4832 = vadd.s32 %v4827, %v4831
        %v4833 = vadd.s32 %v4832, 536870912
        %v4834 = vshrl.u32 %v4833, 30
        %v4835 = vshll.u32 %v4834, 30
        %v4836 = vsub.s32 %v4832, %v4835
        %vm4837 = vcmp.lt.s32.totalorder %v4836, 0
        %v4838 = vsub.s32 0, %v4836
        %v4839 = vsel %vm4837, %v4838, %v4836
        %v4840 = vclz %v4839
        %v4841 = vsub.s32 %v4840, 2
        %vm4842 = vcmp.gt.s32.totalorder 0, %v4841
        %v4843 = vsel %vm4842, 0, %v4841
        %v4844 = vsub.s32 32, %v4843
        %v4845 = vshll.u32 %v4836, %v4843
        %v4846 = vshrl.u32 %v4828, %v4844
        %v4847 = vor.u32 %v4845, %v4846
        %v4848 = vsub.s32 4294967266, %v4843
        %v4849 = vadd.s32 %v4848, 127
        %v4850 = vshll.u32 %v4849, 23
        %v4851 = vor.u32 4788187, %v4850
        %v4852 = vand.u32 2147483647, %v4851
        %v4854 = vcvt.s32.f32 %v4847
        %v4855 = vmul.f32 %v4854, %v4852
        %v4856 = vxor.u32 %v4855, 2147483648
        %v4857 = vsel %vm4774, %v4856, %v4855
        %v4858 = vsub.s32 4, %v4834
        %v4859 = vsel %vm4774, %v4858, %v4834
        %v4860 = vsel %vm4773, %v4344, %v4857
        %v4861 = vsel %vm4773, 0, %v4859
        %v4862 = vcosq.f32.pop %v4860
        %v4863 = vsinq.f32.pop %v4860
        %vm4864 = vweird.f32 %v4344
        %v4865 = vadd.s32 %v4861, 3
        %v4866 = vand.u32 %v4865, 3
        %vm4867 = vcmp.lt.s32.totalorder %v4866, 2
        %vm4868 = vcmp.eq.s32.totalorder %v4866, 0
        %v4869 = vxor.u32 %v4863, 2147483648
        %v4870 = vsel %vm4868, %v4862, %v4869
        %vm4871 = vcmp.eq.s32.totalorder %v4866, 2
        %v4872 = vxor.u32 %v4862, 2147483648
        %v4873 = vsel %vm4871, %v4872, %v4863
        %v4874 = vsel %vm4867, %v4870, %v4873
        %v4875 = vsel %vm4864, nan, %v4874
        %v4876 = vand.u32 2147483647, %v4345
        %vm4877 = vcmp.le.f32.partialorder %v4876, 0.7853982
        %vm4878 = vcmp.lt.s32.totalorder %v4345, 0
        %v4879 = vand.u32 %v4345, 2139095040
        %v4880 = vshrl.u32 %v4879, 23
        %v4881 = vsub.s32 %v4880, 127
        %v4882 = vand.u32 2147483647, %v4345
        %v4883 = vand.u32 %v4882, 8388607
        %v4884 = vor.u32 %v4883, 8388608
        %v4885 = vsub.s32 0, %v4884
        %v4886 = vadd.s32 %v4881, 1
        %vm4887 = vcmp.gt.s32.totalorder %v4886, 0
        %v4888 = vsel %vm4887, %v4886, 0
        %v4889 = vshrl.u32 %v4888, 5
        %v4890 = vand.u32 %v4888, 31
        %v4891 = vsub.s32 32, %v4890
        %v4892 = vshrl.u32 683565275, %v4891
        %v4893 = vshll.u32 683565275, %v4890
        %v4894 = vshrl.u32 2475754826, %v4891
        %v4895 = vor.u32 %v4893, %v4894
        %v4896 = vshll.u32 2475754826, %v4890
        %v4897 = vshrl.u32 2131351028, %v4891
        %v4898 = vor.u32 %v4896, %v4897
        %v4899 = vshll.u32 2131351028, %v4890
        %v4900 = vshrl.u32 2102212464, %v4891
        %v4901 = vor.u32 %v4899, %v4900
        %v4902 = vshll.u32 2102212464, %v4890
        %v4903 = vshrl.u32 920167782, %v4891
        %v4904 = vor.u32 %v4902, %v4903
        %v4905 = vshll.u32 920167782, %v4890
        %v4906 = vshrl.u32 1326507024, %v4891
        %v4907 = vor.u32 %v4905, %v4906
        %vm4908 = vcmp.lt.s32.totalorder %v4889, 1
        %vm4909 = vcmp.lt.s32.totalorder %v4889, 2
        %vm4910 = vcmp.lt.s32.totalorder %v4889, 3
        %vm4911 = vcmp.lt.s32.totalorder %v4889, 4
        %v4912 = vsel %vm4908, %v4892, %v4895
        %v4913 = vsel %vm4911, %v4901, 2102212464
        %v4914 = vsel %vm4910, %v4898, %v4913
        %v4915 = vsel %vm4909, %v4912, %v4914
        %v4916 = vsel %vm4908, %v4895, %v4898
        %v4917 = vsel %vm4911, %v4904, 920167782
        %v4918 = vsel %vm4910, %v4901, %v4917
        %v4919 = vsel %vm4909, %v4916, %v4918
        %v4920 = vsel %vm4908, %v4898, %v4901
        %v4921 = vsel %vm4911, %v4907, 1326507024
        %v4922 = vsel %vm4910, %v4904, %v4921
        %v4923 = vsel %vm4909, %v4920, %v4922
        %v4924 = vshll.u32 %v4884, 8
        %v4925 = vmul.u32.u64.compose %v4924, %v4923
        %v4926 = vextract.low.u32 %v4925
        %v4927 = vextract.high.u32 %v4925
        %v4928 = vmul.u32.u64.compose %v4924, %v4919
        %v4929 = vextract.low.u32 %v4928
        %v4930 = vextract.high.u32 %v4928
        %v4931 = vmul.u32 %v4924, %v4915
        %v4932 = vadd.s32 %v4927, %v4929
        %vm4933 = vc.u32 %v4927, %v4929
        %v4934 = vadd.s32 %v4930, 1
        %v4935 = vsel %vm4933, %v4934, %v4930
        %v4936 = vadd.s32 %v4931, %v4935
        %v4937 = vadd.s32 %v4936, 536870912
        %v4938 = vshrl.u32 %v4937, 30
        %v4939 = vshll.u32 %v4938, 30
        %v4940 = vsub.s32 %v4936, %v4939
        %vm4941 = vcmp.lt.s32.totalorder %v4940, 0
        %v4942 = vsub.s32 0, %v4940
        %v4943 = vsel %vm4941, %v4942, %v4940
        %v4944 = vclz %v4943
        %v4945 = vsub.s32 %v4944, 2
        %vm4946 = vcmp.gt.s32.totalorder 0, %v4945
        %v4947 = vsel %vm4946, 0, %v4945
        %v4948 = vsub.s32 32, %v4947
        %v4949 = vshll.u32 %v4940, %v4947
        %v4950 = vshrl.u32 %v4932, %v4948
        %v4951 = vor.u32 %v4949, %v4950
        %v4952 = vsub.s32 4294967266, %v4947
        %v4953 = vadd.s32 %v4952, 127
        %v4954 = vshll.u32 %v4953, 23
        %v4955 = vor.u32 4788187, %v4954
        %v4956 = vand.u32 2147483647, %v4955
        %v4958 = vcvt.s32.f32 %v4951
        %v4959 = vmul.f32 %v4958, %v4956
        %v4960 = vxor.u32 %v4959, 2147483648
        %v4961 = vsel %vm4878, %v4960, %v4959
        %v4962 = vsub.s32 4, %v4938
        %v4963 = vsel %vm4878, %v4962, %v4938
        %v4964 = vsel %vm4877, %v4345, %v4961
        %v4965 = vsel %vm4877, 0, %v4963
        %v4966 = vcosq.f32.pop %v4964
        %v4967 = vsinq.f32.pop %v4964
        %vm4968 = vweird.f32 %v4345
        %v4969 = vadd.s32 %v4965, 3
        %v4970 = vand.u32 %v4969, 3
        %vm4971 = vcmp.lt.s32.totalorder %v4970, 2
        %vm4972 = vcmp.eq.s32.totalorder %v4970, 0
        %v4973 = vxor.u32 %v4967, 2147483648
        %v4974 = vsel %vm4972, %v4966, %v4973
        %vm4975 = vcmp.eq.s32.totalorder %v4970, 2
        %v4976 = vxor.u32 %v4966, 2147483648
        %v4977 = vsel %vm4975, %v4976, %v4967
        %v4978 = vsel %vm4971, %v4974, %v4977
        %v4979 = vsel %vm4968, nan, %v4978
        %v4980 = vand.u32 2147483647, %v4346
        %vm4981 = vcmp.le.f32.partialorder %v4980, 0.7853982
        %vm4982 = vcmp.lt.s32.totalorder %v4346, 0
        %v4983 = vand.u32 %v4346, 2139095040
        %v4984 = vshrl.u32 %v4983, 23
        %v4985 = vsub.s32 %v4984, 127
        %v4986 = vand.u32 2147483647, %v4346
        %v4987 = vand.u32 %v4986, 8388607
        %v4988 = vor.u32 %v4987, 8388608
        %v4989 = vsub.s32 0, %v4988
        %v4990 = vadd.s32 %v4985, 1
        %vm4991 = vcmp.gt.s32.totalorder %v4990, 0
        %v4992 = vsel %vm4991, %v4990, 0
        %v4993 = vshrl.u32 %v4992, 5
        %v4994 = vand.u32 %v4992, 31
        %v4995 = vsub.s32 32, %v4994
        %v4996 = vshrl.u32 683565275, %v4995
        %v4997 = vshll.u32 683565275, %v4994
        %v4998 = vshrl.u32 2475754826, %v4995
        %v4999 = vor.u32 %v4997, %v4998
        %v5000 = vshll.u32 2475754826, %v4994
        %v5001 = vshrl.u32 2131351028, %v4995
        %v5002 = vor.u32 %v5000, %v5001
        %v5003 = vshll.u32 2131351028, %v4994
        %v5004 = vshrl.u32 2102212464, %v4995
        %v5005 = vor.u32 %v5003, %v5004
        %v5006 = vshll.u32 2102212464, %v4994
        %v5007 = vshrl.u32 920167782, %v4995
        %v5008 = vor.u32 %v5006, %v5007
        %v5009 = vshll.u32 920167782, %v4994
        %v5010 = vshrl.u32 1326507024, %v4995
        %v5011 = vor.u32 %v5009, %v5010
        %vm5012 = vcmp.lt.s32.totalorder %v4993, 1
        %vm5013 = vcmp.lt.s32.totalorder %v4993, 2
        %vm5014 = vcmp.lt.s32.totalorder %v4993, 3
        %vm5015 = vcmp.lt.s32.totalorder %v4993, 4
        %v5016 = vsel %vm5012, %v4996, %v4999
        %v5017 = vsel %vm5015, %v5005, 2102212464
        %v5018 = vsel %vm5014, %v5002, %v5017
        %v5019 = vsel %vm5013, %v5016, %v5018
        %v5020 = vsel %vm5012, %v4999, %v5002
        %v5021 = vsel %vm5015, %v5008, 920167782
        %v5022 = vsel %vm5014, %v5005, %v5021
        %v5023 = vsel %vm5013, %v5020, %v5022
        %v5024 = vsel %vm5012, %v5002, %v5005
        %v5025 = vsel %vm5015, %v5011, 1326507024
        %v5026 = vsel %vm5014, %v5008, %v5025
        %v5027 = vsel %vm5013, %v5024, %v5026
        %v5028 = vshll.u32 %v4988, 8
        %v5029 = vmul.u32.u64.compose %v5028, %v5027
        %v5030 = vextract.low.u32 %v5029
        %v5031 = vextract.high.u32 %v5029
        %v5032 = vmul.u32.u64.compose %v5028, %v5023
        %v5033 = vextract.low.u32 %v5032
        %v5034 = vextract.high.u32 %v5032
        %v5035 = vmul.u32 %v5028, %v5019
        %v5036 = vadd.s32 %v5031, %v5033
        %vm5037 = vc.u32 %v5031, %v5033
        %v5038 = vadd.s32 %v5034, 1
        %v5039 = vsel %vm5037, %v5038, %v5034
        %v5040 = vadd.s32 %v5035, %v5039
        %v5041 = vadd.s32 %v5040, 536870912
        %v5042 = vshrl.u32 %v5041, 30
        %v5043 = vshll.u32 %v5042, 30
        %v5044 = vsub.s32 %v5040, %v5043
        %vm5045 = vcmp.lt.s32.totalorder %v5044, 0
        %v5046 = vsub.s32 0, %v5044
        %v5047 = vsel %vm5045, %v5046, %v5044
        %v5048 = vclz %v5047
        %v5049 = vsub.s32 %v5048, 2
        %vm5050 = vcmp.gt.s32.totalorder 0, %v5049
        %v5051 = vsel %vm5050, 0, %v5049
        %v5052 = vsub.s32 32, %v5051
        %v5053 = vshll.u32 %v5044, %v5051
        %v5054 = vshrl.u32 %v5036, %v5052
        %v5055 = vor.u32 %v5053, %v5054
        %v5056 = vsub.s32 4294967266, %v5051
        %v5057 = vadd.s32 %v5056, 127
        %v5058 = vshll.u32 %v5057, 23
        %v5059 = vor.u32 4788187, %v5058
        %v5060 = vand.u32 2147483647, %v5059
        %v5062 = vcvt.s32.f32 %v5055
        %v5063 = vmul.f32 %v5062, %v5060
        %v5064 = vxor.u32 %v5063, 2147483648
        %v5065 = vsel %vm4982, %v5064, %v5063
        %v5066 = vsub.s32 4, %v5042
        %v5067 = vsel %vm4982, %v5066, %v5042
        %v5068 = vsel %vm4981, %v4346, %v5065
        %v5069 = vsel %vm4981, 0, %v5067
        %v5070 = vcosq.f32.pop %v5068
        %v5071 = vsinq.f32.pop %v5068
        %vm5072 = vweird.f32 %v4346
        %v5073 = vadd.s32 %v5069, 3
        %v5074 = vand.u32 %v5073, 3
        %vm5075 = vcmp.lt.s32.totalorder %v5074, 2
        %vm5076 = vcmp.eq.s32.totalorder %v5074, 0
        %v5077 = vxor.u32 %v5071, 2147483648
        %v5078 = vsel %vm5076, %v5070, %v5077
        %vm5079 = vcmp.eq.s32.totalorder %v5074, 2
        %v5080 = vxor.u32 %v5070, 2147483648
        %v5081 = vsel %vm5079, %v5080, %v5071
        %v5082 = vsel %vm5075, %v5078, %v5081
        %v5083 = vsel %vm5072, nan, %v5082
        %v5084 = vand.u32 2147483647, %v4347
        %vm5085 = vcmp.le.f32.partialorder %v5084, 0.7853982
        %vm5086 = vcmp.lt.s32.totalorder %v4347, 0
        %v5087 = vand.u32 %v4347, 2139095040
        %v5088 = vshrl.u32 %v5087, 23
        %v5089 = vsub.s32 %v5088, 127
        %v5090 = vand.u32 2147483647, %v4347
        %v5091 = vand.u32 %v5090, 8388607
        %v5092 = vor.u32 %v5091, 8388608
        %v5093 = vsub.s32 0, %v5092
        %v5094 = vadd.s32 %v5089, 1
        %vm5095 = vcmp.gt.s32.totalorder %v5094, 0
        %v5096 = vsel %vm5095, %v5094, 0
        %v5097 = vshrl.u32 %v5096, 5
        %v5098 = vand.u32 %v5096, 31
        %v5099 = vsub.s32 32, %v5098
        %v5100 = vshrl.u32 683565275, %v5099
        %v5101 = vshll.u32 683565275, %v5098
        %v5102 = vshrl.u32 2475754826, %v5099
        %v5103 = vor.u32 %v5101, %v5102
        %v5104 = vshll.u32 2475754826, %v5098
        %v5105 = vshrl.u32 2131351028, %v5099
        %v5106 = vor.u32 %v5104, %v5105
        %v5107 = vshll.u32 2131351028, %v5098
        %v5108 = vshrl.u32 2102212464, %v5099
        %v5109 = vor.u32 %v5107, %v5108
        %v5110 = vshll.u32 2102212464, %v5098
        %v5111 = vshrl.u32 920167782, %v5099
        %v5112 = vor.u32 %v5110, %v5111
        %v5113 = vshll.u32 920167782, %v5098
        %v5114 = vshrl.u32 1326507024, %v5099
        %v5115 = vor.u32 %v5113, %v5114
        %vm5116 = vcmp.lt.s32.totalorder %v5097, 1
        %vm5117 = vcmp.lt.s32.totalorder %v5097, 2
        %vm5118 = vcmp.lt.s32.totalorder %v5097, 3
        %vm5119 = vcmp.lt.s32.totalorder %v5097, 4
        %v5120 = vsel %vm5116, %v5100, %v5103
        %v5121 = vsel %vm5119, %v5109, 2102212464
        %v5122 = vsel %vm5118, %v5106, %v5121
        %v5123 = vsel %vm5117, %v5120, %v5122
        %v5124 = vsel %vm5116, %v5103, %v5106
        %v5125 = vsel %vm5119, %v5112, 920167782
        %v5126 = vsel %vm5118, %v5109, %v5125
        %v5127 = vsel %vm5117, %v5124, %v5126
        %v5128 = vsel %vm5116, %v5106, %v5109
        %v5129 = vsel %vm5119, %v5115, 1326507024
        %v5130 = vsel %vm5118, %v5112, %v5129
        %v5131 = vsel %vm5117, %v5128, %v5130
        %v5132 = vshll.u32 %v5092, 8
        %v5133 = vmul.u32.u64.compose %v5132, %v5131
        %v5134 = vextract.low.u32 %v5133
        %v5135 = vextract.high.u32 %v5133
        %v5136 = vmul.u32.u64.compose %v5132, %v5127
        %v5137 = vextract.low.u32 %v5136
        %v5138 = vextract.high.u32 %v5136
        %v5139 = vmul.u32 %v5132, %v5123
        %v5140 = vadd.s32 %v5135, %v5137
        %vm5141 = vc.u32 %v5135, %v5137
        %v5142 = vadd.s32 %v5138, 1
        %v5143 = vsel %vm5141, %v5142, %v5138
        %v5144 = vadd.s32 %v5139, %v5143
        %v5145 = vadd.s32 %v5144, 536870912
        %v5146 = vshrl.u32 %v5145, 30
        %v5147 = vshll.u32 %v5146, 30
        %v5148 = vsub.s32 %v5144, %v5147
        %vm5149 = vcmp.lt.s32.totalorder %v5148, 0
        %v5150 = vsub.s32 0, %v5148
        %v5151 = vsel %vm5149, %v5150, %v5148
        %v5152 = vclz %v5151
        %v5153 = vsub.s32 %v5152, 2
        %vm5154 = vcmp.gt.s32.totalorder 0, %v5153
        %v5155 = vsel %vm5154, 0, %v5153
        %v5156 = vsub.s32 32, %v5155
        %v5157 = vshll.u32 %v5148, %v5155
        %v5158 = vshrl.u32 %v5140, %v5156
        %v5159 = vor.u32 %v5157, %v5158
        %v5160 = vsub.s32 4294967266, %v5155
        %v5161 = vadd.s32 %v5160, 127
        %v5162 = vshll.u32 %v5161, 23
        %v5163 = vor.u32 4788187, %v5162
        %v5164 = vand.u32 2147483647, %v5163
        %v5166 = vcvt.s32.f32 %v5159
        %v5167 = vmul.f32 %v5166, %v5164
        %v5168 = vxor.u32 %v5167, 2147483648
        %v5169 = vsel %vm5086, %v5168, %v5167
        %v5170 = vsub.s32 4, %v5146
        %v5171 = vsel %vm5086, %v5170, %v5146
        %v5172 = vsel %vm5085, %v4347, %v5169
        %v5173 = vsel %vm5085, 0, %v5171
        %v5174 = vcosq.f32.pop %v5172
        %v5175 = vsinq.f32.pop %v5172
        %vm5176 = vweird.f32 %v4347
        %v5177 = vadd.s32 %v5173, 3
        %v5178 = vand.u32 %v5177, 3
        %vm5179 = vcmp.lt.s32.totalorder %v5178, 2
        %vm5180 = vcmp.eq.s32.totalorder %v5178, 0
        %v5181 = vxor.u32 %v5175, 2147483648
        %v5182 = vsel %vm5180, %v5174, %v5181
        %vm5183 = vcmp.eq.s32.totalorder %v5178, 2
        %v5184 = vxor.u32 %v5174, 2147483648
        %v5185 = vsel %vm5183, %v5184, %v5175
        %v5186 = vsel %vm5179, %v5182, %v5185
        %v5187 = vsel %vm5176, nan, %v5186
        %v5188 = vand.u32 2147483647, %v4348
        %vm5189 = vcmp.le.f32.partialorder %v5188, 0.7853982
        %vm5190 = vcmp.lt.s32.totalorder %v4348, 0
        %v5191 = vand.u32 %v4348, 2139095040
        %v5192 = vshrl.u32 %v5191, 23
        %v5193 = vsub.s32 %v5192, 127
        %v5194 = vand.u32 2147483647, %v4348
        %v5195 = vand.u32 %v5194, 8388607
        %v5196 = vor.u32 %v5195, 8388608
        %v5197 = vsub.s32 0, %v5196
        %v5198 = vadd.s32 %v5193, 1
        %vm5199 = vcmp.gt.s32.totalorder %v5198, 0
        %v5200 = vsel %vm5199, %v5198, 0
        %v5201 = vshrl.u32 %v5200, 5
        %v5202 = vand.u32 %v5200, 31
        %v5203 = vsub.s32 32, %v5202
        %v5204 = vshrl.u32 683565275, %v5203
        %v5205 = vshll.u32 683565275, %v5202
        %v5206 = vshrl.u32 2475754826, %v5203
        %v5207 = vor.u32 %v5205, %v5206
        %v5208 = vshll.u32 2475754826, %v5202
        %v5209 = vshrl.u32 2131351028, %v5203
        %v5210 = vor.u32 %v5208, %v5209
        %v5211 = vshll.u32 2131351028, %v5202
        %v5212 = vshrl.u32 2102212464, %v5203
        %v5213 = vor.u32 %v5211, %v5212
        %v5214 = vshll.u32 2102212464, %v5202
        %v5215 = vshrl.u32 920167782, %v5203
        %v5216 = vor.u32 %v5214, %v5215
        %v5217 = vshll.u32 920167782, %v5202
        %v5218 = vshrl.u32 1326507024, %v5203
        %v5219 = vor.u32 %v5217, %v5218
        %vm5220 = vcmp.lt.s32.totalorder %v5201, 1
        %vm5221 = vcmp.lt.s32.totalorder %v5201, 2
        %vm5222 = vcmp.lt.s32.totalorder %v5201, 3
        %vm5223 = vcmp.lt.s32.totalorder %v5201, 4
        %v5224 = vsel %vm5220, %v5204, %v5207
        %v5225 = vsel %vm5223, %v5213, 2102212464
        %v5226 = vsel %vm5222, %v5210, %v5225
        %v5227 = vsel %vm5221, %v5224, %v5226
        %v5228 = vsel %vm5220, %v5207, %v5210
        %v5229 = vsel %vm5223, %v5216, 920167782
        %v5230 = vsel %vm5222, %v5213, %v5229
        %v5231 = vsel %vm5221, %v5228, %v5230
        %v5232 = vsel %vm5220, %v5210, %v5213
        %v5233 = vsel %vm5223, %v5219, 1326507024
        %v5234 = vsel %vm5222, %v5216, %v5233
        %v5235 = vsel %vm5221, %v5232, %v5234
        %v5236 = vshll.u32 %v5196, 8
        %v5237 = vmul.u32.u64.compose %v5236, %v5235
        %v5238 = vextract.low.u32 %v5237
        %v5239 = vextract.high.u32 %v5237
        %v5240 = vmul.u32.u64.compose %v5236, %v5231
        %v5241 = vextract.low.u32 %v5240
        %v5242 = vextract.high.u32 %v5240
        %v5243 = vmul.u32 %v5236, %v5227
        %v5244 = vadd.s32 %v5239, %v5241
        %vm5245 = vc.u32 %v5239, %v5241
        %v5246 = vadd.s32 %v5242, 1
        %v5247 = vsel %vm5245, %v5246, %v5242
        %v5248 = vadd.s32 %v5243, %v5247
        %v5249 = vadd.s32 %v5248, 536870912
        %v5250 = vshrl.u32 %v5249, 30
        %v5251 = vshll.u32 %v5250, 30
        %v5252 = vsub.s32 %v5248, %v5251
        %vm5253 = vcmp.lt.s32.totalorder %v5252, 0
        %v5254 = vsub.s32 0, %v5252
        %v5255 = vsel %vm5253, %v5254, %v5252
        %v5256 = vclz %v5255
        %v5257 = vsub.s32 %v5256, 2
        %vm5258 = vcmp.gt.s32.totalorder 0, %v5257
        %v5259 = vsel %vm5258, 0, %v5257
        %v5260 = vsub.s32 32, %v5259
        %v5261 = vshll.u32 %v5252, %v5259
        %v5262 = vshrl.u32 %v5244, %v5260
        %v5263 = vor.u32 %v5261, %v5262
        %v5264 = vsub.s32 4294967266, %v5259
        %v5265 = vadd.s32 %v5264, 127
        %v5266 = vshll.u32 %v5265, 23
        %v5267 = vor.u32 4788187, %v5266
        %v5268 = vand.u32 2147483647, %v5267
        %v5270 = vcvt.s32.f32 %v5263
        %v5271 = vmul.f32 %v5270, %v5268
        %v5272 = vxor.u32 %v5271, 2147483648
        %v5273 = vsel %vm5190, %v5272, %v5271
        %v5274 = vsub.s32 4, %v5250
        %v5275 = vsel %vm5190, %v5274, %v5250
        %v5276 = vsel %vm5189, %v4348, %v5273
        %v5277 = vsel %vm5189, 0, %v5275
        %v5278 = vcosq.f32.pop %v5276
        %v5279 = vsinq.f32.pop %v5276
        %vm5280 = vweird.f32 %v4348
        %v5281 = vadd.s32 %v5277, 3
        %v5282 = vand.u32 %v5281, 3
        %vm5283 = vcmp.lt.s32.totalorder %v5282, 2
        %vm5284 = vcmp.eq.s32.totalorder %v5282, 0
        %v5285 = vxor.u32 %v5279, 2147483648
        %v5286 = vsel %vm5284, %v5278, %v5285
        %vm5287 = vcmp.eq.s32.totalorder %v5282, 2
        %v5288 = vxor.u32 %v5278, 2147483648
        %v5289 = vsel %vm5287, %v5288, %v5279
        %v5290 = vsel %vm5283, %v5286, %v5289
        %v5291 = vsel %vm5280, nan, %v5290
        %v5292 = vand.u32 2147483647, %v4349
        %vm5293 = vcmp.le.f32.partialorder %v5292, 0.7853982
        %vm5294 = vcmp.lt.s32.totalorder %v4349, 0
        %v5295 = vand.u32 %v4349, 2139095040
        %v5296 = vshrl.u32 %v5295, 23
        %v5297 = vsub.s32 %v5296, 127
        %v5298 = vand.u32 2147483647, %v4349
        %v5299 = vand.u32 %v5298, 8388607
        %v5300 = vor.u32 %v5299, 8388608
        %v5301 = vsub.s32 0, %v5300
        %v5302 = vadd.s32 %v5297, 1
        %vm5303 = vcmp.gt.s32.totalorder %v5302, 0
        %v5304 = vsel %vm5303, %v5302, 0
        %v5305 = vshrl.u32 %v5304, 5
        %v5306 = vand.u32 %v5304, 31
        %v5307 = vsub.s32 32, %v5306
        %v5308 = vshrl.u32 683565275, %v5307
        %v5309 = vshll.u32 683565275, %v5306
        %v5310 = vshrl.u32 2475754826, %v5307
        %v5311 = vor.u32 %v5309, %v5310
        %v5312 = vshll.u32 2475754826, %v5306
        %v5313 = vshrl.u32 2131351028, %v5307
        %v5314 = vor.u32 %v5312, %v5313
        %v5315 = vshll.u32 2131351028, %v5306
        %v5316 = vshrl.u32 2102212464, %v5307
        %v5317 = vor.u32 %v5315, %v5316
        %v5318 = vshll.u32 2102212464, %v5306
        %v5319 = vshrl.u32 920167782, %v5307
        %v5320 = vor.u32 %v5318, %v5319
        %v5321 = vshll.u32 920167782, %v5306
        %v5322 = vshrl.u32 1326507024, %v5307
        %v5323 = vor.u32 %v5321, %v5322
        %vm5324 = vcmp.lt.s32.totalorder %v5305, 1
        %vm5325 = vcmp.lt.s32.totalorder %v5305, 2
        %vm5326 = vcmp.lt.s32.totalorder %v5305, 3
        %vm5327 = vcmp.lt.s32.totalorder %v5305, 4
        %v5328 = vsel %vm5324, %v5308, %v5311
        %v5329 = vsel %vm5327, %v5317, 2102212464
        %v5330 = vsel %vm5326, %v5314, %v5329
        %v5331 = vsel %vm5325, %v5328, %v5330
        %v5332 = vsel %vm5324, %v5311, %v5314
        %v5333 = vsel %vm5327, %v5320, 920167782
        %v5334 = vsel %vm5326, %v5317, %v5333
        %v5335 = vsel %vm5325, %v5332, %v5334
        %v5336 = vsel %vm5324, %v5314, %v5317
        %v5337 = vsel %vm5327, %v5323, 1326507024
        %v5338 = vsel %vm5326, %v5320, %v5337
        %v5339 = vsel %vm5325, %v5336, %v5338
        %v5340 = vshll.u32 %v5300, 8
        %v5341 = vmul.u32.u64.compose %v5340, %v5339
        %v5342 = vextract.low.u32 %v5341
        %v5343 = vextract.high.u32 %v5341
        %v5344 = vmul.u32.u64.compose %v5340, %v5335
        %v5345 = vextract.low.u32 %v5344
        %v5346 = vextract.high.u32 %v5344
        %v5347 = vmul.u32 %v5340, %v5331
        %v5348 = vadd.s32 %v5343, %v5345
        %vm5349 = vc.u32 %v5343, %v5345
        %v5350 = vadd.s32 %v5346, 1
        %v5351 = vsel %vm5349, %v5350, %v5346
        %v5352 = vadd.s32 %v5347, %v5351
        %v5353 = vadd.s32 %v5352, 536870912
        %v5354 = vshrl.u32 %v5353, 30
        %v5355 = vshll.u32 %v5354, 30
        %v5356 = vsub.s32 %v5352, %v5355
        %vm5357 = vcmp.lt.s32.totalorder %v5356, 0
        %v5358 = vsub.s32 0, %v5356
        %v5359 = vsel %vm5357, %v5358, %v5356
        %v5360 = vclz %v5359
        %v5361 = vsub.s32 %v5360, 2
        %vm5362 = vcmp.gt.s32.totalorder 0, %v5361
        %v5363 = vsel %vm5362, 0, %v5361
        %v5364 = vsub.s32 32, %v5363
        %v5365 = vshll.u32 %v5356, %v5363
        %v5366 = vshrl.u32 %v5348, %v5364
        %v5367 = vor.u32 %v5365, %v5366
        %v5368 = vsub.s32 4294967266, %v5363
        %v5369 = vadd.s32 %v5368, 127
        %v5370 = vshll.u32 %v5369, 23
        %v5371 = vor.u32 4788187, %v5370
        %v5372 = vand.u32 2147483647, %v5371
        %v5374 = vcvt.s32.f32 %v5367
        %v5375 = vmul.f32 %v5374, %v5372
        %v5376 = vxor.u32 %v5375, 2147483648
        %v5377 = vsel %vm5294, %v5376, %v5375
        %v5378 = vsub.s32 4, %v5354
        %v5379 = vsel %vm5294, %v5378, %v5354
        %v5380 = vsel %vm5293, %v4349, %v5377
        %v5381 = vsel %vm5293, 0, %v5379
        %v5382 = vcosq.f32.pop %v5380
        %v5383 = vsinq.f32.pop %v5380
        %vm5384 = vweird.f32 %v4349
        %v5385 = vadd.s32 %v5381, 3
        %v5386 = vand.u32 %v5385, 3
        %vm5387 = vcmp.lt.s32.totalorder %v5386, 2
        %vm5388 = vcmp.eq.s32.totalorder %v5386, 0
        %v5389 = vxor.u32 %v5383, 2147483648
        %v5390 = vsel %vm5388, %v5382, %v5389
        %vm5391 = vcmp.eq.s32.totalorder %v5386, 2
        %v5392 = vxor.u32 %v5382, 2147483648
        %v5393 = vsel %vm5391, %v5392, %v5383
        %v5394 = vsel %vm5387, %v5390, %v5393
        %v5395 = vsel %vm5384, nan, %v5394
        %v5396 = vand.u32 2147483647, %v4350
        %vm5397 = vcmp.le.f32.partialorder %v5396, 0.7853982
        %vm5398 = vcmp.lt.s32.totalorder %v4350, 0
        %v5399 = vand.u32 %v4350, 2139095040
        %v5400 = vshrl.u32 %v5399, 23
        %v5401 = vsub.s32 %v5400, 127
        %v5402 = vand.u32 2147483647, %v4350
        %v5403 = vand.u32 %v5402, 8388607
        %v5404 = vor.u32 %v5403, 8388608
        %v5405 = vsub.s32 0, %v5404
        %v5406 = vadd.s32 %v5401, 1
        %vm5407 = vcmp.gt.s32.totalorder %v5406, 0
        %v5408 = vsel %vm5407, %v5406, 0
        %v5409 = vshrl.u32 %v5408, 5
        %v5410 = vand.u32 %v5408, 31
        %v5411 = vsub.s32 32, %v5410
        %v5412 = vshrl.u32 683565275, %v5411
        %v5413 = vshll.u32 683565275, %v5410
        %v5414 = vshrl.u32 2475754826, %v5411
        %v5415 = vor.u32 %v5413, %v5414
        %v5416 = vshll.u32 2475754826, %v5410
        %v5417 = vshrl.u32 2131351028, %v5411
        %v5418 = vor.u32 %v5416, %v5417
        %v5419 = vshll.u32 2131351028, %v5410
        %v5420 = vshrl.u32 2102212464, %v5411
        %v5421 = vor.u32 %v5419, %v5420
        %v5422 = vshll.u32 2102212464, %v5410
        %v5423 = vshrl.u32 920167782, %v5411
        %v5424 = vor.u32 %v5422, %v5423
        %v5425 = vshll.u32 920167782, %v5410
        %v5426 = vshrl.u32 1326507024, %v5411
        %v5427 = vor.u32 %v5425, %v5426
        %vm5428 = vcmp.lt.s32.totalorder %v5409, 1
        %vm5429 = vcmp.lt.s32.totalorder %v5409, 2
        %vm5430 = vcmp.lt.s32.totalorder %v5409, 3
        %vm5431 = vcmp.lt.s32.totalorder %v5409, 4
        %v5432 = vsel %vm5428, %v5412, %v5415
        %v5433 = vsel %vm5431, %v5421, 2102212464
        %v5434 = vsel %vm5430, %v5418, %v5433
        %v5435 = vsel %vm5429, %v5432, %v5434
        %v5436 = vsel %vm5428, %v5415, %v5418
        %v5437 = vsel %vm5431, %v5424, 920167782
        %v5438 = vsel %vm5430, %v5421, %v5437
        %v5439 = vsel %vm5429, %v5436, %v5438
        %v5440 = vsel %vm5428, %v5418, %v5421
        %v5441 = vsel %vm5431, %v5427, 1326507024
        %v5442 = vsel %vm5430, %v5424, %v5441
        %v5443 = vsel %vm5429, %v5440, %v5442
        %v5444 = vshll.u32 %v5404, 8
        %v5445 = vmul.u32.u64.compose %v5444, %v5443
        %v5446 = vextract.low.u32 %v5445
        %v5447 = vextract.high.u32 %v5445
        %v5448 = vmul.u32.u64.compose %v5444, %v5439
        %v5449 = vextract.low.u32 %v5448
        %v5450 = vextract.high.u32 %v5448
        %v5451 = vmul.u32 %v5444, %v5435
        %v5452 = vadd.s32 %v5447, %v5449
        %vm5453 = vc.u32 %v5447, %v5449
        %v5454 = vadd.s32 %v5450, 1
        %v5455 = vsel %vm5453, %v5454, %v5450
        %v5456 = vadd.s32 %v5451, %v5455
        %v5457 = vadd.s32 %v5456, 536870912
        %v5458 = vshrl.u32 %v5457, 30
        %v5459 = vshll.u32 %v5458, 30
        %v5460 = vsub.s32 %v5456, %v5459
        %vm5461 = vcmp.lt.s32.totalorder %v5460, 0
        %v5462 = vsub.s32 0, %v5460
        %v5463 = vsel %vm5461, %v5462, %v5460
        %v5464 = vclz %v5463
        %v5465 = vsub.s32 %v5464, 2
        %vm5466 = vcmp.gt.s32.totalorder 0, %v5465
        %v5467 = vsel %vm5466, 0, %v5465
        %v5468 = vsub.s32 32, %v5467
        %v5469 = vshll.u32 %v5460, %v5467
        %v5470 = vshrl.u32 %v5452, %v5468
        %v5471 = vor.u32 %v5469, %v5470
        %v5472 = vsub.s32 4294967266, %v5467
        %v5473 = vadd.s32 %v5472, 127
        %v5474 = vshll.u32 %v5473, 23
        %v5475 = vor.u32 4788187, %v5474
        %v5476 = vand.u32 2147483647, %v5475
        %v5478 = vcvt.s32.f32 %v5471
        %v5479 = vmul.f32 %v5478, %v5476
        %v5480 = vxor.u32 %v5479, 2147483648
        %v5481 = vsel %vm5398, %v5480, %v5479
        %v5482 = vsub.s32 4, %v5458
        %v5483 = vsel %vm5398, %v5482, %v5458
        %v5484 = vsel %vm5397, %v4350, %v5481
        %v5485 = vsel %vm5397, 0, %v5483
        %v5486 = vcosq.f32.pop %v5484
        %v5487 = vsinq.f32.pop %v5484
        %vm5488 = vweird.f32 %v4350
        %v5489 = vadd.s32 %v5485, 3
        %v5490 = vand.u32 %v5489, 3
        %vm5491 = vcmp.lt.s32.totalorder %v5490, 2
        %vm5492 = vcmp.eq.s32.totalorder %v5490, 0
        %v5493 = vxor.u32 %v5487, 2147483648
        %v5494 = vsel %vm5492, %v5486, %v5493
        %vm5495 = vcmp.eq.s32.totalorder %v5490, 2
        %v5496 = vxor.u32 %v5486, 2147483648
        %v5497 = vsel %vm5495, %v5496, %v5487
        %v5498 = vsel %vm5491, %v5494, %v5497
        %v5499 = vsel %vm5488, nan, %v5498
        %v5500 = vand.u32 2147483647, %v4351
        %vm5501 = vcmp.le.f32.partialorder %v5500, 0.7853982
        %vm5502 = vcmp.lt.s32.totalorder %v4351, 0
        %v5503 = vand.u32 %v4351, 2139095040
        %v5504 = vshrl.u32 %v5503, 23
        %v5505 = vsub.s32 %v5504, 127
        %v5506 = vand.u32 2147483647, %v4351
        %v5507 = vand.u32 %v5506, 8388607
        %v5508 = vor.u32 %v5507, 8388608
        %v5509 = vsub.s32 0, %v5508
        %v5510 = vadd.s32 %v5505, 1
        %vm5511 = vcmp.gt.s32.totalorder %v5510, 0
        %v5512 = vsel %vm5511, %v5510, 0
        %v5513 = vshrl.u32 %v5512, 5
        %v5514 = vand.u32 %v5512, 31
        %v5515 = vsub.s32 32, %v5514
        %v5516 = vshrl.u32 683565275, %v5515
        %v5517 = vshll.u32 683565275, %v5514
        %v5518 = vshrl.u32 2475754826, %v5515
        %v5519 = vor.u32 %v5517, %v5518
        %v5520 = vshll.u32 2475754826, %v5514
        %v5521 = vshrl.u32 2131351028, %v5515
        %v5522 = vor.u32 %v5520, %v5521
        %v5523 = vshll.u32 2131351028, %v5514
        %v5524 = vshrl.u32 2102212464, %v5515
        %v5525 = vor.u32 %v5523, %v5524
        %v5526 = vshll.u32 2102212464, %v5514
        %v5527 = vshrl.u32 920167782, %v5515
        %v5528 = vor.u32 %v5526, %v5527
        %v5529 = vshll.u32 920167782, %v5514
        %v5530 = vshrl.u32 1326507024, %v5515
        %v5531 = vor.u32 %v5529, %v5530
        %vm5532 = vcmp.lt.s32.totalorder %v5513, 1
        %vm5533 = vcmp.lt.s32.totalorder %v5513, 2
        %vm5534 = vcmp.lt.s32.totalorder %v5513, 3
        %vm5535 = vcmp.lt.s32.totalorder %v5513, 4
        %v5536 = vsel %vm5532, %v5516, %v5519
        %v5537 = vsel %vm5535, %v5525, 2102212464
        %v5538 = vsel %vm5534, %v5522, %v5537
        %v5539 = vsel %vm5533, %v5536, %v5538
        %v5540 = vsel %vm5532, %v5519, %v5522
        %v5541 = vsel %vm5535, %v5528, 920167782
        %v5542 = vsel %vm5534, %v5525, %v5541
        %v5543 = vsel %vm5533, %v5540, %v5542
        %v5544 = vsel %vm5532, %v5522, %v5525
        %v5545 = vsel %vm5535, %v5531, 1326507024
        %v5546 = vsel %vm5534, %v5528, %v5545
        %v5547 = vsel %vm5533, %v5544, %v5546
        %v5548 = vshll.u32 %v5508, 8
        %v5549 = vmul.u32.u64.compose %v5548, %v5547
        %v5550 = vextract.low.u32 %v5549
        %v5551 = vextract.high.u32 %v5549
        %v5552 = vmul.u32.u64.compose %v5548, %v5543
        %v5553 = vextract.low.u32 %v5552
        %v5554 = vextract.high.u32 %v5552
        %v5555 = vmul.u32 %v5548, %v5539
        %v5556 = vadd.s32 %v5551, %v5553
        %vm5557 = vc.u32 %v5551, %v5553
        %v5558 = vadd.s32 %v5554, 1
        %v5559 = vsel %vm5557, %v5558, %v5554
        %v5560 = vadd.s32 %v5555, %v5559
        %v5561 = vadd.s32 %v5560, 536870912
        %v5562 = vshrl.u32 %v5561, 30
        %v5563 = vshll.u32 %v5562, 30
        %v5564 = vsub.s32 %v5560, %v5563
        %vm5565 = vcmp.lt.s32.totalorder %v5564, 0
        %v5566 = vsub.s32 0, %v5564
        %v5567 = vsel %vm5565, %v5566, %v5564
        %v5568 = vclz %v5567
        %v5569 = vsub.s32 %v5568, 2
        %vm5570 = vcmp.gt.s32.totalorder 0, %v5569
        %v5571 = vsel %vm5570, 0, %v5569
        %v5572 = vsub.s32 32, %v5571
        %v5573 = vshll.u32 %v5564, %v5571
        %v5574 = vshrl.u32 %v5556, %v5572
        %v5575 = vor.u32 %v5573, %v5574
        %v5576 = vsub.s32 4294967266, %v5571
        %v5577 = vadd.s32 %v5576, 127
        %v5578 = vshll.u32 %v5577, 23
        %v5579 = vor.u32 4788187, %v5578
        %v5580 = vand.u32 2147483647, %v5579
        %v5582 = vcvt.s32.f32 %v5575
        %v5583 = vmul.f32 %v5582, %v5580
        %v5584 = vxor.u32 %v5583, 2147483648
        %v5585 = vsel %vm5502, %v5584, %v5583
        %v5586 = vsub.s32 4, %v5562
        %v5587 = vsel %vm5502, %v5586, %v5562
        %v5588 = vsel %vm5501, %v4351, %v5585
        %v5589 = vsel %vm5501, 0, %v5587
        %v5590 = vcosq.f32.pop %v5588
        %v5591 = vsinq.f32.pop %v5588
        %vm5592 = vweird.f32 %v4351
        %v5593 = vadd.s32 %v5589, 3
        %v5594 = vand.u32 %v5593, 3
        %vm5595 = vcmp.lt.s32.totalorder %v5594, 2
        %vm5596 = vcmp.eq.s32.totalorder %v5594, 0
        %v5597 = vxor.u32 %v5591, 2147483648
        %v5598 = vsel %vm5596, %v5590, %v5597
        %vm5599 = vcmp.eq.s32.totalorder %v5594, 2
        %v5600 = vxor.u32 %v5590, 2147483648
        %v5601 = vsel %vm5599, %v5600, %v5591
        %v5602 = vsel %vm5595, %v5598, %v5601
        %v5603 = vsel %vm5592, nan, %v5602
        %v5604 = vand.u32 2147483647, %v4352
        %vm5605 = vcmp.le.f32.partialorder %v5604, 0.7853982
        %vm5606 = vcmp.lt.s32.totalorder %v4352, 0
        %v5607 = vand.u32 %v4352, 2139095040
        %v5608 = vshrl.u32 %v5607, 23
        %v5609 = vsub.s32 %v5608, 127
        %v5610 = vand.u32 2147483647, %v4352
        %v5611 = vand.u32 %v5610, 8388607
        %v5612 = vor.u32 %v5611, 8388608
        %v5613 = vsub.s32 0, %v5612
        %v5614 = vadd.s32 %v5609, 1
        %vm5615 = vcmp.gt.s32.totalorder %v5614, 0
        %v5616 = vsel %vm5615, %v5614, 0
        %v5617 = vshrl.u32 %v5616, 5
        %v5618 = vand.u32 %v5616, 31
        %v5619 = vsub.s32 32, %v5618
        %v5620 = vshrl.u32 683565275, %v5619
        %v5621 = vshll.u32 683565275, %v5618
        %v5622 = vshrl.u32 2475754826, %v5619
        %v5623 = vor.u32 %v5621, %v5622
        %v5624 = vshll.u32 2475754826, %v5618
        %v5625 = vshrl.u32 2131351028, %v5619
        %v5626 = vor.u32 %v5624, %v5625
        %v5627 = vshll.u32 2131351028, %v5618
        %v5628 = vshrl.u32 2102212464, %v5619
        %v5629 = vor.u32 %v5627, %v5628
        %v5630 = vshll.u32 2102212464, %v5618
        %v5631 = vshrl.u32 920167782, %v5619
        %v5632 = vor.u32 %v5630, %v5631
        %v5633 = vshll.u32 920167782, %v5618
        %v5634 = vshrl.u32 1326507024, %v5619
        %v5635 = vor.u32 %v5633, %v5634
        %vm5636 = vcmp.lt.s32.totalorder %v5617, 1
        %vm5637 = vcmp.lt.s32.totalorder %v5617, 2
        %vm5638 = vcmp.lt.s32.totalorder %v5617, 3
        %vm5639 = vcmp.lt.s32.totalorder %v5617, 4
        %v5640 = vsel %vm5636, %v5620, %v5623
        %v5641 = vsel %vm5639, %v5629, 2102212464
        %v5642 = vsel %vm5638, %v5626, %v5641
        %v5643 = vsel %vm5637, %v5640, %v5642
        %v5644 = vsel %vm5636, %v5623, %v5626
        %v5645 = vsel %vm5639, %v5632, 920167782
        %v5646 = vsel %vm5638, %v5629, %v5645
        %v5647 = vsel %vm5637, %v5644, %v5646
        %v5648 = vsel %vm5636, %v5626, %v5629
        %v5649 = vsel %vm5639, %v5635, 1326507024
        %v5650 = vsel %vm5638, %v5632, %v5649
        %v5651 = vsel %vm5637, %v5648, %v5650
        %v5652 = vshll.u32 %v5612, 8
        %v5653 = vmul.u32.u64.compose %v5652, %v5651
        %v5654 = vextract.low.u32 %v5653
        %v5655 = vextract.high.u32 %v5653
        %v5656 = vmul.u32.u64.compose %v5652, %v5647
        %v5657 = vextract.low.u32 %v5656
        %v5658 = vextract.high.u32 %v5656
        %v5659 = vmul.u32 %v5652, %v5643
        %v5660 = vadd.s32 %v5655, %v5657
        %vm5661 = vc.u32 %v5655, %v5657
        %v5662 = vadd.s32 %v5658, 1
        %v5663 = vsel %vm5661, %v5662, %v5658
        %v5664 = vadd.s32 %v5659, %v5663
        %v5665 = vadd.s32 %v5664, 536870912
        %v5666 = vshrl.u32 %v5665, 30
        %v5667 = vshll.u32 %v5666, 30
        %v5668 = vsub.s32 %v5664, %v5667
        %vm5669 = vcmp.lt.s32.totalorder %v5668, 0
        %v5670 = vsub.s32 0, %v5668
        %v5671 = vsel %vm5669, %v5670, %v5668
        %v5672 = vclz %v5671
        %v5673 = vsub.s32 %v5672, 2
        %vm5674 = vcmp.gt.s32.totalorder 0, %v5673
        %v5675 = vsel %vm5674, 0, %v5673
        %v5676 = vsub.s32 32, %v5675
        %v5677 = vshll.u32 %v5668, %v5675
        %v5678 = vshrl.u32 %v5660, %v5676
        %v5679 = vor.u32 %v5677, %v5678
        %v5680 = vsub.s32 4294967266, %v5675
        %v5681 = vadd.s32 %v5680, 127
        %v5682 = vshll.u32 %v5681, 23
        %v5683 = vor.u32 4788187, %v5682
        %v5684 = vand.u32 2147483647, %v5683
        %v5686 = vcvt.s32.f32 %v5679
        %v5687 = vmul.f32 %v5686, %v5684
        %v5688 = vxor.u32 %v5687, 2147483648
        %v5689 = vsel %vm5606, %v5688, %v5687
        %v5690 = vsub.s32 4, %v5666
        %v5691 = vsel %vm5606, %v5690, %v5666
        %v5692 = vsel %vm5605, %v4352, %v5689
        %v5693 = vsel %vm5605, 0, %v5691
        %v5694 = vcosq.f32.pop %v5692
        %v5695 = vsinq.f32.pop %v5692
        %vm5696 = vweird.f32 %v4352
        %v5697 = vadd.s32 %v5693, 3
        %v5698 = vand.u32 %v5697, 3
        %vm5699 = vcmp.lt.s32.totalorder %v5698, 2
        %vm5700 = vcmp.eq.s32.totalorder %v5698, 0
        %v5701 = vxor.u32 %v5695, 2147483648
        %v5702 = vsel %vm5700, %v5694, %v5701
        %vm5703 = vcmp.eq.s32.totalorder %v5698, 2
        %v5704 = vxor.u32 %v5694, 2147483648
        %v5705 = vsel %vm5703, %v5704, %v5695
        %v5706 = vsel %vm5699, %v5702, %v5705
        %v5707 = vsel %vm5696, nan, %v5706
        %v5708 = vand.u32 2147483647, %v4353
        %vm5709 = vcmp.le.f32.partialorder %v5708, 0.7853982
        %vm5710 = vcmp.lt.s32.totalorder %v4353, 0
        %v5711 = vand.u32 %v4353, 2139095040
        %v5712 = vshrl.u32 %v5711, 23
        %v5713 = vsub.s32 %v5712, 127
        %v5714 = vand.u32 2147483647, %v4353
        %v5715 = vand.u32 %v5714, 8388607
        %v5716 = vor.u32 %v5715, 8388608
        %v5717 = vsub.s32 0, %v5716
        %v5718 = vadd.s32 %v5713, 1
        %vm5719 = vcmp.gt.s32.totalorder %v5718, 0
        %v5720 = vsel %vm5719, %v5718, 0
        %v5721 = vshrl.u32 %v5720, 5
        %v5722 = vand.u32 %v5720, 31
        %v5723 = vsub.s32 32, %v5722
        %v5724 = vshrl.u32 683565275, %v5723
        %v5725 = vshll.u32 683565275, %v5722
        %v5726 = vshrl.u32 2475754826, %v5723
        %v5727 = vor.u32 %v5725, %v5726
        %v5728 = vshll.u32 2475754826, %v5722
        %v5729 = vshrl.u32 2131351028, %v5723
        %v5730 = vor.u32 %v5728, %v5729
        %v5731 = vshll.u32 2131351028, %v5722
        %v5732 = vshrl.u32 2102212464, %v5723
        %v5733 = vor.u32 %v5731, %v5732
        %v5734 = vshll.u32 2102212464, %v5722
        %v5735 = vshrl.u32 920167782, %v5723
        %v5736 = vor.u32 %v5734, %v5735
        %v5737 = vshll.u32 920167782, %v5722
        %v5738 = vshrl.u32 1326507024, %v5723
        %v5739 = vor.u32 %v5737, %v5738
        %vm5740 = vcmp.lt.s32.totalorder %v5721, 1
        %vm5741 = vcmp.lt.s32.totalorder %v5721, 2
        %vm5742 = vcmp.lt.s32.totalorder %v5721, 3
        %vm5743 = vcmp.lt.s32.totalorder %v5721, 4
        %v5744 = vsel %vm5740, %v5724, %v5727
        %v5745 = vsel %vm5743, %v5733, 2102212464
        %v5746 = vsel %vm5742, %v5730, %v5745
        %v5747 = vsel %vm5741, %v5744, %v5746
        %v5748 = vsel %vm5740, %v5727, %v5730
        %v5749 = vsel %vm5743, %v5736, 920167782
        %v5750 = vsel %vm5742, %v5733, %v5749
        %v5751 = vsel %vm5741, %v5748, %v5750
        %v5752 = vsel %vm5740, %v5730, %v5733
        %v5753 = vsel %vm5743, %v5739, 1326507024
        %v5754 = vsel %vm5742, %v5736, %v5753
        %v5755 = vsel %vm5741, %v5752, %v5754
        %v5756 = vshll.u32 %v5716, 8
        %v5757 = vmul.u32.u64.compose %v5756, %v5755
        %v5758 = vextract.low.u32 %v5757
        %v5759 = vextract.high.u32 %v5757
        %v5760 = vmul.u32.u64.compose %v5756, %v5751
        %v5761 = vextract.low.u32 %v5760
        %v5762 = vextract.high.u32 %v5760
        %v5763 = vmul.u32 %v5756, %v5747
        %v5764 = vadd.s32 %v5759, %v5761
        %vm5765 = vc.u32 %v5759, %v5761
        %v5766 = vadd.s32 %v5762, 1
        %v5767 = vsel %vm5765, %v5766, %v5762
        %v5768 = vadd.s32 %v5763, %v5767
        %v5769 = vadd.s32 %v5768, 536870912
        %v5770 = vshrl.u32 %v5769, 30
        %v5771 = vshll.u32 %v5770, 30
        %v5772 = vsub.s32 %v5768, %v5771
        %vm5773 = vcmp.lt.s32.totalorder %v5772, 0
        %v5774 = vsub.s32 0, %v5772
        %v5775 = vsel %vm5773, %v5774, %v5772
        %v5776 = vclz %v5775
        %v5777 = vsub.s32 %v5776, 2
        %vm5778 = vcmp.gt.s32.totalorder 0, %v5777
        %v5779 = vsel %vm5778, 0, %v5777
        %v5780 = vsub.s32 32, %v5779
        %v5781 = vshll.u32 %v5772, %v5779
        %v5782 = vshrl.u32 %v5764, %v5780
        %v5783 = vor.u32 %v5781, %v5782
        %v5784 = vsub.s32 4294967266, %v5779
        %v5785 = vadd.s32 %v5784, 127
        %v5786 = vshll.u32 %v5785, 23
        %v5787 = vor.u32 4788187, %v5786
        %v5788 = vand.u32 2147483647, %v5787
        %v5790 = vcvt.s32.f32 %v5783
        %v5791 = vmul.f32 %v5790, %v5788
        %v5792 = vxor.u32 %v5791, 2147483648
        %v5793 = vsel %vm5710, %v5792, %v5791
        %v5794 = vsub.s32 4, %v5770
        %v5795 = vsel %vm5710, %v5794, %v5770
        %v5796 = vsel %vm5709, %v4353, %v5793
        %v5797 = vsel %vm5709, 0, %v5795
        %v5798 = vcosq.f32.pop %v5796
        %v5799 = vsinq.f32.pop %v5796
        %vm5800 = vweird.f32 %v4353
        %v5801 = vadd.s32 %v5797, 3
        %v5802 = vand.u32 %v5801, 3
        %vm5803 = vcmp.lt.s32.totalorder %v5802, 2
        %vm5804 = vcmp.eq.s32.totalorder %v5802, 0
        %v5805 = vxor.u32 %v5799, 2147483648
        %v5806 = vsel %vm5804, %v5798, %v5805
        %vm5807 = vcmp.eq.s32.totalorder %v5802, 2
        %v5808 = vxor.u32 %v5798, 2147483648
        %v5809 = vsel %vm5807, %v5808, %v5799
        %v5810 = vsel %vm5803, %v5806, %v5809
        %v5811 = vsel %vm5800, nan, %v5810
        %v5812 = vand.u32 2147483647, %v4354
        %vm5813 = vcmp.le.f32.partialorder %v5812, 0.7853982
        %vm5814 = vcmp.lt.s32.totalorder %v4354, 0
        %v5815 = vand.u32 %v4354, 2139095040
        %v5816 = vshrl.u32 %v5815, 23
        %v5817 = vsub.s32 %v5816, 127
        %v5818 = vand.u32 2147483647, %v4354
        %v5819 = vand.u32 %v5818, 8388607
        %v5820 = vor.u32 %v5819, 8388608
        %v5821 = vsub.s32 0, %v5820
        %v5822 = vadd.s32 %v5817, 1
        %vm5823 = vcmp.gt.s32.totalorder %v5822, 0
        %v5824 = vsel %vm5823, %v5822, 0
        %v5825 = vshrl.u32 %v5824, 5
        %v5826 = vand.u32 %v5824, 31
        %v5827 = vsub.s32 32, %v5826
        %v5828 = vshrl.u32 683565275, %v5827
        %v5829 = vshll.u32 683565275, %v5826
        %v5830 = vshrl.u32 2475754826, %v5827
        %v5831 = vor.u32 %v5829, %v5830
        %v5832 = vshll.u32 2475754826, %v5826
        %v5833 = vshrl.u32 2131351028, %v5827
        %v5834 = vor.u32 %v5832, %v5833
        %v5835 = vshll.u32 2131351028, %v5826
        %v5836 = vshrl.u32 2102212464, %v5827
        %v5837 = vor.u32 %v5835, %v5836
        %v5838 = vshll.u32 2102212464, %v5826
        %v5839 = vshrl.u32 920167782, %v5827
        %v5840 = vor.u32 %v5838, %v5839
        %v5841 = vshll.u32 920167782, %v5826
        %v5842 = vshrl.u32 1326507024, %v5827
        %v5843 = vor.u32 %v5841, %v5842
        %vm5844 = vcmp.lt.s32.totalorder %v5825, 1
        %vm5845 = vcmp.lt.s32.totalorder %v5825, 2
        %vm5846 = vcmp.lt.s32.totalorder %v5825, 3
        %vm5847 = vcmp.lt.s32.totalorder %v5825, 4
        %v5848 = vsel %vm5844, %v5828, %v5831
        %v5849 = vsel %vm5847, %v5837, 2102212464
        %v5850 = vsel %vm5846, %v5834, %v5849
        %v5851 = vsel %vm5845, %v5848, %v5850
        %v5852 = vsel %vm5844, %v5831, %v5834
        %v5853 = vsel %vm5847, %v5840, 920167782
        %v5854 = vsel %vm5846, %v5837, %v5853
        %v5855 = vsel %vm5845, %v5852, %v5854
        %v5856 = vsel %vm5844, %v5834, %v5837
        %v5857 = vsel %vm5847, %v5843, 1326507024
        %v5858 = vsel %vm5846, %v5840, %v5857
        %v5859 = vsel %vm5845, %v5856, %v5858
        %v5860 = vshll.u32 %v5820, 8
        %v5861 = vmul.u32.u64.compose %v5860, %v5859
        %v5862 = vextract.low.u32 %v5861
        %v5863 = vextract.high.u32 %v5861
        %v5864 = vmul.u32.u64.compose %v5860, %v5855
        %v5865 = vextract.low.u32 %v5864
        %v5866 = vextract.high.u32 %v5864
        %v5867 = vmul.u32 %v5860, %v5851
        %v5868 = vadd.s32 %v5863, %v5865
        %vm5869 = vc.u32 %v5863, %v5865
        %v5870 = vadd.s32 %v5866, 1
        %v5871 = vsel %vm5869, %v5870, %v5866
        %v5872 = vadd.s32 %v5867, %v5871
        %v5873 = vadd.s32 %v5872, 536870912
        %v5874 = vshrl.u32 %v5873, 30
        %v5875 = vshll.u32 %v5874, 30
        %v5876 = vsub.s32 %v5872, %v5875
        %vm5877 = vcmp.lt.s32.totalorder %v5876, 0
        %v5878 = vsub.s32 0, %v5876
        %v5879 = vsel %vm5877, %v5878, %v5876
        %v5880 = vclz %v5879
        %v5881 = vsub.s32 %v5880, 2
        %vm5882 = vcmp.gt.s32.totalorder 0, %v5881
        %v5883 = vsel %vm5882, 0, %v5881
        %v5884 = vsub.s32 32, %v5883
        %v5885 = vshll.u32 %v5876, %v5883
        %v5886 = vshrl.u32 %v5868, %v5884
        %v5887 = vor.u32 %v5885, %v5886
        %v5888 = vsub.s32 4294967266, %v5883
        %v5889 = vadd.s32 %v5888, 127
        %v5890 = vshll.u32 %v5889, 23
        %v5891 = vor.u32 4788187, %v5890
        %v5892 = vand.u32 2147483647, %v5891
        %v5894 = vcvt.s32.f32 %v5887
        %v5895 = vmul.f32 %v5894, %v5892
        %v5896 = vxor.u32 %v5895, 2147483648
        %v5897 = vsel %vm5814, %v5896, %v5895
        %v5898 = vsub.s32 4, %v5874
        %v5899 = vsel %vm5814, %v5898, %v5874
        %v5900 = vsel %vm5813, %v4354, %v5897
        %v5901 = vsel %vm5813, 0, %v5899
        %v5902 = vcosq.f32.pop %v5900
        %v5903 = vsinq.f32.pop %v5900
        %vm5904 = vweird.f32 %v4354
        %v5905 = vadd.s32 %v5901, 3
        %v5906 = vand.u32 %v5905, 3
        %vm5907 = vcmp.lt.s32.totalorder %v5906, 2
        %vm5908 = vcmp.eq.s32.totalorder %v5906, 0
        %v5909 = vxor.u32 %v5903, 2147483648
        %v5910 = vsel %vm5908, %v5902, %v5909
        %vm5911 = vcmp.eq.s32.totalorder %v5906, 2
        %v5912 = vxor.u32 %v5902, 2147483648
        %v5913 = vsel %vm5911, %v5912, %v5903
        %v5914 = vsel %vm5907, %v5910, %v5913
        %v5915 = vsel %vm5904, nan, %v5914
        %v5916 = vand.u32 2147483647, %v4355
        %vm5917 = vcmp.le.f32.partialorder %v5916, 0.7853982
        %vm5918 = vcmp.lt.s32.totalorder %v4355, 0
        %v5919 = vand.u32 %v4355, 2139095040
        %v5920 = vshrl.u32 %v5919, 23
        %v5921 = vsub.s32 %v5920, 127
        %v5922 = vand.u32 2147483647, %v4355
        %v5923 = vand.u32 %v5922, 8388607
        %v5924 = vor.u32 %v5923, 8388608
        %v5925 = vsub.s32 0, %v5924
        %v5926 = vadd.s32 %v5921, 1
        %vm5927 = vcmp.gt.s32.totalorder %v5926, 0
        %v5928 = vsel %vm5927, %v5926, 0
        %v5929 = vshrl.u32 %v5928, 5
        %v5930 = vand.u32 %v5928, 31
        %v5931 = vsub.s32 32, %v5930
        %v5932 = vshrl.u32 683565275, %v5931
        %v5933 = vshll.u32 683565275, %v5930
        %v5934 = vshrl.u32 2475754826, %v5931
        %v5935 = vor.u32 %v5933, %v5934
        %v5936 = vshll.u32 2475754826, %v5930
        %v5937 = vshrl.u32 2131351028, %v5931
        %v5938 = vor.u32 %v5936, %v5937
        %v5939 = vshll.u32 2131351028, %v5930
        %v5940 = vshrl.u32 2102212464, %v5931
        %v5941 = vor.u32 %v5939, %v5940
        %v5942 = vshll.u32 2102212464, %v5930
        %v5943 = vshrl.u32 920167782, %v5931
        %v5944 = vor.u32 %v5942, %v5943
        %v5945 = vshll.u32 920167782, %v5930
        %v5946 = vshrl.u32 1326507024, %v5931
        %v5947 = vor.u32 %v5945, %v5946
        %vm5948 = vcmp.lt.s32.totalorder %v5929, 1
        %vm5949 = vcmp.lt.s32.totalorder %v5929, 2
        %vm5950 = vcmp.lt.s32.totalorder %v5929, 3
        %vm5951 = vcmp.lt.s32.totalorder %v5929, 4
        %v5952 = vsel %vm5948, %v5932, %v5935
        %v5953 = vsel %vm5951, %v5941, 2102212464
        %v5954 = vsel %vm5950, %v5938, %v5953
        %v5955 = vsel %vm5949, %v5952, %v5954
        %v5956 = vsel %vm5948, %v5935, %v5938
        %v5957 = vsel %vm5951, %v5944, 920167782
        %v5958 = vsel %vm5950, %v5941, %v5957
        %v5959 = vsel %vm5949, %v5956, %v5958
        %v5960 = vsel %vm5948, %v5938, %v5941
        %v5961 = vsel %vm5951, %v5947, 1326507024
        %v5962 = vsel %vm5950, %v5944, %v5961
        %v5963 = vsel %vm5949, %v5960, %v5962
        %v5964 = vshll.u32 %v5924, 8
        %v5965 = vmul.u32.u64.compose %v5964, %v5963
        %v5966 = vextract.low.u32 %v5965
        %v5967 = vextract.high.u32 %v5965
        %v5968 = vmul.u32.u64.compose %v5964, %v5959
        %v5969 = vextract.low.u32 %v5968
        %v5970 = vextract.high.u32 %v5968
        %v5971 = vmul.u32 %v5964, %v5955
        %v5972 = vadd.s32 %v5967, %v5969
        %vm5973 = vc.u32 %v5967, %v5969
        %v5974 = vadd.s32 %v5970, 1
        %v5975 = vsel %vm5973, %v5974, %v5970
        %v5976 = vadd.s32 %v5971, %v5975
        %v5977 = vadd.s32 %v5976, 536870912
        %v5978 = vshrl.u32 %v5977, 30
        %v5979 = vshll.u32 %v5978, 30
        %v5980 = vsub.s32 %v5976, %v5979
        %vm5981 = vcmp.lt.s32.totalorder %v5980, 0
        %v5982 = vsub.s32 0, %v5980
        %v5983 = vsel %vm5981, %v5982, %v5980
        %v5984 = vclz %v5983
        %v5985 = vsub.s32 %v5984, 2
        %vm5986 = vcmp.gt.s32.totalorder 0, %v5985
        %v5987 = vsel %vm5986, 0, %v5985
        %v5988 = vsub.s32 32, %v5987
        %v5989 = vshll.u32 %v5980, %v5987
        %v5990 = vshrl.u32 %v5972, %v5988
        %v5991 = vor.u32 %v5989, %v5990
        %v5992 = vsub.s32 4294967266, %v5987
        %v5993 = vadd.s32 %v5992, 127
        %v5994 = vshll.u32 %v5993, 23
        %v5995 = vor.u32 4788187, %v5994
        %v5996 = vand.u32 2147483647, %v5995
        %v5998 = vcvt.s32.f32 %v5991
        %v5999 = vmul.f32 %v5998, %v5996
        %v6000 = vxor.u32 %v5999, 2147483648
        %v6001 = vsel %vm5918, %v6000, %v5999
        %v6002 = vsub.s32 4, %v5978
        %v6003 = vsel %vm5918, %v6002, %v5978
        %v6004 = vsel %vm5917, %v4355, %v6001
        %v6005 = vsel %vm5917, 0, %v6003
        %v6006 = vcosq.f32.pop %v6004
        %v6007 = vsinq.f32.pop %v6004
        %vm6008 = vweird.f32 %v4355
        %v6009 = vadd.s32 %v6005, 3
        %v6010 = vand.u32 %v6009, 3
        %vm6011 = vcmp.lt.s32.totalorder %v6010, 2
        %vm6012 = vcmp.eq.s32.totalorder %v6010, 0
        %v6013 = vxor.u32 %v6007, 2147483648
        %v6014 = vsel %vm6012, %v6006, %v6013
        %vm6015 = vcmp.eq.s32.totalorder %v6010, 2
        %v6016 = vxor.u32 %v6006, 2147483648
        %v6017 = vsel %vm6015, %v6016, %v6007
        %v6018 = vsel %vm6011, %v6014, %v6017
        %v6019 = vsel %vm6008, nan, %v6018
        %v6020 = vld [vmem:[%s4] sm:$0xff]
        %v6021 = vld [vmem:[%s4 + $0x8] sm:$0xff]
        %v6022 = vld [vmem:[%s4 + $0x10] sm:$0xff]
        %v6023 = vld [vmem:[%s4 + $0x18] sm:$0xff]
        %6025 = vset.pattern.permute.xlu0 0
        %6026 = vperm.xlu0 %6025, %v6020
        %v6027 = vpop.permute.xlu0 %6026
        %6030 = vset.pattern.permute.xlu0 0
        %6031 = vperm.xlu0 %6030, %v6021
        %v6032 = vpop.permute.xlu0 %6031
        %6035 = vset.pattern.permute.xlu0 0
        %6036 = vperm.xlu0 %6035, %v6022
        %v6037 = vpop.permute.xlu0 %6036
        %6040 = vset.pattern.permute.xlu0 0
        %6041 = vperm.xlu0 %6040, %v6023
        %v6042 = vpop.permute.xlu0 %6041
        %v6044 = vmul.f32 %v4459, %v6027
        %v6045 = vmul.f32 %v4563, %v6027
        %v6046 = vmul.f32 %v4667, %v6027
        %v6047 = vmul.f32 %v4771, %v6027
        %v6048 = vmul.f32 %v4875, %v6032
        %v6049 = vmul.f32 %v4979, %v6032
        %v6050 = vmul.f32 %v5083, %v6032
        %v6051 = vmul.f32 %v5187, %v6032
        %v6052 = vmul.f32 %v5291, %v6037
        %v6053 = vmul.f32 %v5395, %v6037
        %v6054 = vmul.f32 %v5499, %v6037
        %v6055 = vmul.f32 %v5603, %v6037
        %v6056 = vmul.f32 %v5707, %v6042
        %v6057 = vmul.f32 %v5811, %v6042
        %v6058 = vmul.f32 %v5915, %v6042
        %v6059 = vmul.f32 %v6019, %v6042
        %v6060 = vadd.f32 %v6044, %v6048
        %v6061 = vadd.f32 %v6060, %v6052
        %v6062 = vadd.f32 %v6061, %v6056
        %v6063 = vrot.slane %v6062, 4
        %v6064 = vadd.f32 %v6062, %v6063
        %v6065 = vrot.slane %v6064, 2
        %v6066 = vadd.f32 %v6064, %v6065
        %v6067 = vrot.slane %v6066, 1
        %v6068 = vadd.f32 %v6066, %v6067
        %v6069 = vadd.f32 %v6045, %v6049
        %v6070 = vadd.f32 %v6069, %v6053
        %v6071 = vadd.f32 %v6070, %v6057
        %v6072 = vrot.slane %v6071, 4
        %v6073 = vadd.f32 %v6071, %v6072
        %v6074 = vrot.slane %v6073, 2
        %v6075 = vadd.f32 %v6073, %v6074
        %v6076 = vrot.slane %v6075, 1
        %v6077 = vadd.f32 %v6075, %v6076
        %v6078 = vadd.f32 %v6046, %v6050
        %v6079 = vadd.f32 %v6078, %v6054
        %v6080 = vadd.f32 %v6079, %v6058
        %v6081 = vrot.slane %v6080, 4
        %v6082 = vadd.f32 %v6080, %v6081
        %v6083 = vrot.slane %v6082, 2
        %v6084 = vadd.f32 %v6082, %v6083
        %v6085 = vrot.slane %v6084, 1
        %v6086 = vadd.f32 %v6084, %v6085
        %v6087 = vadd.f32 %v6047, %v6051
        %v6088 = vadd.f32 %v6087, %v6055
        %v6089 = vadd.f32 %v6088, %v6059
        %v6090 = vrot.slane %v6089, 4
        %v6091 = vadd.f32 %v6089, %v6090
        %v6092 = vrot.slane %v6091, 2
        %v6093 = vadd.f32 %v6091, %v6092
        %v6094 = vrot.slane %v6093, 1
        %v6095 = vadd.f32 %v6093, %v6094
        %v6096 = vld [vmem:[#allocation2] sm:$0x1]
        %6098 = vset.pattern.permute.xlu0 0
        %6099 = vperm.xlu0 %6098, %v6096
        %v6100 = vpop.permute.xlu0 %6099
        %v6102 = vlaneseq
        %v6103 = vshrl.u32 %v6102, 7
        %v6104 = vsub.s32 0, %v6103
        %v6105 = vrot.slane %v6100, %v6104
        %v6106 = vadd.f32 %v6068, %v6105
        %v6107 = vadd.f32 %v6077, %v6105
        %v6108 = vadd.f32 %v6086, %v6105
        %v6109 = vadd.f32 %v6095, %v6105
        %v6114 = vcombine.low %v6106, %v6107
        %v6115 = vcombine.low %v6108, %v6109
        %v6117 = vunpack.c.l.s4 1966171168
        %v6118 = vunpack.c.0.s8 %v6117
        %v6119 = vlaneseq
        %v6120 = vshrl.u32 %v6119, 7
        %v6121 = vsub.s32 %v6118, %v6120
        %v6122 = vrot.slane %v6114, %v6121
        %v6124 = vunpack.c.l.s4 1966171168
        %v6125 = vunpack.c.0.s8 %v6124
        %v6126 = vlaneseq
        %v6127 = vshrl.u32 %v6126, 7
        %v6128 = vsub.s32 %v6125, %v6127
        %v6129 = vrot.slane %v6115, %v6128
        %v6130 = vcombine.low %v6122, %v6129
        %v6132 = vunpack.c.l.s4 1966171168
        %v6133 = vunpack.c.0.s8 %v6132
        %v6134 = vlaneseq
        %v6135 = vshrl.u32 %v6134, 7
        %v6136 = vsub.s32 %v6133, %v6135
        %v6137 = vrot.slane %v6130, %v6136
        %v6139 = vlaneseq
        %vm6140 = vcmp.ge.s32.totalorder %v6139, 0
        %vm6141 = vcmp.lt.s32.totalorder %v6139, 512
        %vm6142 = vmand %vm6140, %vm6141
        %6143 = vst.msk [vmem:[%s262] sm:$0xf] %vm6142, %v6137
        %s6144 = sand.u32 %s162, 1
        %s6145 = scalar_lea.sflag [#allocation5], %s6144
        %s6146 = sand.u32 %s162, 1
        %s6147 = smul.addr %s6146, 4
        %s6148 = scalar_lea.vmem [#allocation6], %s6147
        // Predicated region
        $region49: #{tpu_custom_call.1} parent=43 // pred_check
          %p6149 = pneg %p172
        $region50: #{tpu_custom_call.1} parent=43 // pred_check_branch
          %6151 = sbr.rel (%p6149) target = $region52
        $region51: #{tpu_custom_call.1} parent=43 // pred_region
          %s6152 = smul.u32 4, %s23
          %s6154 = ssub.s32 64, 64
          %6155 = vsyncadd %s6145, %s6154
          %s6156 = smul.addr %s6152, 16
          %s6157 = scalar_lea.hbm %s6, %s6156
          %s6159 = sshll.u32 %s6148, 4
          %s6160 = int_to_ptr.vmem [resolvable:$true] %s6159
          %6162 = dma.vmem_to_hbm [thread:$0]  %s6160, 64, %s6157, %s6145
        $region52: #{tpu_custom_call.1} parent=43 // pred_fallthru
          _
      $region44: #{tpu_custom_call.1} parent=5 // pred_fallthru
        _
      %p6163 = scmp.le.s32.totalorder 2, %s18
      // Predicated region
      $region53: #{tpu_custom_call.1} parent=5 // pred_check
        %p6164 = pneg %p6163
      $region54: #{tpu_custom_call.1} parent=5 // pred_check_branch
        %6166 = sbr.rel (%p6164) target = $region56
      $region55: #{tpu_custom_call.1} parent=5 // pred_region
        %s6167 = ssub.s32 %s18, 2
        // Predicated region
        $region57: #{tpu_custom_call.1} parent=55 // pred_check
          %p6168 = pneg %p178
        $region58: #{tpu_custom_call.1} parent=55 // pred_check_branch
          %6170 = sbr.rel (%p6168) target = $region60
        $region59: #{tpu_custom_call.1} parent=55 // pred_region
          %s6171 = sand.u32 %s163, 1
          %s6172 = scalar_lea.sflag [#allocation5], %s6171
          %s6173 = sand.u32 %s163, 1
          %s6174 = smul.addr %s6173, 4
          %s6175 = scalar_lea.vmem [#allocation6], %s6174
          %6176 = dma.done %s6172, 64
        $region60: #{tpu_custom_call.1} parent=55 // pred_fallthru
          _
      $region56: #{tpu_custom_call.1} parent=5 // pred_fallthru
        _
    $region6: #{tpu_custom_call.1} parent=1 // loop_footer
      %s22 = sadd.s32 1, %s18
    $region7: #{tpu_custom_call.1} parent=1 // loop_footer_branch
      %17 = sbr.rel target = $region3
    $region8: #{tpu_custom_call.1} parent=1 // loop_exit
      _
    %6177 = vsyncpa [#allocation4], 1
    %s6178 = scalar_lea.sflag [#allocation4], 1
    %6179 = vsyncpa %s6178, 1
    %6180 = vsyncpa [#allocation5], 1
    %s6181 = scalar_lea.sflag [#allocation5], 1
    %6182 = vsyncpa %s6181, 1

</llo_original>
